<compile_context>
chip_gen: v6e
topology: v6e:2x2x1
jax: 0.10.0
libtpu: 0.0.40
codegen_flags: <defaults>
</compile_context>

<pallas_src>
import functools

import jax
import jax.numpy as jnp
import numpy as np
from jax.experimental import pallas as pl
from jax.experimental.pallas import tpu as pltpu

C1, C2 = 10, 20          # conv1 / conv2 output channels
C1P, C2P = 16, 32        # padded channel widths used inside the kernel
NOUT = 10                # fc outputs
NPAD = 128               # lane-dense logits width


# ---------------------------------------------------------------------------
# The single fused kernel
# ---------------------------------------------------------------------------
def _fused_net_kernel(x_ref, w1_ref, b1_ref, w2_ref, b2_ref, wf_ref, bf_ref,
                      out_ref, p1_ref, p2_ref, *, tb):
    """Rows of every activation are (b, I, J) over a 7x7 grid per image.

    x_ref : (tb*49 + 8, 16)   space-to-depth(4) input, lane = du*4+dv
    p1_ref: (tb*49 + 16, 64)  pooled conv1, lane = (a'*2+c')*16 + channel
    p2_ref: (tb*49 + 24, 32)  pooled conv2, lane = channel
    out   : (tb, 128)         logits (first 10 lanes valid)
    """
    R = tb * 49
    f32 = jnp.float32
    bf16 = jnp.bfloat16

    # ---- conv1: a 2x2 window over the 7x7 space-to-depth(4) grid ----------
    a1 = None
    for u in range(2):
        for v in range(2):
            lhs = x_ref[pl.ds(u * 7 + v, R), :].astype(bf16)          # (R, 16)
            t = jnp.dot(lhs, w1_ref[u * 2 + v], preferred_element_type=f32)
            a1 = t if a1 is None else a1 + t                          # (R, 256)
    a1 = a1 + b1_ref[...]                                             # bias

    # ---- maxpool(2) + relu, regrouped as space-to-depth(2) for conv2 ------
    # a1 lane layout: (ri*4+rj)*C1P + c  == conv1 output at sub-pixel (ri,rj)
    for s in range(4):                       # s = a'*2 + c' (pooled sub-pixel)
        ap, cp = s >> 1, s & 1
        blk = None
        for al in range(2):
            for be in range(2):
                lo = ((2 * ap + al) * 4 + (2 * cp + be)) * C1P
                piece = a1[:, lo:lo + C1P]
                blk = piece if blk is None else jnp.maximum(blk, piece)
        p1_ref[0:R, s * C1P:(s + 1) * C1P] = jnp.maximum(blk, 0.0)
    p1_ref[R:R + 16, :] = jnp.zeros((16, 4 * C1P), f32)               # pad rows

    # ---- conv2: a 3x3 window over the 7x7 grid -----------------------------
    a2 = None
    for u in range(3):
        for v in range(3):
            lhs = p1_ref[pl.ds(u * 7 + v, R), :].astype(bf16)         # (R, 64)
            t = jnp.dot(lhs, w2_ref[u * 3 + v], preferred_element_type=f32)
            a2 = t if a2 is None else a2 + t                          # (R, 128)
    a2 = a2 + b2_ref[...]

    # ---- maxpool(2) + relu --------------------------------------------------
    # a2 lane layout: (r2i*2+r2j)*C2P + c2
    blk = None
    for al in range(2):
        for be in range(2):
            lo = (al * 2 + be) * C2P
            piece = a2[:, lo:lo + C2P]
            blk = piece if blk is None else jnp.maximum(blk, piece)
    p2_ref[0:R, :] = jnp.maximum(blk, 0.0)
    p2_ref[R:R + 24, :] = jnp.zeros((24, C2P), f32)                   # pad rows

    # ---- fc: a 4x4 "window"; only row (b, 0, 0) of each image is valid -----
    fc = None
    for u in range(4):
        for v in range(4):
            lhs = p2_ref[pl.ds(u * 7 + v, R), :].astype(bf16)         # (R, 32)
            t = jnp.dot(lhs, wf_ref[u * 4 + v], preferred_element_type=f32)
            fc = t if fc is None else fc + t                          # (R, 128)

    # Gather rows {b*49} -> (tb, 128) with a tiny selection matmul.
    r_iota = jax.lax.broadcasted_iota(jnp.int32, (tb, R), 1)
    b_iota = jax.lax.broadcasted_iota(jnp.int32, (tb, R), 0)
    sel = (r_iota == b_iota * 49).astype(f32)
    out_ref[...] = jnp.dot(sel, fc, preferred_element_type=f32) + bf_ref[...]


# ---------------------------------------------------------------------------
# One-time weight re-layout (host side, not part of the per-step forward)
# ---------------------------------------------------------------------------
def prepare_params(params):
    w1, b1, w2, b2, wf, bf = (np.asarray(p, np.float32) for p in params)

    # conv1: W1[(u,v), du*4+dv, (ri*4+rj)*C1P + co]
    W1 = np.zeros((2, 2, 4, 4, 4, 4, C1P), np.float32)
    for u in range(2):
        for v in range(2):
            for du in range(4):
                for dv in range(4):
                    for ri in range(4):
                        for rj in range(4):
                            p, q = 4 * u + du - ri, 4 * v + dv - rj
                            if 0 <= p <= 4 and 0 <= q <= 4:
                                W1[u, v, du, dv, ri, rj, :C1] = w1[:, 0, p, q]
    W1 = W1.reshape(4, 16, 16 * C1P)
    b1big = np.tile(np.pad(b1, (0, C1P - C1)), 16).reshape(1, 16 * C1P)

    # conv2: W2[(u,v), (a'*2+c')*C1P + cin, (r2i*2+r2j)*C2P + cout]
    W2 = np.zeros((3, 3, 2, 2, C1P, 2, 2, C2P), np.float32)
    for u in range(3):
        for v in range(3):
            for ap in range(2):
                for cp in range(2):
                    for ri in range(2):
                        for rj in range(2):
                            p, q = 2 * u + ap - ri, 2 * v + cp - rj
                            if 0 <= p <= 4 and 0 <= q <= 4:
                                W2[u, v, ap, cp, :C1, ri, rj, :C2] = w2[:, :, p, q].T
    W2 = W2.reshape(9, 4 * C1P, 4 * C2P)
    b2big = np.tile(np.pad(b2, (0, C2P - C2)), 4).reshape(1, 4 * C2P)

    # fc: Wf[(i3*4+j3), cin, n]   (torch flatten order: c2*16 + i3*4 + j3)
    Wf = np.zeros((4, 4, C2P, NPAD), np.float32)
    for i3 in range(4):
        for j3 in range(4):
            for c in range(C2):
                Wf[i3, j3, c, :NOUT] = wf[:, c * 16 + i3 * 4 + j3]
    Wf = Wf.reshape(16, C2P, NPAD)
    bfbig = np.pad(bf, (0, NPAD - NOUT)).reshape(1, NPAD)

    tobf = lambda a: jnp.asarray(a, jnp.bfloat16)
    tof = lambda a: jnp.asarray(a, jnp.float32)
    return (tobf(W1), tof(b1big), tobf(W2), tof(b2big), tobf(Wf), tof(bfbig))


# ---------------------------------------------------------------------------
# Forward pass: one pallas_call, grid = batch tiles ("parallel")
# ---------------------------------------------------------------------------
def net_forward(x, prepped, tb):
    B = x.shape[0]
    assert B % tb == 0, "batch must be divisible by the batch tile"
    R = tb * 49
    W1, b1big, W2, b2big, Wf, bfbig = prepped

    # space-to-depth(4) of the 28x28 input: (B,1,28,28) -> (B/tb, tb*49+8, 16)
    xs = x.reshape(B, 7, 4, 7, 4).transpose(0, 1, 3, 2, 4)
    xs = xs.reshape(B // tb, R, 16)
    xs = jnp.pad(xs, ((0, 0), (0, 8), (0, 0)))          # zero pad rows (wrap reads)

    out = pl.pallas_call(
        functools.partial(_fused_net_kernel, tb=tb),
        out_shape=jax.ShapeDtypeStruct((B, NPAD), jnp.float32),
        grid_spec=pltpu.PrefetchScalarGridSpec(
            num_scalar_prefetch=0,
            grid=(B // tb,),
            in_specs=[
                pl.BlockSpec((None, R + 8, 16), lambda i: (i, 0, 0)),
                pl.BlockSpec((4, 16, 16 * C1P), lambda i: (0, 0, 0)),
                pl.BlockSpec((1, 16 * C1P), lambda i: (0, 0)),
                pl.BlockSpec((9, 4 * C1P, 4 * C2P), lambda i: (0, 0, 0)),
                pl.BlockSpec((1, 4 * C2P), lambda i: (0, 0)),
                pl.BlockSpec((16, C2P, NPAD), lambda i: (0, 0, 0)),
                pl.BlockSpec((1, NPAD), lambda i: (0, 0)),
            ],
            out_specs=pl.BlockSpec((tb, NPAD), lambda i: (i, 0)),
            scratch_shapes=[
                pltpu.VMEM((R + 16, 4 * C1P), jnp.float32),   # pooled conv1
                pltpu.VMEM((R + 24, C2P), jnp.float32),       # pooled conv2
            ],
        ),
        compiler_params=pltpu.CompilerParams(
            dimension_semantics=("parallel",)),
    )(xs, W1, b1big, W2, b2big, Wf, bfbig)
    return out[:, :NOUT]                                 # lane-dense slab -> 10 logits


# ---------------------------------------------------------------------------
# Plain-JAX reference (PyTorch semantics) and init
# ---------------------------------------------------------------------------
def reference_forward(x, params):
    w1, b1, w2, b2, wf, bf = params

    def conv(x, w, b):
        y = jax.lax.conv_general_dilated(
            x, w, (1, 1), "VALID", dimension_numbers=("NCHW", "OIHW", "NCHW"))
        return y + b.reshape(1, -1, 1, 1)

    def pool_relu(x):
        B, C, H, W = x.shape
        x = x.reshape(B, C, H // 2, 2, W // 2, 2).max(axis=(3, 5))
        return jnp.maximum(x, 0.0)

    x = pool_relu(conv(x, w1, b1))
    x = pool_relu(conv(x, w2, b2))
    x = x.reshape(x.shape[0], -1)
    return x @ wf.T + bf


def init_params():
    key = jax.random.PRNGKey(0)
    k1, k2, k3, k4, k5, k6 = jax.random.split(key, 6)
    w1 = jax.random.normal(k1, (10, 1, 5, 5), jnp.float32) * 0.2    # Conv2d(1, 10, 5)
    b1 = jax.random.normal(k2, (10,), jnp.float32) * 0.1
    w2 = jax.random.normal(k3, (20, 10, 5, 5), jnp.float32) * 0.06  # Conv2d(10, 20, 5)
    b2 = jax.random.normal(k4, (20,), jnp.float32) * 0.1
    wf = jax.random.normal(k5, (10, 320), jnp.float32) * 0.05       # Linear(320, 10)
    bf = jax.random.normal(k6, (10,), jnp.float32) * 0.1
    return (w1, b1, w2, b2, wf, bf)


if __name__ == "__main__":
    params = init_params()
    prepped = prepare_params(params)          # one-time weight re-layout
    TB = 2                                    # batch tile (rows per grid step)

    x = jax.random.normal(jax.random.PRNGKey(0), (2, 1, 28, 28), jnp.float32)
    fwd = jax.jit(lambda xx: net_forward(xx, prepped, TB))
    out = fwd(x)
    jax.block_until_ready(out)

    ref = reference_forward(x, params)
    assert out.shape == (2, 10) and out.dtype == jnp.float32
    assert float(jnp.max(jnp.abs(out - ref))) < 0.1   # bf16 MXU operands, f32 accum
    print("KERNEL_OK")
</pallas_src>

<mosaic_0001>
module attributes {stable_mosaic.version = 11 : i64} {
  func.func @_fused_net_kernel(%arg0: i32, %arg1: memref<1x106x16xf32, #tpu.memory_space<vmem>>, %arg2: memref<4x16x256xbf16, #tpu.memory_space<vmem>>, %arg3: memref<1x256xf32, #tpu.memory_space<vmem>>, %arg4: memref<9x64x128xbf16, #tpu.memory_space<vmem>>, %arg5: memref<1x128xf32, #tpu.memory_space<vmem>>, %arg6: memref<16x32x128xbf16, #tpu.memory_space<vmem>>, %arg7: memref<1x128xf32, #tpu.memory_space<vmem>>, %arg8: memref<2x128xf32, #tpu.memory_space<vmem>>, %arg9: memref<114x64xf32, #tpu.memory_space<vmem>>, %arg10: memref<122x32xf32, #tpu.memory_space<vmem>>) attributes {dimension_semantics = [#tpu.dimension_semantics<parallel>], iteration_bounds = array<i64: 1>, scalar_prefetch = 0 : i64, scratch_operands = 2 : i64, tpu.core_type = #tpu.core_type<tc>, window_params = [{transform_indices = @transform_0, window_bounds = array<i64: 1, 106, 16>}, {pipeline_mode = #tpu.pipeline_mode<synchronous>, transform_indices = @transform_1, window_bounds = array<i64: 4, 16, 256>}, {pipeline_mode = #tpu.pipeline_mode<synchronous>, transform_indices = @transform_2, window_bounds = array<i64: 1, 256>}, {pipeline_mode = #tpu.pipeline_mode<synchronous>, transform_indices = @transform_3, window_bounds = array<i64: 9, 64, 128>}, {pipeline_mode = #tpu.pipeline_mode<synchronous>, transform_indices = @transform_4, window_bounds = array<i64: 1, 128>}, {pipeline_mode = #tpu.pipeline_mode<synchronous>, transform_indices = @transform_5, window_bounds = array<i64: 16, 32, 128>}, {pipeline_mode = #tpu.pipeline_mode<synchronous>, transform_indices = @transform_6, window_bounds = array<i64: 1, 128>}, {transform_indices = @transform_7, window_bounds = array<i64: 2, 128>}]} {
    %c0 = arith.constant 0 : index
    %c0_0 = arith.constant 0 : index
    %c0_1 = arith.constant 0 : index
    %0 = vector.load %arg1[%c0, %c0_0, %c0_1] : memref<1x106x16xf32, #tpu.memory_space<vmem>>, vector<1x98x16xf32>
    %1 = vector.shape_cast %0 : vector<1x98x16xf32> to vector<98x16xf32>
    %2 = arith.truncf %1 : vector<98x16xf32> to vector<98x16xbf16>
    %c0_2 = arith.constant 0 : index
    %c0_3 = arith.constant 0 : index
    %c0_4 = arith.constant 0 : index
    %3 = vector.load %arg2[%c0_2, %c0_3, %c0_4] : memref<4x16x256xbf16, #tpu.memory_space<vmem>>, vector<1x16x256xbf16>
    %4 = vector.shape_cast %3 : vector<1x16x256xbf16> to vector<16x256xbf16>
    %cst = arith.constant dense<0.000000e+00> : vector<98x256xf32>
    %5 = tpu.matmul %2, %4, %cst {dimension_numbers = #tpu.dot_dimension_numbers<[1], [0], [0], [1], [0, 0, 1, 1], [], []>} : vector<98x16xbf16>, vector<16x256xbf16>, vector<98x256xf32> -> vector<98x256xf32>
    %c0_5 = arith.constant 0 : index
    %c1 = arith.constant 1 : index
    %c0_6 = arith.constant 0 : index
    %6 = vector.load %arg1[%c0_5, %c1, %c0_6] : memref<1x106x16xf32, #tpu.memory_space<vmem>>, vector<1x98x16xf32>
    %7 = vector.shape_cast %6 : vector<1x98x16xf32> to vector<98x16xf32>
    %8 = arith.truncf %7 : vector<98x16xf32> to vector<98x16xbf16>
    %c1_7 = arith.constant 1 : index
    %c0_8 = arith.constant 0 : index
    %c0_9 = arith.constant 0 : index
    %9 = vector.load %arg2[%c1_7, %c0_8, %c0_9] : memref<4x16x256xbf16, #tpu.memory_space<vmem>>, vector<1x16x256xbf16>
    %10 = vector.shape_cast %9 : vector<1x16x256xbf16> to vector<16x256xbf16>
    %cst_10 = arith.constant dense<0.000000e+00> : vector<98x256xf32>
    %11 = tpu.matmul %8, %10, %cst_10 {dimension_numbers = #tpu.dot_dimension_numbers<[1], [0], [0], [1], [0, 0, 1, 1], [], []>} : vector<98x16xbf16>, vector<16x256xbf16>, vector<98x256xf32> -> vector<98x256xf32>
    %12 = arith.addf %5, %11 : vector<98x256xf32>
    %c0_11 = arith.constant 0 : index
    %c7 = arith.constant 7 : index
    %c0_12 = arith.constant 0 : index
    %13 = vector.load %arg1[%c0_11, %c7, %c0_12] : memref<1x106x16xf32, #tpu.memory_space<vmem>>, vector<1x98x16xf32>
    %14 = vector.shape_cast %13 : vector<1x98x16xf32> to vector<98x16xf32>
    %15 = arith.truncf %14 : vector<98x16xf32> to vector<98x16xbf16>
    %c2 = arith.constant 2 : index
    %c0_13 = arith.constant 0 : index
    %c0_14 = arith.constant 0 : index
    %16 = vector.load %arg2[%c2, %c0_13, %c0_14] : memref<4x16x256xbf16, #tpu.memory_space<vmem>>, vector<1x16x256xbf16>
    %17 = vector.shape_cast %16 : vector<1x16x256xbf16> to vector<16x256xbf16>
    %cst_15 = arith.constant dense<0.000000e+00> : vector<98x256xf32>
    %18 = tpu.matmul %15, %17, %cst_15 {dimension_numbers = #tpu.dot_dimension_numbers<[1], [0], [0], [1], [0, 0, 1, 1], [], []>} : vector<98x16xbf16>, vector<16x256xbf16>, vector<98x256xf32> -> vector<98x256xf32>
    %19 = arith.addf %12, %18 : vector<98x256xf32>
    %c0_16 = arith.constant 0 : index
    %c8 = arith.constant 8 : index
    %c0_17 = arith.constant 0 : index
    %20 = vector.load %arg1[%c0_16, %c8, %c0_17] : memref<1x106x16xf32, #tpu.memory_space<vmem>>, vector<1x98x16xf32>
    %21 = vector.shape_cast %20 : vector<1x98x16xf32> to vector<98x16xf32>
    %22 = arith.truncf %21 : vector<98x16xf32> to vector<98x16xbf16>
    %c3 = arith.constant 3 : index
    %c0_18 = arith.constant 0 : index
    %c0_19 = arith.constant 0 : index
    %23 = vector.load %arg2[%c3, %c0_18, %c0_19] : memref<4x16x256xbf16, #tpu.memory_space<vmem>>, vector<1x16x256xbf16>
    %24 = vector.shape_cast %23 : vector<1x16x256xbf16> to vector<16x256xbf16>
    %cst_20 = arith.constant dense<0.000000e+00> : vector<98x256xf32>
    %25 = tpu.matmul %22, %24, %cst_20 {dimension_numbers = #tpu.dot_dimension_numbers<[1], [0], [0], [1], [0, 0, 1, 1], [], []>} : vector<98x16xbf16>, vector<16x256xbf16>, vector<98x256xf32> -> vector<98x256xf32>
    %26 = arith.addf %19, %25 : vector<98x256xf32>
    %c0_21 = arith.constant 0 : index
    %c0_22 = arith.constant 0 : index
    %27 = vector.load %arg3[%c0_21, %c0_22] : memref<1x256xf32, #tpu.memory_space<vmem>>, vector<1x256xf32>
    %28 = vector.broadcast %27 : vector<1x256xf32> to vector<98x256xf32>
    %29 = arith.addf %26, %28 : vector<98x256xf32>
    %30 = vector.extract_strided_slice %29 {offsets = [0, 0], sizes = [98, 16], strides = [1, 1]} : vector<98x256xf32> to vector<98x16xf32>
    %31 = vector.extract_strided_slice %29 {offsets = [0, 16], sizes = [98, 16], strides = [1, 1]} : vector<98x256xf32> to vector<98x16xf32>
    %32 = arith.maximumf %30, %31 : vector<98x16xf32>
    %33 = vector.extract_strided_slice %29 {offsets = [0, 64], sizes = [98, 16], strides = [1, 1]} : vector<98x256xf32> to vector<98x16xf32>
    %34 = arith.maximumf %32, %33 : vector<98x16xf32>
    %35 = vector.extract_strided_slice %29 {offsets = [0, 80], sizes = [98, 16], strides = [1, 1]} : vector<98x256xf32> to vector<98x16xf32>
    %36 = arith.maximumf %34, %35 : vector<98x16xf32>
    %cst_23 = arith.constant 0.000000e+00 : f32
    %37 = vector.broadcast %cst_23 : f32 to vector<98x16xf32>
    %38 = arith.maximumf %36, %37 : vector<98x16xf32>
    %c0_24 = arith.constant 0 : index
    %c0_25 = arith.constant 0 : index
    %39 = vector.load %arg9[%c0_24, %c0_25] : memref<114x64xf32, #tpu.memory_space<vmem>>, vector<98x16xf32>
    tpu.vector_store %arg9[%c0_24, %c0_25], %38 {strides = array<i32>} : memref<114x64xf32, #tpu.memory_space<vmem>>, vector<98x16xf32>,
    %40 = vector.extract_strided_slice %29 {offsets = [0, 32], sizes = [98, 16], strides = [1, 1]} : vector<98x256xf32> to vector<98x16xf32>
    %41 = vector.extract_strided_slice %29 {offsets = [0, 48], sizes = [98, 16], strides = [1, 1]} : vector<98x256xf32> to vector<98x16xf32>
    %42 = arith.maximumf %40, %41 : vector<98x16xf32>
    %43 = vector.extract_strided_slice %29 {offsets = [0, 96], sizes = [98, 16], strides = [1, 1]} : vector<98x256xf32> to vector<98x16xf32>
    %44 = arith.maximumf %42, %43 : vector<98x16xf32>
    %45 = vector.extract_strided_slice %29 {offsets = [0, 112], sizes = [98, 16], strides = [1, 1]} : vector<98x256xf32> to vector<98x16xf32>
    %46 = arith.maximumf %44, %45 : vector<98x16xf32>
    %cst_26 = arith.constant 0.000000e+00 : f32
    %47 = vector.broadcast %cst_26 : f32 to vector<98x16xf32>
    %48 = arith.maximumf %46, %47 : vector<98x16xf32>
    %c0_27 = arith.constant 0 : index
    %c16 = arith.constant 16 : index
    %49 = vector.load %arg9[%c0_27, %c16] : memref<114x64xf32, #tpu.memory_space<vmem>>, vector<98x16xf32>
    tpu.vector_store %arg9[%c0_27, %c16], %48 {strides = array<i32>} : memref<114x64xf32, #tpu.memory_space<vmem>>, vector<98x16xf32>,
    %50 = vector.extract_strided_slice %29 {offsets = [0, 128], sizes = [98, 16], strides = [1, 1]} : vector<98x256xf32> to vector<98x16xf32>
    %51 = vector.extract_strided_slice %29 {offsets = [0, 144], sizes = [98, 16], strides = [1, 1]} : vector<98x256xf32> to vector<98x16xf32>
    %52 = arith.maximumf %50, %51 : vector<98x16xf32>
    %53 = vector.extract_strided_slice %29 {offsets = [0, 192], sizes = [98, 16], strides = [1, 1]} : vector<98x256xf32> to vector<98x16xf32>
    %54 = arith.maximumf %52, %53 : vector<98x16xf32>
    %55 = vector.extract_strided_slice %29 {offsets = [0, 208], sizes = [98, 16], strides = [1, 1]} : vector<98x256xf32> to vector<98x16xf32>
    %56 = arith.maximumf %54, %55 : vector<98x16xf32>
    %cst_28 = arith.constant 0.000000e+00 : f32
    %57 = vector.broadcast %cst_28 : f32 to vector<98x16xf32>
    %58 = arith.maximumf %56, %57 : vector<98x16xf32>
    %c0_29 = arith.constant 0 : index
    %c32 = arith.constant 32 : index
    %59 = vector.load %arg9[%c0_29, %c32] : memref<114x64xf32, #tpu.memory_space<vmem>>, vector<98x16xf32>
    tpu.vector_store %arg9[%c0_29, %c32], %58 {strides = array<i32>} : memref<114x64xf32, #tpu.memory_space<vmem>>, vector<98x16xf32>,
    %60 = vector.extract_strided_slice %29 {offsets = [0, 160], sizes = [98, 16], strides = [1, 1]} : vector<98x256xf32> to vector<98x16xf32>
    %61 = vector.extract_strided_slice %29 {offsets = [0, 176], sizes = [98, 16], strides = [1, 1]} : vector<98x256xf32> to vector<98x16xf32>
    %62 = arith.maximumf %60, %61 : vector<98x16xf32>
    %63 = vector.extract_strided_slice %29 {offsets = [0, 224], sizes = [98, 16], strides = [1, 1]} : vector<98x256xf32> to vector<98x16xf32>
    %64 = arith.maximumf %62, %63 : vector<98x16xf32>
    %65 = vector.extract_strided_slice %29 {offsets = [0, 240], sizes = [98, 16], strides = [1, 1]} : vector<98x256xf32> to vector<98x16xf32>
    %66 = arith.maximumf %64, %65 : vector<98x16xf32>
    %cst_30 = arith.constant 0.000000e+00 : f32
    %67 = vector.broadcast %cst_30 : f32 to vector<98x16xf32>
    %68 = arith.maximumf %66, %67 : vector<98x16xf32>
    %c0_31 = arith.constant 0 : index
    %c48 = arith.constant 48 : index
    %69 = vector.load %arg9[%c0_31, %c48] : memref<114x64xf32, #tpu.memory_space<vmem>>, vector<98x16xf32>
    tpu.vector_store %arg9[%c0_31, %c48], %68 {strides = array<i32>} : memref<114x64xf32, #tpu.memory_space<vmem>>, vector<98x16xf32>,
    %cst_32 = arith.constant 0.000000e+00 : f32
    %70 = vector.broadcast %cst_32 : f32 to vector<16x64xf32>
    %c98 = arith.constant 98 : index
    %c0_33 = arith.constant 0 : index
    %71 = vector.load %arg9[%c98, %c0_33] : memref<114x64xf32, #tpu.memory_space<vmem>>, vector<16x64xf32>
    tpu.vector_store %arg9[%c98, %c0_33], %70 {strides = array<i32>} : memref<114x64xf32, #tpu.memory_space<vmem>>, vector<16x64xf32>,
    %c0_34 = arith.constant 0 : index
    %c0_35 = arith.constant 0 : index
    %72 = vector.load %arg9[%c0_34, %c0_35] : memref<114x64xf32, #tpu.memory_space<vmem>>, vector<98x64xf32>
    %73 = arith.truncf %72 : vector<98x64xf32> to vector<98x64xbf16>
    %c0_36 = arith.constant 0 : index
    %c0_37 = arith.constant 0 : index
    %c0_38 = arith.constant 0 : index
    %74 = vector.load %arg4[%c0_36, %c0_37, %c0_38] : memref<9x64x128xbf16, #tpu.memory_space<vmem>>, vector<1x64x128xbf16>
    %75 = vector.shape_cast %74 : vector<1x64x128xbf16> to vector<64x128xbf16>
    %cst_39 = arith.constant dense<0.000000e+00> : vector<98x128xf32>
    %76 = tpu.matmul %73, %75, %cst_39 {dimension_numbers = #tpu.dot_dimension_numbers<[1], [0], [0], [1], [0, 0, 1, 1], [], []>} : vector<98x64xbf16>, vector<64x128xbf16>, vector<98x128xf32> -> vector<98x128xf32>
    %c1_40 = arith.constant 1 : index
    %c0_41 = arith.constant 0 : index
    %77 = vector.load %arg9[%c1_40, %c0_41] : memref<114x64xf32, #tpu.memory_space<vmem>>, vector<98x64xf32>
    %78 = arith.truncf %77 : vector<98x64xf32> to vector<98x64xbf16>
    %c1_42 = arith.constant 1 : index
    %c0_43 = arith.constant 0 : index
    %c0_44 = arith.constant 0 : index
    %79 = vector.load %arg4[%c1_42, %c0_43, %c0_44] : memref<9x64x128xbf16, #tpu.memory_space<vmem>>, vector<1x64x128xbf16>
    %80 = vector.shape_cast %79 : vector<1x64x128xbf16> to vector<64x128xbf16>
    %cst_45 = arith.constant dense<0.000000e+00> : vector<98x128xf32>
    %81 = tpu.matmul %78, %80, %cst_45 {dimension_numbers = #tpu.dot_dimension_numbers<[1], [0], [0], [1], [0, 0, 1, 1], [], []>} : vector<98x64xbf16>, vector<64x128xbf16>, vector<98x128xf32> -> vector<98x128xf32>
    %82 = arith.addf %76, %81 : vector<98x128xf32>
    %c2_46 = arith.constant 2 : index
    %c0_47 = arith.constant 0 : index
    %83 = vector.load %arg9[%c2_46, %c0_47] : memref<114x64xf32, #tpu.memory_space<vmem>>, vector<98x64xf32>
    %84 = arith.truncf %83 : vector<98x64xf32> to vector<98x64xbf16>
    %c2_48 = arith.constant 2 : index
    %c0_49 = arith.constant 0 : index
    %c0_50 = arith.constant 0 : index
    %85 = vector.load %arg4[%c2_48, %c0_49, %c0_50] : memref<9x64x128xbf16, #tpu.memory_space<vmem>>, vector<1x64x128xbf16>
    %86 = vector.shape_cast %85 : vector<1x64x128xbf16> to vector<64x128xbf16>
    %cst_51 = arith.constant dense<0.000000e+00> : vector<98x128xf32>
    %87 = tpu.matmul %84, %86, %cst_51 {dimension_numbers = #tpu.dot_dimension_numbers<[1], [0], [0], [1], [0, 0, 1, 1], [], []>} : vector<98x64xbf16>, vector<64x128xbf16>, vector<98x128xf32> -> vector<98x128xf32>
    %88 = arith.addf %82, %87 : vector<98x128xf32>
    %c7_52 = arith.constant 7 : index
    %c0_53 = arith.constant 0 : index
    %89 = vector.load %arg9[%c7_52, %c0_53] : memref<114x64xf32, #tpu.memory_space<vmem>>, vector<98x64xf32>
    %90 = arith.truncf %89 : vector<98x64xf32> to vector<98x64xbf16>
    %c3_54 = arith.constant 3 : index
    %c0_55 = arith.constant 0 : index
    %c0_56 = arith.constant 0 : index
    %91 = vector.load %arg4[%c3_54, %c0_55, %c0_56] : memref<9x64x128xbf16, #tpu.memory_space<vmem>>, vector<1x64x128xbf16>
    %92 = vector.shape_cast %91 : vector<1x64x128xbf16> to vector<64x128xbf16>
    %cst_57 = arith.constant dense<0.000000e+00> : vector<98x128xf32>
    %93 = tpu.matmul %90, %92, %cst_57 {dimension_numbers = #tpu.dot_dimension_numbers<[1], [0], [0], [1], [0, 0, 1, 1], [], []>} : vector<98x64xbf16>, vector<64x128xbf16>, vector<98x128xf32> -> vector<98x128xf32>
    %94 = arith.addf %88, %93 : vector<98x128xf32>
    %c8_58 = arith.constant 8 : index
    %c0_59 = arith.constant 0 : index
    %95 = vector.load %arg9[%c8_58, %c0_59] : memref<114x64xf32, #tpu.memory_space<vmem>>, vector<98x64xf32>
    %96 = arith.truncf %95 : vector<98x64xf32> to vector<98x64xbf16>
    %c4 = arith.constant 4 : index
    %c0_60 = arith.constant 0 : index
    %c0_61 = arith.constant 0 : index
    %97 = vector.load %arg4[%c4, %c0_60, %c0_61] : memref<9x64x128xbf16, #tpu.memory_space<vmem>>, vector<1x64x128xbf16>
    %98 = vector.shape_cast %97 : vector<1x64x128xbf16> to vector<64x128xbf16>
    %cst_62 = arith.constant dense<0.000000e+00> : vector<98x128xf32>
    %99 = tpu.matmul %96, %98, %cst_62 {dimension_numbers = #tpu.dot_dimension_numbers<[1], [0], [0], [1], [0, 0, 1, 1], [], []>} : vector<98x64xbf16>, vector<64x128xbf16>, vector<98x128xf32> -> vector<98x128xf32>
    %100 = arith.addf %94, %99 : vector<98x128xf32>
    %c9 = arith.constant 9 : index
    %c0_63 = arith.constant 0 : index
    %101 = vector.load %arg9[%c9, %c0_63] : memref<114x64xf32, #tpu.memory_space<vmem>>, vector<98x64xf32>
    %102 = arith.truncf %101 : vector<98x64xf32> to vector<98x64xbf16>
    %c5 = arith.constant 5 : index
    %c0_64 = arith.constant 0 : index
    %c0_65 = arith.constant 0 : index
    %103 = vector.load %arg4[%c5, %c0_64, %c0_65] : memref<9x64x128xbf16, #tpu.memory_space<vmem>>, vector<1x64x128xbf16>
    %104 = vector.shape_cast %103 : vector<1x64x128xbf16> to vector<64x128xbf16>
    %cst_66 = arith.constant dense<0.000000e+00> : vector<98x128xf32>
    %105 = tpu.matmul %102, %104, %cst_66 {dimension_numbers = #tpu.dot_dimension_numbers<[1], [0], [0], [1], [0, 0, 1, 1], [], []>} : vector<98x64xbf16>, vector<64x128xbf16>, vector<98x128xf32> -> vector<98x128xf32>
    %106 = arith.addf %100, %105 : vector<98x128xf32>
    %c14 = arith.constant 14 : index
    %c0_67 = arith.constant 0 : index
    %107 = vector.load %arg9[%c14, %c0_67] : memref<114x64xf32, #tpu.memory_space<vmem>>, vector<98x64xf32>
    %108 = arith.truncf %107 : vector<98x64xf32> to vector<98x64xbf16>
    %c6 = arith.constant 6 : index
    %c0_68 = arith.constant 0 : index
    %c0_69 = arith.constant 0 : index
    %109 = vector.load %arg4[%c6, %c0_68, %c0_69] : memref<9x64x128xbf16, #tpu.memory_space<vmem>>, vector<1x64x128xbf16>
    %110 = vector.shape_cast %109 : vector<1x64x128xbf16> to vector<64x128xbf16>
    %cst_70 = arith.constant dense<0.000000e+00> : vector<98x128xf32>
    %111 = tpu.matmul %108, %110, %cst_70 {dimension_numbers = #tpu.dot_dimension_numbers<[1], [0], [0], [1], [0, 0, 1, 1], [], []>} : vector<98x64xbf16>, vector<64x128xbf16>, vector<98x128xf32> -> vector<98x128xf32>
    %112 = arith.addf %106, %111 : vector<98x128xf32>
    %c15 = arith.constant 15 : index
    %c0_71 = arith.constant 0 : index
    %113 = vector.load %arg9[%c15, %c0_71] : memref<114x64xf32, #tpu.memory_space<vmem>>, vector<98x64xf32>
    %114 = arith.truncf %113 : vector<98x64xf32> to vector<98x64xbf16>
    %c7_72 = arith.constant 7 : index
    %c0_73 = arith.constant 0 : index
    %c0_74 = arith.constant 0 : index
    %115 = vector.load %arg4[%c7_72, %c0_73, %c0_74] : memref<9x64x128xbf16, #tpu.memory_space<vmem>>, vector<1x64x128xbf16>
    %116 = vector.shape_cast %115 : vector<1x64x128xbf16> to vector<64x128xbf16>
    %cst_75 = arith.constant dense<0.000000e+00> : vector<98x128xf32>
    %117 = tpu.matmul %114, %116, %cst_75 {dimension_numbers = #tpu.dot_dimension_numbers<[1], [0], [0], [1], [0, 0, 1, 1], [], []>} : vector<98x64xbf16>, vector<64x128xbf16>, vector<98x128xf32> -> vector<98x128xf32>
    %118 = arith.addf %112, %117 : vector<98x128xf32>
    %c16_76 = arith.constant 16 : index
    %c0_77 = arith.constant 0 : index
    %119 = vector.load %arg9[%c16_76, %c0_77] : memref<114x64xf32, #tpu.memory_space<vmem>>, vector<98x64xf32>
    %120 = arith.truncf %119 : vector<98x64xf32> to vector<98x64xbf16>
    %c8_78 = arith.constant 8 : index
    %c0_79 = arith.constant 0 : index
    %c0_80 = arith.constant 0 : index
    %121 = vector.load %arg4[%c8_78, %c0_79, %c0_80] : memref<9x64x128xbf16, #tpu.memory_space<vmem>>, vector<1x64x128xbf16>
    %122 = vector.shape_cast %121 : vector<1x64x128xbf16> to vector<64x128xbf16>
    %cst_81 = arith.constant dense<0.000000e+00> : vector<98x128xf32>
    %123 = tpu.matmul %120, %122, %cst_81 {dimension_numbers = #tpu.dot_dimension_numbers<[1], [0], [0], [1], [0, 0, 1, 1], [], []>} : vector<98x64xbf16>, vector<64x128xbf16>, vector<98x128xf32> -> vector<98x128xf32>
    %124 = arith.addf %118, %123 : vector<98x128xf32>
    %c0_82 = arith.constant 0 : index
    %c0_83 = arith.constant 0 : index
    %125 = vector.load %arg5[%c0_82, %c0_83] : memref<1x128xf32, #tpu.memory_space<vmem>>, vector<1x128xf32>
    %126 = vector.broadcast %125 : vector<1x128xf32> to vector<98x128xf32>
    %127 = arith.addf %124, %126 : vector<98x128xf32>
    %128 = vector.extract_strided_slice %127 {offsets = [0, 0], sizes = [98, 32], strides = [1, 1]} : vector<98x128xf32> to vector<98x32xf32>
    %129 = vector.extract_strided_slice %127 {offsets = [0, 32], sizes = [98, 32], strides = [1, 1]} : vector<98x128xf32> to vector<98x32xf32>
    %130 = arith.maximumf %128, %129 : vector<98x32xf32>
    %131 = vector.extract_strided_slice %127 {offsets = [0, 64], sizes = [98, 32], strides = [1, 1]} : vector<98x128xf32> to vector<98x32xf32>
    %132 = arith.maximumf %130, %131 : vector<98x32xf32>
    %133 = vector.extract_strided_slice %127 {offsets = [0, 96], sizes = [98, 32], strides = [1, 1]} : vector<98x128xf32> to vector<98x32xf32>
    %134 = arith.maximumf %132, %133 : vector<98x32xf32>
    %cst_84 = arith.constant 0.000000e+00 : f32
    %135 = vector.broadcast %cst_84 : f32 to vector<98x32xf32>
    %136 = arith.maximumf %134, %135 : vector<98x32xf32>
    %c0_85 = arith.constant 0 : index
    %c0_86 = arith.constant 0 : index
    %137 = vector.load %arg10[%c0_85, %c0_86] : memref<122x32xf32, #tpu.memory_space<vmem>>, vector<98x32xf32>
    tpu.vector_store %arg10[%c0_85, %c0_86], %136 {strides = array<i32>} : memref<122x32xf32, #tpu.memory_space<vmem>>, vector<98x32xf32>,
    %cst_87 = arith.constant 0.000000e+00 : f32
    %138 = vector.broadcast %cst_87 : f32 to vector<24x32xf32>
    %c98_88 = arith.constant 98 : index
    %c0_89 = arith.constant 0 : index
    %139 = vector.load %arg10[%c98_88, %c0_89] : memref<122x32xf32, #tpu.memory_space<vmem>>, vector<24x32xf32>
    tpu.vector_store %arg10[%c98_88, %c0_89], %138 {strides = array<i32>} : memref<122x32xf32, #tpu.memory_space<vmem>>, vector<24x32xf32>,
    %c0_90 = arith.constant 0 : index
    %c0_91 = arith.constant 0 : index
    %140 = vector.load %arg10[%c0_90, %c0_91] : memref<122x32xf32, #tpu.memory_space<vmem>>, vector<98x32xf32>
    %141 = arith.truncf %140 : vector<98x32xf32> to vector<98x32xbf16>
    %c0_92 = arith.constant 0 : index
    %c0_93 = arith.constant 0 : index
    %c0_94 = arith.constant 0 : index
    %142 = vector.load %arg6[%c0_92, %c0_93, %c0_94] : memref<16x32x128xbf16, #tpu.memory_space<vmem>>, vector<1x32x128xbf16>
    %143 = vector.shape_cast %142 : vector<1x32x128xbf16> to vector<32x128xbf16>
    %cst_95 = arith.constant dense<0.000000e+00> : vector<98x128xf32>
    %144 = tpu.matmul %141, %143, %cst_95 {dimension_numbers = #tpu.dot_dimension_numbers<[1], [0], [0], [1], [0, 0, 1, 1], [], []>} : vector<98x32xbf16>, vector<32x128xbf16>, vector<98x128xf32> -> vector<98x128xf32>
    %c1_96 = arith.constant 1 : index
    %c0_97 = arith.constant 0 : index
    %145 = vector.load %arg10[%c1_96, %c0_97] : memref<122x32xf32, #tpu.memory_space<vmem>>, vector<98x32xf32>
    %146 = arith.truncf %145 : vector<98x32xf32> to vector<98x32xbf16>
    %c1_98 = arith.constant 1 : index
    %c0_99 = arith.constant 0 : index
    %c0_100 = arith.constant 0 : index
    %147 = vector.load %arg6[%c1_98, %c0_99, %c0_100] : memref<16x32x128xbf16, #tpu.memory_space<vmem>>, vector<1x32x128xbf16>
    %148 = vector.shape_cast %147 : vector<1x32x128xbf16> to vector<32x128xbf16>
    %cst_101 = arith.constant dense<0.000000e+00> : vector<98x128xf32>
    %149 = tpu.matmul %146, %148, %cst_101 {dimension_numbers = #tpu.dot_dimension_numbers<[1], [0], [0], [1], [0, 0, 1, 1], [], []>} : vector<98x32xbf16>, vector<32x128xbf16>, vector<98x128xf32> -> vector<98x128xf32>
    %150 = arith.addf %144, %149 : vector<98x128xf32>
    %c2_102 = arith.constant 2 : index
    %c0_103 = arith.constant 0 : index
    %151 = vector.load %arg10[%c2_102, %c0_103] : memref<122x32xf32, #tpu.memory_space<vmem>>, vector<98x32xf32>
    %152 = arith.truncf %151 : vector<98x32xf32> to vector<98x32xbf16>
    %c2_104 = arith.constant 2 : index
    %c0_105 = arith.constant 0 : index
    %c0_106 = arith.constant 0 : index
    %153 = vector.load %arg6[%c2_104, %c0_105, %c0_106] : memref<16x32x128xbf16, #tpu.memory_space<vmem>>, vector<1x32x128xbf16>
    %154 = vector.shape_cast %153 : vector<1x32x128xbf16> to vector<32x128xbf16>
    %cst_107 = arith.constant dense<0.000000e+00> : vector<98x128xf32>
    %155 = tpu.matmul %152, %154, %cst_107 {dimension_numbers = #tpu.dot_dimension_numbers<[1], [0], [0], [1], [0, 0, 1, 1], [], []>} : vector<98x32xbf16>, vector<32x128xbf16>, vector<98x128xf32> -> vector<98x128xf32>
    %156 = arith.addf %150, %155 : vector<98x128xf32>
    %c3_108 = arith.constant 3 : index
    %c0_109 = arith.constant 0 : index
    %157 = vector.load %arg10[%c3_108, %c0_109] : memref<122x32xf32, #tpu.memory_space<vmem>>, vector<98x32xf32>
    %158 = arith.truncf %157 : vector<98x32xf32> to vector<98x32xbf16>
    %c3_110 = arith.constant 3 : index
    %c0_111 = arith.constant 0 : index
    %c0_112 = arith.constant 0 : index
    %159 = vector.load %arg6[%c3_110, %c0_111, %c0_112] : memref<16x32x128xbf16, #tpu.memory_space<vmem>>, vector<1x32x128xbf16>
    %160 = vector.shape_cast %159 : vector<1x32x128xbf16> to vector<32x128xbf16>
    %cst_113 = arith.constant dense<0.000000e+00> : vector<98x128xf32>
    %161 = tpu.matmul %158, %160, %cst_113 {dimension_numbers = #tpu.dot_dimension_numbers<[1], [0], [0], [1], [0, 0, 1, 1], [], []>} : vector<98x32xbf16>, vector<32x128xbf16>, vector<98x128xf32> -> vector<98x128xf32>
    %162 = arith.addf %156, %161 : vector<98x128xf32>
    %c7_114 = arith.constant 7 : index
    %c0_115 = arith.constant 0 : index
    %163 = vector.load %arg10[%c7_114, %c0_115] : memref<122x32xf32, #tpu.memory_space<vmem>>, vector<98x32xf32>
    %164 = arith.truncf %163 : vector<98x32xf32> to vector<98x32xbf16>
    %c4_116 = arith.constant 4 : index
    %c0_117 = arith.constant 0 : index
    %c0_118 = arith.constant 0 : index
    %165 = vector.load %arg6[%c4_116, %c0_117, %c0_118] : memref<16x32x128xbf16, #tpu.memory_space<vmem>>, vector<1x32x128xbf16>
    %166 = vector.shape_cast %165 : vector<1x32x128xbf16> to vector<32x128xbf16>
    %cst_119 = arith.constant dense<0.000000e+00> : vector<98x128xf32>
    %167 = tpu.matmul %164, %166, %cst_119 {dimension_numbers = #tpu.dot_dimension_numbers<[1], [0], [0], [1], [0, 0, 1, 1], [], []>} : vector<98x32xbf16>, vector<32x128xbf16>, vector<98x128xf32> -> vector<98x128xf32>
    %168 = arith.addf %162, %167 : vector<98x128xf32>
    %c8_120 = arith.constant 8 : index
    %c0_121 = arith.constant 0 : index
    %169 = vector.load %arg10[%c8_120, %c0_121] : memref<122x32xf32, #tpu.memory_space<vmem>>, vector<98x32xf32>
    %170 = arith.truncf %169 : vector<98x32xf32> to vector<98x32xbf16>
    %c5_122 = arith.constant 5 : index
    %c0_123 = arith.constant 0 : index
    %c0_124 = arith.constant 0 : index
    %171 = vector.load %arg6[%c5_122, %c0_123, %c0_124] : memref<16x32x128xbf16, #tpu.memory_space<vmem>>, vector<1x32x128xbf16>
    %172 = vector.shape_cast %171 : vector<1x32x128xbf16> to vector<32x128xbf16>
    %cst_125 = arith.constant dense<0.000000e+00> : vector<98x128xf32>
    %173 = tpu.matmul %170, %172, %cst_125 {dimension_numbers = #tpu.dot_dimension_numbers<[1], [0], [0], [1], [0, 0, 1, 1], [], []>} : vector<98x32xbf16>, vector<32x128xbf16>, vector<98x128xf32> -> vector<98x128xf32>
    %174 = arith.addf %168, %173 : vector<98x128xf32>
    %c9_126 = arith.constant 9 : index
    %c0_127 = arith.constant 0 : index
    %175 = vector.load %arg10[%c9_126, %c0_127] : memref<122x32xf32, #tpu.memory_space<vmem>>, vector<98x32xf32>
    %176 = arith.truncf %175 : vector<98x32xf32> to vector<98x32xbf16>
    %c6_128 = arith.constant 6 : index
    %c0_129 = arith.constant 0 : index
    %c0_130 = arith.constant 0 : index
    %177 = vector.load %arg6[%c6_128, %c0_129, %c0_130] : memref<16x32x128xbf16, #tpu.memory_space<vmem>>, vector<1x32x128xbf16>
    %178 = vector.shape_cast %177 : vector<1x32x128xbf16> to vector<32x128xbf16>
    %cst_131 = arith.constant dense<0.000000e+00> : vector<98x128xf32>
    %179 = tpu.matmul %176, %178, %cst_131 {dimension_numbers = #tpu.dot_dimension_numbers<[1], [0], [0], [1], [0, 0, 1, 1], [], []>} : vector<98x32xbf16>, vector<32x128xbf16>, vector<98x128xf32> -> vector<98x128xf32>
    %180 = arith.addf %174, %179 : vector<98x128xf32>
    %c10 = arith.constant 10 : index
    %c0_132 = arith.constant 0 : index
    %181 = vector.load %arg10[%c10, %c0_132] : memref<122x32xf32, #tpu.memory_space<vmem>>, vector<98x32xf32>
    %182 = arith.truncf %181 : vector<98x32xf32> to vector<98x32xbf16>
    %c7_133 = arith.constant 7 : index
    %c0_134 = arith.constant 0 : index
    %c0_135 = arith.constant 0 : index
    %183 = vector.load %arg6[%c7_133, %c0_134, %c0_135] : memref<16x32x128xbf16, #tpu.memory_space<vmem>>, vector<1x32x128xbf16>
    %184 = vector.shape_cast %183 : vector<1x32x128xbf16> to vector<32x128xbf16>
    %cst_136 = arith.constant dense<0.000000e+00> : vector<98x128xf32>
    %185 = tpu.matmul %182, %184, %cst_136 {dimension_numbers = #tpu.dot_dimension_numbers<[1], [0], [0], [1], [0, 0, 1, 1], [], []>} : vector<98x32xbf16>, vector<32x128xbf16>, vector<98x128xf32> -> vector<98x128xf32>
    %186 = arith.addf %180, %185 : vector<98x128xf32>
    %c14_137 = arith.constant 14 : index
    %c0_138 = arith.constant 0 : index
    %187 = vector.load %arg10[%c14_137, %c0_138] : memref<122x32xf32, #tpu.memory_space<vmem>>, vector<98x32xf32>
    %188 = arith.truncf %187 : vector<98x32xf32> to vector<98x32xbf16>
    %c8_139 = arith.constant 8 : index
    %c0_140 = arith.constant 0 : index
    %c0_141 = arith.constant 0 : index
    %189 = vector.load %arg6[%c8_139, %c0_140, %c0_141] : memref<16x32x128xbf16, #tpu.memory_space<vmem>>, vector<1x32x128xbf16>
    %190 = vector.shape_cast %189 : vector<1x32x128xbf16> to vector<32x128xbf16>
    %cst_142 = arith.constant dense<0.000000e+00> : vector<98x128xf32>
    %191 = tpu.matmul %188, %190, %cst_142 {dimension_numbers = #tpu.dot_dimension_numbers<[1], [0], [0], [1], [0, 0, 1, 1], [], []>} : vector<98x32xbf16>, vector<32x128xbf16>, vector<98x128xf32> -> vector<98x128xf32>
    %192 = arith.addf %186, %191 : vector<98x128xf32>
    %c15_143 = arith.constant 15 : index
    %c0_144 = arith.constant 0 : index
    %193 = vector.load %arg10[%c15_143, %c0_144] : memref<122x32xf32, #tpu.memory_space<vmem>>, vector<98x32xf32>
    %194 = arith.truncf %193 : vector<98x32xf32> to vector<98x32xbf16>
    %c9_145 = arith.constant 9 : index
    %c0_146 = arith.constant 0 : index
    %c0_147 = arith.constant 0 : index
    %195 = vector.load %arg6[%c9_145, %c0_146, %c0_147] : memref<16x32x128xbf16, #tpu.memory_space<vmem>>, vector<1x32x128xbf16>
    %196 = vector.shape_cast %195 : vector<1x32x128xbf16> to vector<32x128xbf16>
    %cst_148 = arith.constant dense<0.000000e+00> : vector<98x128xf32>
    %197 = tpu.matmul %194, %196, %cst_148 {dimension_numbers = #tpu.dot_dimension_numbers<[1], [0], [0], [1], [0, 0, 1, 1], [], []>} : vector<98x32xbf16>, vector<32x128xbf16>, vector<98x128xf32> -> vector<98x128xf32>
    %198 = arith.addf %192, %197 : vector<98x128xf32>
    %c16_149 = arith.constant 16 : index
    %c0_150 = arith.constant 0 : index
    %199 = vector.load %arg10[%c16_149, %c0_150] : memref<122x32xf32, #tpu.memory_space<vmem>>, vector<98x32xf32>
    %200 = arith.truncf %199 : vector<98x32xf32> to vector<98x32xbf16>
    %c10_151 = arith.constant 10 : index
    %c0_152 = arith.constant 0 : index
    %c0_153 = arith.constant 0 : index
    %201 = vector.load %arg6[%c10_151, %c0_152, %c0_153] : memref<16x32x128xbf16, #tpu.memory_space<vmem>>, vector<1x32x128xbf16>
    %202 = vector.shape_cast %201 : vector<1x32x128xbf16> to vector<32x128xbf16>
    %cst_154 = arith.constant dense<0.000000e+00> : vector<98x128xf32>
    %203 = tpu.matmul %200, %202, %cst_154 {dimension_numbers = #tpu.dot_dimension_numbers<[1], [0], [0], [1], [0, 0, 1, 1], [], []>} : vector<98x32xbf16>, vector<32x128xbf16>, vector<98x128xf32> -> vector<98x128xf32>
    %204 = arith.addf %198, %203 : vector<98x128xf32>
    %c17 = arith.constant 17 : index
    %c0_155 = arith.constant 0 : index
    %205 = vector.load %arg10[%c17, %c0_155] : memref<122x32xf32, #tpu.memory_space<vmem>>, vector<98x32xf32>
    %206 = arith.truncf %205 : vector<98x32xf32> to vector<98x32xbf16>
    %c11 = arith.constant 11 : index
    %c0_156 = arith.constant 0 : index
    %c0_157 = arith.constant 0 : index
    %207 = vector.load %arg6[%c11, %c0_156, %c0_157] : memref<16x32x128xbf16, #tpu.memory_space<vmem>>, vector<1x32x128xbf16>
    %208 = vector.shape_cast %207 : vector<1x32x128xbf16> to vector<32x128xbf16>
    %cst_158 = arith.constant dense<0.000000e+00> : vector<98x128xf32>
    %209 = tpu.matmul %206, %208, %cst_158 {dimension_numbers = #tpu.dot_dimension_numbers<[1], [0], [0], [1], [0, 0, 1, 1], [], []>} : vector<98x32xbf16>, vector<32x128xbf16>, vector<98x128xf32> -> vector<98x128xf32>
    %210 = arith.addf %204, %209 : vector<98x128xf32>
    %c21 = arith.constant 21 : index
    %c0_159 = arith.constant 0 : index
    %211 = vector.load %arg10[%c21, %c0_159] : memref<122x32xf32, #tpu.memory_space<vmem>>, vector<98x32xf32>
    %212 = arith.truncf %211 : vector<98x32xf32> to vector<98x32xbf16>
    %c12 = arith.constant 12 : index
    %c0_160 = arith.constant 0 : index
    %c0_161 = arith.constant 0 : index
    %213 = vector.load %arg6[%c12, %c0_160, %c0_161] : memref<16x32x128xbf16, #tpu.memory_space<vmem>>, vector<1x32x128xbf16>
    %214 = vector.shape_cast %213 : vector<1x32x128xbf16> to vector<32x128xbf16>
    %cst_162 = arith.constant dense<0.000000e+00> : vector<98x128xf32>
    %215 = tpu.matmul %212, %214, %cst_162 {dimension_numbers = #tpu.dot_dimension_numbers<[1], [0], [0], [1], [0, 0, 1, 1], [], []>} : vector<98x32xbf16>, vector<32x128xbf16>, vector<98x128xf32> -> vector<98x128xf32>
    %216 = arith.addf %210, %215 : vector<98x128xf32>
    %c22 = arith.constant 22 : index
    %c0_163 = arith.constant 0 : index
    %217 = vector.load %arg10[%c22, %c0_163] : memref<122x32xf32, #tpu.memory_space<vmem>>, vector<98x32xf32>
    %218 = arith.truncf %217 : vector<98x32xf32> to vector<98x32xbf16>
    %c13 = arith.constant 13 : index
    %c0_164 = arith.constant 0 : index
    %c0_165 = arith.constant 0 : index
    %219 = vector.load %arg6[%c13, %c0_164, %c0_165] : memref<16x32x128xbf16, #tpu.memory_space<vmem>>, vector<1x32x128xbf16>
    %220 = vector.shape_cast %219 : vector<1x32x128xbf16> to vector<32x128xbf16>
    %cst_166 = arith.constant dense<0.000000e+00> : vector<98x128xf32>
    %221 = tpu.matmul %218, %220, %cst_166 {dimension_numbers = #tpu.dot_dimension_numbers<[1], [0], [0], [1], [0, 0, 1, 1], [], []>} : vector<98x32xbf16>, vector<32x128xbf16>, vector<98x128xf32> -> vector<98x128xf32>
    %222 = arith.addf %216, %221 : vector<98x128xf32>
    %c23 = arith.constant 23 : index
    %c0_167 = arith.constant 0 : index
    %223 = vector.load %arg10[%c23, %c0_167] : memref<122x32xf32, #tpu.memory_space<vmem>>, vector<98x32xf32>
    %224 = arith.truncf %223 : vector<98x32xf32> to vector<98x32xbf16>
    %c14_168 = arith.constant 14 : index
    %c0_169 = arith.constant 0 : index
    %c0_170 = arith.constant 0 : index
    %225 = vector.load %arg6[%c14_168, %c0_169, %c0_170] : memref<16x32x128xbf16, #tpu.memory_space<vmem>>, vector<1x32x128xbf16>
    %226 = vector.shape_cast %225 : vector<1x32x128xbf16> to vector<32x128xbf16>
    %cst_171 = arith.constant dense<0.000000e+00> : vector<98x128xf32>
    %227 = tpu.matmul %224, %226, %cst_171 {dimension_numbers = #tpu.dot_dimension_numbers<[1], [0], [0], [1], [0, 0, 1, 1], [], []>} : vector<98x32xbf16>, vector<32x128xbf16>, vector<98x128xf32> -> vector<98x128xf32>
    %228 = arith.addf %222, %227 : vector<98x128xf32>
    %c24 = arith.constant 24 : index
    %c0_172 = arith.constant 0 : index
    %229 = vector.load %arg10[%c24, %c0_172] : memref<122x32xf32, #tpu.memory_space<vmem>>, vector<98x32xf32>
    %230 = arith.truncf %229 : vector<98x32xf32> to vector<98x32xbf16>
    %c15_173 = arith.constant 15 : index
    %c0_174 = arith.constant 0 : index
    %c0_175 = arith.constant 0 : index
    %231 = vector.load %arg6[%c15_173, %c0_174, %c0_175] : memref<16x32x128xbf16, #tpu.memory_space<vmem>>, vector<1x32x128xbf16>
    %232 = vector.shape_cast %231 : vector<1x32x128xbf16> to vector<32x128xbf16>
    %cst_176 = arith.constant dense<0.000000e+00> : vector<98x128xf32>
    %233 = tpu.matmul %230, %232, %cst_176 {dimension_numbers = #tpu.dot_dimension_numbers<[1], [0], [0], [1], [0, 0, 1, 1], [], []>} : vector<98x32xbf16>, vector<32x128xbf16>, vector<98x128xf32> -> vector<98x128xf32>
    %234 = arith.addf %228, %233 : vector<98x128xf32>
    %235 = tpu.iota {dimensions = array<i32: 1>} : vector<2x98xi32>
    %236 = tpu.iota {dimensions = array<i32: 0>} : vector<2x98xi32>
    %c49_i32 = arith.constant 49 : i32
    %237 = vector.broadcast %c49_i32 : i32 to vector<2x98xi32>
    %238 = arith.muli %236, %237 : vector<2x98xi32>
    %239 = arith.cmpi eq, %235, %238 : vector<2x98xi32>
    %240 = arith.extui %239 : vector<2x98xi1> to vector<2x98xi32>
    %241 = arith.sitofp %240 : vector<2x98xi32> to vector<2x98xf32>
    %cst_177 = arith.constant dense<0.000000e+00> : vector<2x128xf32>
    %242 = tpu.matmul %241, %234, %cst_177 {dimension_numbers = #tpu.dot_dimension_numbers<[1], [0], [0], [1], [0, 0, 1, 1], [], []>} : vector<2x98xf32>, vector<98x128xf32>, vector<2x128xf32> -> vector<2x128xf32>
    %c0_178 = arith.constant 0 : index
    %c0_179 = arith.constant 0 : index
    %243 = vector.load %arg7[%c0_178, %c0_179] : memref<1x128xf32, #tpu.memory_space<vmem>>, vector<1x128xf32>
    %244 = vector.broadcast %243 : vector<1x128xf32> to vector<2x128xf32>
    %245 = arith.addf %242, %244 : vector<2x128xf32>
    %c0_180 = arith.constant 0 : index
    %c0_181 = arith.constant 0 : index
    %246 = vector.load %arg8[%c0_180, %c0_181] : memref<2x128xf32, #tpu.memory_space<vmem>>, vector<2x128xf32>
    tpu.vector_store %arg8[%c0_180, %c0_181], %245 {strides = array<i32>} : memref<2x128xf32, #tpu.memory_space<vmem>>, vector<2x128xf32>,
    return
  }
  func.func @transform_0(%arg0: i32) -> (i32, i32, i32) {
    %c0_i32 = arith.constant 0 : i32
    %c0_i32_0 = arith.constant 0 : i32
    %c0_i32_1 = arith.constant 0 : i32
    return %arg0, %c0_i32, %c0_i32_0 : i32, i32, i32
  }
  func.func @transform_1(%arg0: i32) -> (i32, i32, i32) {
    %c0_i32 = arith.constant 0 : i32
    %c0_i32_0 = arith.constant 0 : i32
    %c0_i32_1 = arith.constant 0 : i32
    %c0_i32_2 = arith.constant 0 : i32
    return %c0_i32, %c0_i32_0, %c0_i32_1 : i32, i32, i32
  }
  func.func @transform_2(%arg0: i32) -> (i32, i32) {
    %c0_i32 = arith.constant 0 : i32
    %c0_i32_0 = arith.constant 0 : i32
    %c0_i32_1 = arith.constant 0 : i32
    return %c0_i32, %c0_i32_0 : i32, i32
  }
  func.func @transform_3(%arg0: i32) -> (i32, i32, i32) {
    %c0_i32 = arith.constant 0 : i32
    %c0_i32_0 = arith.constant 0 : i32
    %c0_i32_1 = arith.constant 0 : i32
    %c0_i32_2 = arith.constant 0 : i32
    return %c0_i32, %c0_i32_0, %c0_i32_1 : i32, i32, i32
  }
  func.func @transform_4(%arg0: i32) -> (i32, i32) {
    %c0_i32 = arith.constant 0 : i32
    %c0_i32_0 = arith.constant 0 : i32
    %c0_i32_1 = arith.constant 0 : i32
    return %c0_i32, %c0_i32_0 : i32, i32
  }
  func.func @transform_5(%arg0: i32) -> (i32, i32, i32) {
    %c0_i32 = arith.constant 0 : i32
    %c0_i32_0 = arith.constant 0 : i32
    %c0_i32_1 = arith.constant 0 : i32
    %c0_i32_2 = arith.constant 0 : i32
    return %c0_i32, %c0_i32_0, %c0_i32_1 : i32, i32, i32
  }
  func.func @transform_6(%arg0: i32) -> (i32, i32) {
    %c0_i32 = arith.constant 0 : i32
    %c0_i32_0 = arith.constant 0 : i32
    %c0_i32_1 = arith.constant 0 : i32
    return %c0_i32, %c0_i32_0 : i32, i32
  }
  func.func @transform_7(%arg0: i32) -> (i32, i32) {
    %c0_i32 = arith.constant 0 : i32
    %c0_i32_0 = arith.constant 0 : i32
    return %arg0, %c0_i32 : i32, i32
  }
}

</mosaic_0001>

<llo_original>
// kernel: _lambda_.1
$region0: #{_lambda_.1}
  #allocation0 [shape = 'u32[]', space=smem, size = 0x4, offset = 0x4, fixed_abs, tag = 'smem constant byte address 0x4 - core index']
  #allocation1 [shape = 'u32[144,128]{1,0:T(1,128)}', space=vmem, size = 0x12000, scoped, tag = 'internal scratch']
  #allocation2 [shape = 'f32[114,64]{1,0:T(8,128)}', space=vmem, size = 0xf000, scoped, tag = 'scratch operand']
  #allocation3 [shape = 'f32[122,32]{1,0:T(8,128)}', space=vmem, size = 0x10000, scoped, tag = 'scratch operand']
  %s0 = inlined_call_operand.vmem [shape: f32[1,106,16], index: 0, kind: input, shape index: {}]
  %s1 = inlined_call_operand.vmem [shape: bf16[4,16,256], index: 1, kind: input, shape index: {}]
  %s2 = inlined_call_operand.vmem [shape: f32[1,256], index: 2, kind: input, shape index: {}]
  %s3 = inlined_call_operand.vmem [shape: bf16[9,64,128], index: 3, kind: input, shape index: {}]
  %s4 = inlined_call_operand.vmem [shape: f32[1,128], index: 4, kind: input, shape index: {}]
  %s5 = inlined_call_operand.vmem [shape: bf16[16,32,128], index: 5, kind: input, shape index: {}]
  %s6 = inlined_call_operand.vmem [shape: f32[1,128], index: 6, kind: input, shape index: {}]
  %s7 = inlined_call_operand.hbm [shape: f32[2,128], index: 7, kind: output, shape index: {}]
  %s8 = sld [smem:[#allocation0]]
  $region38: #{_lambda_.1} parent=0
    _
  %s10 = ssub.s32 1, %s8
  %s11 = scalar_select 0, %s10, %s8
  $region1: #{_lambda_.1} parent=0
    #allocation4 [shape = 'u8[1024]{0}', space=vmem, size = 0x400, scoped, tag = 'output window, operand 0, single buffered']
    #allocation5 [shape = 's32[1]{0}', space=sflag, size = 0x4, scoped, tag = 'scoped memory for _lambda_.1']
    %12 = vsyncpa [#allocation5], 0
    // Predicated region
    $region2: #{_lambda_.1} parent=1 // pred_check
      _
    $region3: #{_lambda_.1} parent=1 // pred_check_branch
      %14 = sbr.rel (0) target = $region5
    $region4: #{_lambda_.1} parent=1 // pred_region
      _
    $region5: #{_lambda_.1} parent=1 // pred_fallthru
      _
    // Predicated region
    $region6: #{_lambda_.1} parent=1 // pred_check
      _
    $region7: #{_lambda_.1} parent=1 // pred_check_branch
      %16 = sbr.rel (0) target = $region9
    $region8: #{_lambda_.1} parent=1 // pred_region
      _
    $region9: #{_lambda_.1} parent=1 // pred_fallthru
      _
    // Predicated region
    $region10: #{_lambda_.1} parent=1 // pred_check
      _
    $region11: #{_lambda_.1} parent=1 // pred_check_branch
      %18 = sbr.rel (0) target = $region13
    $region12: #{_lambda_.1} parent=1 // pred_region
      _
    $region13: #{_lambda_.1} parent=1 // pred_fallthru
      _
    // Predicated region
    $region14: #{_lambda_.1} parent=1 // pred_check
      _
    $region15: #{_lambda_.1} parent=1 // pred_check_branch
      %20 = sbr.rel (0) target = $region17
    $region16: #{_lambda_.1} parent=1 // pred_region
      _
    $region17: #{_lambda_.1} parent=1 // pred_fallthru
      _
    // Predicated region
    $region18: #{_lambda_.1} parent=1 // pred_check
      _
    $region19: #{_lambda_.1} parent=1 // pred_check_branch
      %22 = sbr.rel (0) target = $region21
    $region20: #{_lambda_.1} parent=1 // pred_region
      _
    $region21: #{_lambda_.1} parent=1 // pred_fallthru
      _
    // Predicated region
    $region22: #{_lambda_.1} parent=1 // pred_check
      _
    $region23: #{_lambda_.1} parent=1 // pred_check_branch
      %24 = sbr.rel (0) target = $region25
    $region24: #{_lambda_.1} parent=1 // pred_region
      _
    $region25: #{_lambda_.1} parent=1 // pred_fallthru
      _
    // Predicated region
    $region26: #{_lambda_.1} parent=1 // pred_check
      _
    $region27: #{_lambda_.1} parent=1 // pred_check_branch
      %26 = sbr.rel (0) target = $region29
    $region28: #{_lambda_.1} parent=1 // pred_region
      _
    $region29: #{_lambda_.1} parent=1 // pred_fallthru
      _
    %v28 = vld [vmem:[%s0] sm:$0xff]
    %v29 = vld [vmem:[%s0 + $0x8] sm:$0xff]
    %v30 = vld [vmem:[%s0 + $0x10] sm:$0xff]
    %v31 = vld [vmem:[%s0 + $0x18] sm:$0xff]
    %v32 = vld [vmem:[%s0 + $0x20] sm:$0xff]
    %v33 = vld [vmem:[%s0 + $0x28] sm:$0xff]
    %v34 = vld [vmem:[%s0 + $0x30] sm:$0xff]
    %v35 = vld [vmem:[%s0 + $0x38] sm:$0xff]
    %v36 = vld [vmem:[%s0 + $0x40] sm:$0xff]
    %v37 = vld [vmem:[%s0 + $0x48] sm:$0xff]
    %v38 = vld [vmem:[%s0 + $0x50] sm:$0xff]
    %v39 = vld [vmem:[%s0 + $0x58] sm:$0xff]
    %v40 = vld [vmem:[%s0 + $0x60] sm:$0x3]
    %v41 = vpack.c.bf16 %v29, %v28
    %v42 = vpack.c.bf16 %v31, %v30
    %v43 = vpack.c.bf16 %v33, %v32
    %v44 = vpack.c.bf16 %v35, %v34
    %v45 = vpack.c.bf16 %v37, %v36
    %v46 = vpack.c.bf16 %v39, %v38
    %v47 = vpack.c.bf16 %v40, %v40
    %v48 = vld [vmem:[%s1] sm:$0xff]
    %v49 = vld [vmem:[%s1 + $0x8] sm:$0xff]
    %v50 = vld [vmem:[%s0 + $0x1] sm:$0xff]
    %v51 = vld [vmem:[%s0 + $0x9] sm:$0xff]
    %v52 = vld [vmem:[%s0 + $0x11] sm:$0xff]
    %v53 = vld [vmem:[%s0 + $0x19] sm:$0xff]
    %v54 = vld [vmem:[%s0 + $0x21] sm:$0xff]
    %v55 = vld [vmem:[%s0 + $0x29] sm:$0xff]
    %v56 = vld [vmem:[%s0 + $0x31] sm:$0xff]
    %v57 = vld [vmem:[%s0 + $0x39] sm:$0xff]
    %v58 = vld [vmem:[%s0 + $0x41] sm:$0xff]
    %v59 = vld [vmem:[%s0 + $0x49] sm:$0xff]
    %v60 = vld [vmem:[%s0 + $0x51] sm:$0xff]
    %v61 = vld [vmem:[%s0 + $0x59] sm:$0xff]
    %v62 = vld [vmem:[%s0 + $0x61] sm:$0x3]
    %v63 = vpack.c.bf16 %v51, %v50
    %v64 = vpack.c.bf16 %v53, %v52
    %v65 = vpack.c.bf16 %v55, %v54
    %v66 = vpack.c.bf16 %v57, %v56
    %v67 = vpack.c.bf16 %v59, %v58
    %v68 = vpack.c.bf16 %v61, %v60
    %v69 = vpack.c.bf16 %v62, %v62
    %s70 = scalar_lea.vmem %s1, 16
    %v71 = vld [vmem:[%s70] sm:$0xff]
    %v72 = vld [vmem:[%s70 + $0x8] sm:$0xff]
    %v75 = vunpack.c.l.b16 %v71
    %v76 = vunpack.c.h.b16 %v71
    %v77 = vunpack.c.l.b16 %v72
    %v78 = vunpack.c.h.b16 %v72
    %v79 = vpack.c.b16 %v77, %v75
    %v80 = vpack.c.b16 %v78, %v76
    %vm83 = vcmask 130048
    %v85 = vsel %vm83, %v63, 0
    %v88 = vsel %vm83, %v64, 0
    %v91 = vsel %vm83, %v65, 0
    %v94 = vsel %vm83, %v66, 0
    %v97 = vsel %vm83, %v67, 0
    %v100 = vsel %vm83, %v68, 0
    %v103 = vsel %vm83, %v69, 0
    %105 = vmatprep.subr.bf16.mxu0 0
    %106 = vmatpush1.bf16.msra.mxu0 0
    %107 = vmatprep.subr.bf16.mxu0 0
    %108 = vmatpush1.bf16.msra.mxu0 0
    %109 = vmatprep.subr.bf16.mxu0 0
    %110 = vmatpush1.bf16.msra.mxu0 0
    %111 = vmatprep.subr.bf16.mxu0 0
    %112 = vmatpush1.bf16.msra.mxu0 0
    %113 = vmatprep.subr.bf16.mxu0 0
    %114 = vmatpush1.bf16.msra.mxu0 0
    %115 = vmatprep.subr.bf16.mxu0 0
    %116 = vmatpush1.bf16.msra.mxu0 0
    %117 = vmatprep.subr.bf16.mxu0 0
    %118 = vmatpush1.bf16.msra.mxu0 0
    %119 = vmatprep.subr.bf16.mxu0 %v80
    %120 = vmatpush1.bf16.msra.mxu0 %v79
    %121 = vmatprep.subr.bf16.mxu0 0
    %122 = vmatpush2.bf16.msra.mxu0 0
    %123 = vmatprep.subr.bf16.mxu0 0
    %124 = vmatpush2.bf16.msra.mxu0 0
    %125 = vmatprep.subr.bf16.mxu0 0
    %126 = vmatpush2.bf16.msra.mxu0 0
    %127 = vmatprep.subr.bf16.mxu0 0
    %128 = vmatpush2.bf16.msra.mxu0 0
    %129 = vmatprep.subr.bf16.mxu0 0
    %130 = vmatpush2.bf16.msra.mxu0 0
    %131 = vmatprep.subr.bf16.mxu0 0
    %132 = vmatpush2.bf16.msra.mxu0 0
    %133 = vmatprep.subr.bf16.mxu0 0
    %134 = vmatpush2.bf16.msra.mxu0 0
    %135 = vmatprep.subr.bf16.mxu0 0
    %136 = vmatpush2.bf16.msra.mxu0 0
    %137 = vmatprep.mubr.bf16.mxu0 0
    %138 = vmatmul.mubr.bf16.gmra.mxu0 %v85
    %v139 = vpop.f32.mrf.mxu0
    %v140 = vadd.f32 0.0, %v139
    %v141 = vpop.f32.mrf.mxu0
    %v142 = vadd.f32 0.0, %v141
    %v143 = vpop.f32.mrf.mxu0
    %v144 = vadd.f32 0.0, %v143
    %v145 = vpop.f32.mrf.mxu0
    %v146 = vadd.f32 0.0, %v145
    %147 = vmatprep.mubr.bf16.mxu0 0
    %148 = vmatmul.mubr.bf16.gmra.mxu0 %v88
    %v149 = vpop.f32.mrf.mxu0
    %v150 = vadd.f32 0.0, %v149
    %v151 = vpop.f32.mrf.mxu0
    %v152 = vadd.f32 0.0, %v151
    %v153 = vpop.f32.mrf.mxu0
    %v154 = vadd.f32 0.0, %v153
    %v155 = vpop.f32.mrf.mxu0
    %v156 = vadd.f32 0.0, %v155
    %157 = vmatprep.mubr.bf16.mxu0 0
    %158 = vmatmul.mubr.bf16.gmra.mxu0 %v91
    %v159 = vpop.f32.mrf.mxu0
    %v160 = vadd.f32 0.0, %v159
    %v161 = vpop.f32.mrf.mxu0
    %v162 = vadd.f32 0.0, %v161
    %v163 = vpop.f32.mrf.mxu0
    %v164 = vadd.f32 0.0, %v163
    %v165 = vpop.f32.mrf.mxu0
    %v166 = vadd.f32 0.0, %v165
    %167 = vmatprep.mubr.bf16.mxu0 0
    %168 = vmatmul.mubr.bf16.gmra.mxu0 %v94
    %v169 = vpop.f32.mrf.mxu0
    %v170 = vadd.f32 0.0, %v169
    %v171 = vpop.f32.mrf.mxu0
    %v172 = vadd.f32 0.0, %v171
    %v173 = vpop.f32.mrf.mxu0
    %v174 = vadd.f32 0.0, %v173
    %v175 = vpop.f32.mrf.mxu0
    %v176 = vadd.f32 0.0, %v175
    %177 = vmatprep.mubr.bf16.mxu0 0
    %178 = vmatmul.mubr.bf16.gmra.mxu0 %v97
    %v179 = vpop.f32.mrf.mxu0
    %v180 = vadd.f32 0.0, %v179
    %v181 = vpop.f32.mrf.mxu0
    %v182 = vadd.f32 0.0, %v181
    %v183 = vpop.f32.mrf.mxu0
    %v184 = vadd.f32 0.0, %v183
    %v185 = vpop.f32.mrf.mxu0
    %v186 = vadd.f32 0.0, %v185
    %187 = vmatprep.mubr.bf16.mxu0 0
    %188 = vmatmul.mubr.bf16.gmra.mxu0 %v100
    %v189 = vpop.f32.mrf.mxu0
    %v190 = vadd.f32 0.0, %v189
    %v191 = vpop.f32.mrf.mxu0
    %v192 = vadd.f32 0.0, %v191
    %v193 = vpop.f32.mrf.mxu0
    %v194 = vadd.f32 0.0, %v193
    %v195 = vpop.f32.mrf.mxu0
    %v196 = vadd.f32 0.0, %v195
    %197 = vmatprep.mubr.bf16.mxu0 0
    %198 = vmatmul.mubr.bf16.gmra.mxu0 %v103
    %v199 = vpop.f32.mrf.mxu0
    %v200 = vadd.f32 0.0, %v199
    %v201 = vpop.f32.mrf.mxu0
    %v202 = vadd.f32 0.0, %v201
    %v203 = vpop.f32.mrf.mxu0
    %v204 = vpop.f32.mrf.mxu0
    %205 = vdwg.mxu0
    %v208 = vunpack.c.l.b16 %v48
    %v209 = vunpack.c.h.b16 %v48
    %v210 = vunpack.c.l.b16 %v49
    %v211 = vunpack.c.h.b16 %v49
    %v212 = vpack.c.b16 %v210, %v208
    %v213 = vpack.c.b16 %v211, %v209
    %v217 = vsel %vm83, %v41, 0
    %v220 = vsel %vm83, %v42, 0
    %v223 = vsel %vm83, %v43, 0
    %v226 = vsel %vm83, %v44, 0
    %v229 = vsel %vm83, %v45, 0
    %v232 = vsel %vm83, %v46, 0
    %v235 = vsel %vm83, %v47, 0
    %237 = vmatprep.subr.bf16.mxu0 0
    %238 = vmatpush1.bf16.msra.mxu0 0
    %239 = vmatprep.subr.bf16.mxu0 0
    %240 = vmatpush1.bf16.msra.mxu0 0
    %241 = vmatprep.subr.bf16.mxu0 0
    %242 = vmatpush1.bf16.msra.mxu0 0
    %243 = vmatprep.subr.bf16.mxu0 0
    %244 = vmatpush1.bf16.msra.mxu0 0
    %245 = vmatprep.subr.bf16.mxu0 0
    %246 = vmatpush1.bf16.msra.mxu0 0
    %247 = vmatprep.subr.bf16.mxu0 0
    %248 = vmatpush1.bf16.msra.mxu0 0
    %249 = vmatprep.subr.bf16.mxu0 0
    %250 = vmatpush1.bf16.msra.mxu0 0
    %251 = vmatprep.subr.bf16.mxu0 %v213
    %252 = vmatpush1.bf16.msra.mxu0 %v212
    %253 = vmatprep.subr.bf16.mxu0 0
    %254 = vmatpush2.bf16.msra.mxu0 0
    %255 = vmatprep.subr.bf16.mxu0 0
    %256 = vmatpush2.bf16.msra.mxu0 0
    %257 = vmatprep.subr.bf16.mxu0 0
    %258 = vmatpush2.bf16.msra.mxu0 0
    %259 = vmatprep.subr.bf16.mxu0 0
    %260 = vmatpush2.bf16.msra.mxu0 0
    %261 = vmatprep.subr.bf16.mxu0 0
    %262 = vmatpush2.bf16.msra.mxu0 0
    %263 = vmatprep.subr.bf16.mxu0 0
    %264 = vmatpush2.bf16.msra.mxu0 0
    %265 = vmatprep.subr.bf16.mxu0 0
    %266 = vmatpush2.bf16.msra.mxu0 0
    %267 = vmatprep.subr.bf16.mxu0 0
    %268 = vmatpush2.bf16.msra.mxu0 0
    %269 = vmatprep.mubr.bf16.mxu0 0
    %270 = vmatmul.mubr.bf16.gmra.mxu0 %v217
    %v271 = vpop.f32.mrf.mxu0
    %v272 = vadd.f32 %v140, %v271
    %v273 = vpop.f32.mrf.mxu0
    %v274 = vadd.f32 %v142, %v273
    %v275 = vpop.f32.mrf.mxu0
    %v276 = vadd.f32 %v144, %v275
    %v277 = vpop.f32.mrf.mxu0
    %v278 = vadd.f32 %v146, %v277
    %279 = vmatprep.mubr.bf16.mxu0 0
    %280 = vmatmul.mubr.bf16.gmra.mxu0 %v220
    %v281 = vpop.f32.mrf.mxu0
    %v282 = vadd.f32 %v150, %v281
    %v283 = vpop.f32.mrf.mxu0
    %v284 = vadd.f32 %v152, %v283
    %v285 = vpop.f32.mrf.mxu0
    %v286 = vadd.f32 %v154, %v285
    %v287 = vpop.f32.mrf.mxu0
    %v288 = vadd.f32 %v156, %v287
    %289 = vmatprep.mubr.bf16.mxu0 0
    %290 = vmatmul.mubr.bf16.gmra.mxu0 %v223
    %v291 = vpop.f32.mrf.mxu0
    %v292 = vadd.f32 %v160, %v291
    %v293 = vpop.f32.mrf.mxu0
    %v294 = vadd.f32 %v162, %v293
    %v295 = vpop.f32.mrf.mxu0
    %v296 = vadd.f32 %v164, %v295
    %v297 = vpop.f32.mrf.mxu0
    %v298 = vadd.f32 %v166, %v297
    %299 = vmatprep.mubr.bf16.mxu0 0
    %300 = vmatmul.mubr.bf16.gmra.mxu0 %v226
    %v301 = vpop.f32.mrf.mxu0
    %v302 = vadd.f32 %v170, %v301
    %v303 = vpop.f32.mrf.mxu0
    %v304 = vadd.f32 %v172, %v303
    %v305 = vpop.f32.mrf.mxu0
    %v306 = vadd.f32 %v174, %v305
    %v307 = vpop.f32.mrf.mxu0
    %v308 = vadd.f32 %v176, %v307
    %309 = vmatprep.mubr.bf16.mxu0 0
    %310 = vmatmul.mubr.bf16.gmra.mxu0 %v229
    %v311 = vpop.f32.mrf.mxu0
    %v312 = vadd.f32 %v180, %v311
    %v313 = vpop.f32.mrf.mxu0
    %v314 = vadd.f32 %v182, %v313
    %v315 = vpop.f32.mrf.mxu0
    %v316 = vadd.f32 %v184, %v315
    %v317 = vpop.f32.mrf.mxu0
    %v318 = vadd.f32 %v186, %v317
    %319 = vmatprep.mubr.bf16.mxu0 0
    %320 = vmatmul.mubr.bf16.gmra.mxu0 %v232
    %v321 = vpop.f32.mrf.mxu0
    %v322 = vadd.f32 %v190, %v321
    %v323 = vpop.f32.mrf.mxu0
    %v324 = vadd.f32 %v192, %v323
    %v325 = vpop.f32.mrf.mxu0
    %v326 = vadd.f32 %v194, %v325
    %v327 = vpop.f32.mrf.mxu0
    %v328 = vadd.f32 %v196, %v327
    %329 = vmatprep.mubr.bf16.mxu0 0
    %330 = vmatmul.mubr.bf16.gmra.mxu0 %v235
    %v331 = vpop.f32.mrf.mxu0
    %v332 = vadd.f32 %v200, %v331
    %v333 = vpop.f32.mrf.mxu0
    %v334 = vadd.f32 %v202, %v333
    %v335 = vpop.f32.mrf.mxu0
    %v336 = vpop.f32.mrf.mxu0
    %337 = vdwg.mxu0
    %v338 = vld [vmem:[%s0 + $0x7] sm:$0xff]
    %v339 = vld [vmem:[%s0 + $0xf] sm:$0xff]
    %v340 = vld [vmem:[%s0 + $0x17] sm:$0xff]
    %v341 = vld [vmem:[%s0 + $0x1f] sm:$0xff]
    %v342 = vld [vmem:[%s0 + $0x27] sm:$0xff]
    %v343 = vld [vmem:[%s0 + $0x2f] sm:$0xff]
    %v344 = vld [vmem:[%s0 + $0x37] sm:$0xff]
    %v345 = vld [vmem:[%s0 + $0x3f] sm:$0xff]
    %v346 = vld [vmem:[%s0 + $0x47] sm:$0xff]
    %v347 = vld [vmem:[%s0 + $0x4f] sm:$0xff]
    %v348 = vld [vmem:[%s0 + $0x57] sm:$0xff]
    %v349 = vld [vmem:[%s0 + $0x5f] sm:$0xff]
    %v350 = vld [vmem:[%s0 + $0x67] sm:$0x3]
    %v351 = vpack.c.bf16 %v339, %v338
    %v352 = vpack.c.bf16 %v341, %v340
    %v353 = vpack.c.bf16 %v343, %v342
    %v354 = vpack.c.bf16 %v345, %v344
    %v355 = vpack.c.bf16 %v347, %v346
    %v356 = vpack.c.bf16 %v349, %v348
    %v357 = vpack.c.bf16 %v350, %v350
    %s358 = scalar_lea.vmem %s1, 32
    %v359 = vld [vmem:[%s358] sm:$0xff]
    %v360 = vld [vmem:[%s358 + $0x8] sm:$0xff]
    %v363 = vunpack.c.l.b16 %v359
    %v364 = vunpack.c.h.b16 %v359
    %v365 = vunpack.c.l.b16 %v360
    %v366 = vunpack.c.h.b16 %v360
    %v367 = vpack.c.b16 %v365, %v363
    %v368 = vpack.c.b16 %v366, %v364
    %v372 = vsel %vm83, %v351, 0
    %v375 = vsel %vm83, %v352, 0
    %v378 = vsel %vm83, %v353, 0
    %v381 = vsel %vm83, %v354, 0
    %v384 = vsel %vm83, %v355, 0
    %v387 = vsel %vm83, %v356, 0
    %v390 = vsel %vm83, %v357, 0
    %392 = vmatprep.subr.bf16.mxu0 0
    %393 = vmatpush1.bf16.msra.mxu0 0
    %394 = vmatprep.subr.bf16.mxu0 0
    %395 = vmatpush1.bf16.msra.mxu0 0
    %396 = vmatprep.subr.bf16.mxu0 0
    %397 = vmatpush1.bf16.msra.mxu0 0
    %398 = vmatprep.subr.bf16.mxu0 0
    %399 = vmatpush1.bf16.msra.mxu0 0
    %400 = vmatprep.subr.bf16.mxu0 0
    %401 = vmatpush1.bf16.msra.mxu0 0
    %402 = vmatprep.subr.bf16.mxu0 0
    %403 = vmatpush1.bf16.msra.mxu0 0
    %404 = vmatprep.subr.bf16.mxu0 0
    %405 = vmatpush1.bf16.msra.mxu0 0
    %406 = vmatprep.subr.bf16.mxu0 %v368
    %407 = vmatpush1.bf16.msra.mxu0 %v367
    %408 = vmatprep.subr.bf16.mxu0 0
    %409 = vmatpush2.bf16.msra.mxu0 0
    %410 = vmatprep.subr.bf16.mxu0 0
    %411 = vmatpush2.bf16.msra.mxu0 0
    %412 = vmatprep.subr.bf16.mxu0 0
    %413 = vmatpush2.bf16.msra.mxu0 0
    %414 = vmatprep.subr.bf16.mxu0 0
    %415 = vmatpush2.bf16.msra.mxu0 0
    %416 = vmatprep.subr.bf16.mxu0 0
    %417 = vmatpush2.bf16.msra.mxu0 0
    %418 = vmatprep.subr.bf16.mxu0 0
    %419 = vmatpush2.bf16.msra.mxu0 0
    %420 = vmatprep.subr.bf16.mxu0 0
    %421 = vmatpush2.bf16.msra.mxu0 0
    %422 = vmatprep.subr.bf16.mxu0 0
    %423 = vmatpush2.bf16.msra.mxu0 0
    %424 = vmatprep.mubr.bf16.mxu0 0
    %425 = vmatmul.mubr.bf16.gmra.mxu0 %v372
    %v426 = vpop.f32.mrf.mxu0
    %v427 = vadd.f32 0.0, %v426
    %v428 = vpop.f32.mrf.mxu0
    %v429 = vadd.f32 0.0, %v428
    %v430 = vpop.f32.mrf.mxu0
    %v431 = vadd.f32 0.0, %v430
    %v432 = vpop.f32.mrf.mxu0
    %v433 = vadd.f32 0.0, %v432
    %434 = vmatprep.mubr.bf16.mxu0 0
    %435 = vmatmul.mubr.bf16.gmra.mxu0 %v375
    %v436 = vpop.f32.mrf.mxu0
    %v437 = vadd.f32 0.0, %v436
    %v438 = vpop.f32.mrf.mxu0
    %v439 = vadd.f32 0.0, %v438
    %v440 = vpop.f32.mrf.mxu0
    %v441 = vadd.f32 0.0, %v440
    %v442 = vpop.f32.mrf.mxu0
    %v443 = vadd.f32 0.0, %v442
    %444 = vmatprep.mubr.bf16.mxu0 0
    %445 = vmatmul.mubr.bf16.gmra.mxu0 %v378
    %v446 = vpop.f32.mrf.mxu0
    %v447 = vadd.f32 0.0, %v446
    %v448 = vpop.f32.mrf.mxu0
    %v449 = vadd.f32 0.0, %v448
    %v450 = vpop.f32.mrf.mxu0
    %v451 = vadd.f32 0.0, %v450
    %v452 = vpop.f32.mrf.mxu0
    %v453 = vadd.f32 0.0, %v452
    %454 = vmatprep.mubr.bf16.mxu0 0
    %455 = vmatmul.mubr.bf16.gmra.mxu0 %v381
    %v456 = vpop.f32.mrf.mxu0
    %v457 = vadd.f32 0.0, %v456
    %v458 = vpop.f32.mrf.mxu0
    %v459 = vadd.f32 0.0, %v458
    %v460 = vpop.f32.mrf.mxu0
    %v461 = vadd.f32 0.0, %v460
    %v462 = vpop.f32.mrf.mxu0
    %v463 = vadd.f32 0.0, %v462
    %464 = vmatprep.mubr.bf16.mxu0 0
    %465 = vmatmul.mubr.bf16.gmra.mxu0 %v384
    %v466 = vpop.f32.mrf.mxu0
    %v467 = vadd.f32 0.0, %v466
    %v468 = vpop.f32.mrf.mxu0
    %v469 = vadd.f32 0.0, %v468
    %v470 = vpop.f32.mrf.mxu0
    %v471 = vadd.f32 0.0, %v470
    %v472 = vpop.f32.mrf.mxu0
    %v473 = vadd.f32 0.0, %v472
    %474 = vmatprep.mubr.bf16.mxu0 0
    %475 = vmatmul.mubr.bf16.gmra.mxu0 %v387
    %v476 = vpop.f32.mrf.mxu0
    %v477 = vadd.f32 0.0, %v476
    %v478 = vpop.f32.mrf.mxu0
    %v479 = vadd.f32 0.0, %v478
    %v480 = vpop.f32.mrf.mxu0
    %v481 = vadd.f32 0.0, %v480
    %v482 = vpop.f32.mrf.mxu0
    %v483 = vadd.f32 0.0, %v482
    %484 = vmatprep.mubr.bf16.mxu0 0
    %485 = vmatmul.mubr.bf16.gmra.mxu0 %v390
    %v486 = vpop.f32.mrf.mxu0
    %v487 = vadd.f32 0.0, %v486
    %v488 = vpop.f32.mrf.mxu0
    %v489 = vadd.f32 0.0, %v488
    %v490 = vpop.f32.mrf.mxu0
    %v491 = vpop.f32.mrf.mxu0
    %492 = vdwg.mxu0
    %v493 = vadd.f32 %v272, %v427
    %v494 = vadd.f32 %v274, %v429
    %v495 = vadd.f32 %v276, %v431
    %v496 = vadd.f32 %v278, %v433
    %v497 = vadd.f32 %v282, %v437
    %v498 = vadd.f32 %v284, %v439
    %v499 = vadd.f32 %v286, %v441
    %v500 = vadd.f32 %v288, %v443
    %v501 = vadd.f32 %v292, %v447
    %v502 = vadd.f32 %v294, %v449
    %v503 = vadd.f32 %v296, %v451
    %v504 = vadd.f32 %v298, %v453
    %v505 = vadd.f32 %v302, %v457
    %v506 = vadd.f32 %v304, %v459
    %v507 = vadd.f32 %v306, %v461
    %v508 = vadd.f32 %v308, %v463
    %v509 = vadd.f32 %v312, %v467
    %v510 = vadd.f32 %v314, %v469
    %v511 = vadd.f32 %v316, %v471
    %v512 = vadd.f32 %v318, %v473
    %v513 = vadd.f32 %v322, %v477
    %v514 = vadd.f32 %v324, %v479
    %v515 = vadd.f32 %v326, %v481
    %v516 = vadd.f32 %v328, %v483
    %v517 = vadd.f32 %v332, %v487
    %v518 = vadd.f32 %v334, %v489
    %v519 = vld [vmem:[%s0 + $0x8] sm:$0xff]
    %v520 = vld [vmem:[%s0 + $0x10] sm:$0xff]
    %v521 = vld [vmem:[%s0 + $0x18] sm:$0xff]
    %v522 = vld [vmem:[%s0 + $0x20] sm:$0xff]
    %v523 = vld [vmem:[%s0 + $0x28] sm:$0xff]
    %v524 = vld [vmem:[%s0 + $0x30] sm:$0xff]
    %v525 = vld [vmem:[%s0 + $0x38] sm:$0xff]
    %v526 = vld [vmem:[%s0 + $0x40] sm:$0xff]
    %v527 = vld [vmem:[%s0 + $0x48] sm:$0xff]
    %v528 = vld [vmem:[%s0 + $0x50] sm:$0xff]
    %v529 = vld [vmem:[%s0 + $0x58] sm:$0xff]
    %v530 = vld [vmem:[%s0 + $0x60] sm:$0xff]
    %v531 = vld [vmem:[%s0 + $0x68] sm:$0x3]
    %v532 = vpack.c.bf16 %v520, %v519
    %v533 = vpack.c.bf16 %v522, %v521
    %v534 = vpack.c.bf16 %v524, %v523
    %v535 = vpack.c.bf16 %v526, %v525
    %v536 = vpack.c.bf16 %v528, %v527
    %v537 = vpack.c.bf16 %v530, %v529
    %v538 = vpack.c.bf16 %v531, %v531
    %s539 = scalar_lea.vmem %s1, 48
    %v540 = vld [vmem:[%s539] sm:$0xff]
    %v541 = vld [vmem:[%s539 + $0x8] sm:$0xff]
    %v544 = vunpack.c.l.b16 %v540
    %v545 = vunpack.c.h.b16 %v540
    %v546 = vunpack.c.l.b16 %v541
    %v547 = vunpack.c.h.b16 %v541
    %v548 = vpack.c.b16 %v546, %v544
    %v549 = vpack.c.b16 %v547, %v545
    %v553 = vsel %vm83, %v532, 0
    %v556 = vsel %vm83, %v533, 0
    %v559 = vsel %vm83, %v534, 0
    %v562 = vsel %vm83, %v535, 0
    %v565 = vsel %vm83, %v536, 0
    %v568 = vsel %vm83, %v537, 0
    %v571 = vsel %vm83, %v538, 0
    %573 = vmatprep.subr.bf16.mxu0 0
    %574 = vmatpush1.bf16.msra.mxu0 0
    %575 = vmatprep.subr.bf16.mxu0 0
    %576 = vmatpush1.bf16.msra.mxu0 0
    %577 = vmatprep.subr.bf16.mxu0 0
    %578 = vmatpush1.bf16.msra.mxu0 0
    %579 = vmatprep.subr.bf16.mxu0 0
    %580 = vmatpush1.bf16.msra.mxu0 0
    %581 = vmatprep.subr.bf16.mxu0 0
    %582 = vmatpush1.bf16.msra.mxu0 0
    %583 = vmatprep.subr.bf16.mxu0 0
    %584 = vmatpush1.bf16.msra.mxu0 0
    %585 = vmatprep.subr.bf16.mxu0 0
    %586 = vmatpush1.bf16.msra.mxu0 0
    %587 = vmatprep.subr.bf16.mxu0 %v549
    %588 = vmatpush1.bf16.msra.mxu0 %v548
    %589 = vmatprep.subr.bf16.mxu0 0
    %590 = vmatpush2.bf16.msra.mxu0 0
    %591 = vmatprep.subr.bf16.mxu0 0
    %592 = vmatpush2.bf16.msra.mxu0 0
    %593 = vmatprep.subr.bf16.mxu0 0
    %594 = vmatpush2.bf16.msra.mxu0 0
    %595 = vmatprep.subr.bf16.mxu0 0
    %596 = vmatpush2.bf16.msra.mxu0 0
    %597 = vmatprep.subr.bf16.mxu0 0
    %598 = vmatpush2.bf16.msra.mxu0 0
    %599 = vmatprep.subr.bf16.mxu0 0
    %600 = vmatpush2.bf16.msra.mxu0 0
    %601 = vmatprep.subr.bf16.mxu0 0
    %602 = vmatpush2.bf16.msra.mxu0 0
    %603 = vmatprep.subr.bf16.mxu0 0
    %604 = vmatpush2.bf16.msra.mxu0 0
    %605 = vmatprep.mubr.bf16.mxu0 0
    %606 = vmatmul.mubr.bf16.gmra.mxu0 %v553
    %v607 = vpop.f32.mrf.mxu0
    %v608 = vadd.f32 0.0, %v607
    %v609 = vpop.f32.mrf.mxu0
    %v610 = vadd.f32 0.0, %v609
    %v611 = vpop.f32.mrf.mxu0
    %v612 = vadd.f32 0.0, %v611
    %v613 = vpop.f32.mrf.mxu0
    %v614 = vadd.f32 0.0, %v613
    %615 = vmatprep.mubr.bf16.mxu0 0
    %616 = vmatmul.mubr.bf16.gmra.mxu0 %v556
    %v617 = vpop.f32.mrf.mxu0
    %v618 = vadd.f32 0.0, %v617
    %v619 = vpop.f32.mrf.mxu0
    %v620 = vadd.f32 0.0, %v619
    %v621 = vpop.f32.mrf.mxu0
    %v622 = vadd.f32 0.0, %v621
    %v623 = vpop.f32.mrf.mxu0
    %v624 = vadd.f32 0.0, %v623
    %625 = vmatprep.mubr.bf16.mxu0 0
    %626 = vmatmul.mubr.bf16.gmra.mxu0 %v559
    %v627 = vpop.f32.mrf.mxu0
    %v628 = vadd.f32 0.0, %v627
    %v629 = vpop.f32.mrf.mxu0
    %v630 = vadd.f32 0.0, %v629
    %v631 = vpop.f32.mrf.mxu0
    %v632 = vadd.f32 0.0, %v631
    %v633 = vpop.f32.mrf.mxu0
    %v634 = vadd.f32 0.0, %v633
    %635 = vmatprep.mubr.bf16.mxu0 0
    %636 = vmatmul.mubr.bf16.gmra.mxu0 %v562
    %v637 = vpop.f32.mrf.mxu0
    %v638 = vadd.f32 0.0, %v637
    %v639 = vpop.f32.mrf.mxu0
    %v640 = vadd.f32 0.0, %v639
    %v641 = vpop.f32.mrf.mxu0
    %v642 = vadd.f32 0.0, %v641
    %v643 = vpop.f32.mrf.mxu0
    %v644 = vadd.f32 0.0, %v643
    %645 = vmatprep.mubr.bf16.mxu0 0
    %646 = vmatmul.mubr.bf16.gmra.mxu0 %v565
    %v647 = vpop.f32.mrf.mxu0
    %v648 = vadd.f32 0.0, %v647
    %v649 = vpop.f32.mrf.mxu0
    %v650 = vadd.f32 0.0, %v649
    %v651 = vpop.f32.mrf.mxu0
    %v652 = vadd.f32 0.0, %v651
    %v653 = vpop.f32.mrf.mxu0
    %v654 = vadd.f32 0.0, %v653
    %655 = vmatprep.mubr.bf16.mxu0 0
    %656 = vmatmul.mubr.bf16.gmra.mxu0 %v568
    %v657 = vpop.f32.mrf.mxu0
    %v658 = vadd.f32 0.0, %v657
    %v659 = vpop.f32.mrf.mxu0
    %v660 = vadd.f32 0.0, %v659
    %v661 = vpop.f32.mrf.mxu0
    %v662 = vadd.f32 0.0, %v661
    %v663 = vpop.f32.mrf.mxu0
    %v664 = vadd.f32 0.0, %v663
    %665 = vmatprep.mubr.bf16.mxu0 0
    %666 = vmatmul.mubr.bf16.gmra.mxu0 %v571
    %v667 = vpop.f32.mrf.mxu0
    %v668 = vadd.f32 0.0, %v667
    %v669 = vpop.f32.mrf.mxu0
    %v670 = vadd.f32 0.0, %v669
    %v671 = vpop.f32.mrf.mxu0
    %v672 = vpop.f32.mrf.mxu0
    %673 = vdwg.mxu0
    %v674 = vadd.f32 %v493, %v608
    %v675 = vadd.f32 %v494, %v610
    %v676 = vadd.f32 %v495, %v612
    %v677 = vadd.f32 %v496, %v614
    %v678 = vadd.f32 %v497, %v618
    %v679 = vadd.f32 %v498, %v620
    %v680 = vadd.f32 %v499, %v622
    %v681 = vadd.f32 %v500, %v624
    %v682 = vadd.f32 %v501, %v628
    %v683 = vadd.f32 %v502, %v630
    %v684 = vadd.f32 %v503, %v632
    %v685 = vadd.f32 %v504, %v634
    %v686 = vadd.f32 %v505, %v638
    %v687 = vadd.f32 %v506, %v640
    %v688 = vadd.f32 %v507, %v642
    %v689 = vadd.f32 %v508, %v644
    %v690 = vadd.f32 %v509, %v648
    %v691 = vadd.f32 %v510, %v650
    %v692 = vadd.f32 %v511, %v652
    %v693 = vadd.f32 %v512, %v654
    %v694 = vadd.f32 %v513, %v658
    %v695 = vadd.f32 %v514, %v660
    %v696 = vadd.f32 %v515, %v662
    %v697 = vadd.f32 %v516, %v664
    %v698 = vadd.f32 %v517, %v668
    %v699 = vadd.f32 %v518, %v670
    %v700 = vld [vmem:[%s2] sm:$0x3]
    %v702 = vlaneseq
    %v703 = vshrl.u32 %v702, 7
    %v704 = vsub.s32 0, %v703
    %v705 = vrot.slane %v700, %v704
    %v706 = vlaneseq
    %v707 = vshrl.u32 %v706, 7
    %v708 = vsub.s32 1, %v707
    %v709 = vrot.slane %v700, %v708
    %v712 = vadd.f32 %v674, %v705
    %v713 = vadd.f32 %v675, %v709
    %v714 = vadd.f32 %v676, %v705
    %v715 = vadd.f32 %v677, %v709
    %v716 = vadd.f32 %v678, %v705
    %v717 = vadd.f32 %v679, %v709
    %v718 = vadd.f32 %v680, %v705
    %v719 = vadd.f32 %v681, %v709
    %v720 = vadd.f32 %v682, %v705
    %v721 = vadd.f32 %v683, %v709
    %v722 = vadd.f32 %v684, %v705
    %v723 = vadd.f32 %v685, %v709
    %v724 = vadd.f32 %v686, %v705
    %v725 = vadd.f32 %v687, %v709
    %v726 = vadd.f32 %v688, %v705
    %v727 = vadd.f32 %v689, %v709
    %v728 = vadd.f32 %v690, %v705
    %v729 = vadd.f32 %v691, %v709
    %v730 = vadd.f32 %v692, %v705
    %v731 = vadd.f32 %v693, %v709
    %v732 = vadd.f32 %v694, %v705
    %v733 = vadd.f32 %v695, %v709
    %v734 = vadd.f32 %v696, %v705
    %v735 = vadd.f32 %v697, %v709
    %v736 = vadd.f32 %v698, %v705
    %v737 = vadd.f32 %v699, %v709
    %751 = vrot.lane.b32.xlu0 %v712, 112
    %v752 = vpop.permute.xlu0 %751
    %753 = vrot.lane.b32.xlu0 %v714, 112
    %v754 = vpop.permute.xlu0 %753
    %755 = vrot.lane.b32.xlu0 %v716, 112
    %v756 = vpop.permute.xlu0 %755
    %757 = vrot.lane.b32.xlu0 %v718, 112
    %v758 = vpop.permute.xlu0 %757
    %759 = vrot.lane.b32.xlu0 %v720, 112
    %v760 = vpop.permute.xlu0 %759
    %761 = vrot.lane.b32.xlu0 %v722, 112
    %v762 = vpop.permute.xlu0 %761
    %763 = vrot.lane.b32.xlu0 %v724, 112
    %v764 = vpop.permute.xlu0 %763
    %765 = vrot.lane.b32.xlu0 %v726, 112
    %v766 = vpop.permute.xlu0 %765
    %767 = vrot.lane.b32.xlu0 %v728, 112
    %v768 = vpop.permute.xlu0 %767
    %769 = vrot.lane.b32.xlu0 %v730, 112
    %v770 = vpop.permute.xlu0 %769
    %771 = vrot.lane.b32.xlu0 %v732, 112
    %v772 = vpop.permute.xlu0 %771
    %773 = vrot.lane.b32.xlu0 %v734, 112
    %v774 = vpop.permute.xlu0 %773
    %775 = vrot.lane.b32.xlu0 %v736, 112
    %v776 = vpop.permute.xlu0 %775
    %v790 = vmax.f32 %v712, %v752
    %v791 = vmax.f32 %v714, %v754
    %v792 = vmax.f32 %v716, %v756
    %v793 = vmax.f32 %v718, %v758
    %v794 = vmax.f32 %v720, %v760
    %v795 = vmax.f32 %v722, %v762
    %v796 = vmax.f32 %v724, %v764
    %v797 = vmax.f32 %v726, %v766
    %v798 = vmax.f32 %v728, %v768
    %v799 = vmax.f32 %v730, %v770
    %v800 = vmax.f32 %v732, %v772
    %v801 = vmax.f32 %v734, %v774
    %v802 = vmax.f32 %v736, %v776
    %803 = vrot.lane.b32.xlu0 %v712, 64
    %v804 = vpop.permute.xlu0 %803
    %805 = vrot.lane.b32.xlu0 %v714, 64
    %v806 = vpop.permute.xlu0 %805
    %807 = vrot.lane.b32.xlu0 %v716, 64
    %v808 = vpop.permute.xlu0 %807
    %809 = vrot.lane.b32.xlu0 %v718, 64
    %v810 = vpop.permute.xlu0 %809
    %811 = vrot.lane.b32.xlu0 %v720, 64
    %v812 = vpop.permute.xlu0 %811
    %813 = vrot.lane.b32.xlu0 %v722, 64
    %v814 = vpop.permute.xlu0 %813
    %815 = vrot.lane.b32.xlu0 %v724, 64
    %v816 = vpop.permute.xlu0 %815
    %817 = vrot.lane.b32.xlu0 %v726, 64
    %v818 = vpop.permute.xlu0 %817
    %819 = vrot.lane.b32.xlu0 %v728, 64
    %v820 = vpop.permute.xlu0 %819
    %821 = vrot.lane.b32.xlu0 %v730, 64
    %v822 = vpop.permute.xlu0 %821
    %823 = vrot.lane.b32.xlu0 %v732, 64
    %v824 = vpop.permute.xlu0 %823
    %825 = vrot.lane.b32.xlu0 %v734, 64
    %v826 = vpop.permute.xlu0 %825
    %827 = vrot.lane.b32.xlu0 %v736, 64
    %v828 = vpop.permute.xlu0 %827
    %v842 = vmax.f32 %v790, %v804
    %v843 = vmax.f32 %v791, %v806
    %v844 = vmax.f32 %v792, %v808
    %v845 = vmax.f32 %v793, %v810
    %v846 = vmax.f32 %v794, %v812
    %v847 = vmax.f32 %v795, %v814
    %v848 = vmax.f32 %v796, %v816
    %v849 = vmax.f32 %v797, %v818
    %v850 = vmax.f32 %v798, %v820
    %v851 = vmax.f32 %v799, %v822
    %v852 = vmax.f32 %v800, %v824
    %v853 = vmax.f32 %v801, %v826
    %v854 = vmax.f32 %v802, %v828
    %855 = vrot.lane.b32.xlu0 %v712, 48
    %v856 = vpop.permute.xlu0 %855
    %857 = vrot.lane.b32.xlu0 %v714, 48
    %v858 = vpop.permute.xlu0 %857
    %859 = vrot.lane.b32.xlu0 %v716, 48
    %v860 = vpop.permute.xlu0 %859
    %861 = vrot.lane.b32.xlu0 %v718, 48
    %v862 = vpop.permute.xlu0 %861
    %863 = vrot.lane.b32.xlu0 %v720, 48
    %v864 = vpop.permute.xlu0 %863
    %865 = vrot.lane.b32.xlu0 %v722, 48
    %v866 = vpop.permute.xlu0 %865
    %867 = vrot.lane.b32.xlu0 %v724, 48
    %v868 = vpop.permute.xlu0 %867
    %869 = vrot.lane.b32.xlu0 %v726, 48
    %v870 = vpop.permute.xlu0 %869
    %871 = vrot.lane.b32.xlu0 %v728, 48
    %v872 = vpop.permute.xlu0 %871
    %873 = vrot.lane.b32.xlu0 %v730, 48
    %v874 = vpop.permute.xlu0 %873
    %875 = vrot.lane.b32.xlu0 %v732, 48
    %v876 = vpop.permute.xlu0 %875
    %877 = vrot.lane.b32.xlu0 %v734, 48
    %v878 = vpop.permute.xlu0 %877
    %879 = vrot.lane.b32.xlu0 %v736, 48
    %v880 = vpop.permute.xlu0 %879
    %v894 = vmax.f32 %v842, %v856
    %v895 = vmax.f32 %v843, %v858
    %v896 = vmax.f32 %v844, %v860
    %v897 = vmax.f32 %v845, %v862
    %v898 = vmax.f32 %v846, %v864
    %v899 = vmax.f32 %v847, %v866
    %v900 = vmax.f32 %v848, %v868
    %v901 = vmax.f32 %v849, %v870
    %v902 = vmax.f32 %v850, %v872
    %v903 = vmax.f32 %v851, %v874
    %v904 = vmax.f32 %v852, %v876
    %v905 = vmax.f32 %v853, %v878
    %v906 = vmax.f32 %v854, %v880
    %v907 = vmax.f32 %v894, 0.0
    %v908 = vmax.f32 %v895, 0.0
    %v909 = vmax.f32 %v896, 0.0
    %v910 = vmax.f32 %v897, 0.0
    %v911 = vmax.f32 %v898, 0.0
    %v912 = vmax.f32 %v899, 0.0
    %v913 = vmax.f32 %v900, 0.0
    %v914 = vmax.f32 %v901, 0.0
    %v915 = vmax.f32 %v902, 0.0
    %v916 = vmax.f32 %v903, 0.0
    %v917 = vmax.f32 %v904, 0.0
    %v918 = vmax.f32 %v905, 0.0
    %v919 = vmax.f32 %v906, 0.0
    %920 = vst.msk [vmem:[#allocation2] sm:$0xff] %vm83, %v907
    %921 = vst.msk [vmem:[#allocation2 + $0x8] sm:$0xff] %vm83, %v908
    %922 = vst.msk [vmem:[#allocation2 + $0x10] sm:$0xff] %vm83, %v909
    %923 = vst.msk [vmem:[#allocation2 + $0x18] sm:$0xff] %vm83, %v910
    %924 = vst.msk [vmem:[#allocation2 + $0x20] sm:$0xff] %vm83, %v911
    %925 = vst.msk [vmem:[#allocation2 + $0x28] sm:$0xff] %vm83, %v912
    %926 = vst.msk [vmem:[#allocation2 + $0x30] sm:$0xff] %vm83, %v913
    %927 = vst.msk [vmem:[#allocation2 + $0x38] sm:$0xff] %vm83, %v914
    %928 = vst.msk [vmem:[#allocation2 + $0x40] sm:$0xff] %vm83, %v915
    %929 = vst.msk [vmem:[#allocation2 + $0x48] sm:$0xff] %vm83, %v916
    %930 = vst.msk [vmem:[#allocation2 + $0x50] sm:$0xff] %vm83, %v917
    %931 = vst.msk [vmem:[#allocation2 + $0x58] sm:$0xff] %vm83, %v918
    %vm932 = vcmask 123904
    %933 = vst.msk [vmem:[#allocation2 + $0x60] sm:$0x3] %vm932, %v919
    %947 = vrot.lane.b32.xlu0 %v907, 112
    %v948 = vpop.permute.xlu0 %947
    %949 = vrot.lane.b32.xlu0 %v908, 112
    %v950 = vpop.permute.xlu0 %949
    %951 = vrot.lane.b32.xlu0 %v909, 112
    %v952 = vpop.permute.xlu0 %951
    %953 = vrot.lane.b32.xlu0 %v910, 112
    %v954 = vpop.permute.xlu0 %953
    %955 = vrot.lane.b32.xlu0 %v911, 112
    %v956 = vpop.permute.xlu0 %955
    %957 = vrot.lane.b32.xlu0 %v912, 112
    %v958 = vpop.permute.xlu0 %957
    %959 = vrot.lane.b32.xlu0 %v913, 112
    %v960 = vpop.permute.xlu0 %959
    %961 = vrot.lane.b32.xlu0 %v914, 112
    %v962 = vpop.permute.xlu0 %961
    %963 = vrot.lane.b32.xlu0 %v915, 112
    %v964 = vpop.permute.xlu0 %963
    %965 = vrot.lane.b32.xlu0 %v916, 112
    %v966 = vpop.permute.xlu0 %965
    %967 = vrot.lane.b32.xlu0 %v917, 112
    %v968 = vpop.permute.xlu0 %967
    %969 = vrot.lane.b32.xlu0 %v918, 112
    %v970 = vpop.permute.xlu0 %969
    %971 = vrot.lane.b32.xlu0 %v919, 112
    %v972 = vpop.permute.xlu0 %971
    %vm986 = vcmask 261248
    %987 = vst.msk [vmem:[#allocation2] sm:$0xff] %vm986, %v948
    %988 = vst.msk [vmem:[#allocation2 + $0x8] sm:$0xff] %vm986, %v950
    %989 = vst.msk [vmem:[#allocation2 + $0x10] sm:$0xff] %vm986, %v952
    %990 = vst.msk [vmem:[#allocation2 + $0x18] sm:$0xff] %vm986, %v954
    %991 = vst.msk [vmem:[#allocation2 + $0x20] sm:$0xff] %vm986, %v956
    %992 = vst.msk [vmem:[#allocation2 + $0x28] sm:$0xff] %vm986, %v958
    %993 = vst.msk [vmem:[#allocation2 + $0x30] sm:$0xff] %vm986, %v960
    %994 = vst.msk [vmem:[#allocation2 + $0x38] sm:$0xff] %vm986, %v962
    %995 = vst.msk [vmem:[#allocation2 + $0x40] sm:$0xff] %vm986, %v964
    %996 = vst.msk [vmem:[#allocation2 + $0x48] sm:$0xff] %vm986, %v966
    %997 = vst.msk [vmem:[#allocation2 + $0x50] sm:$0xff] %vm986, %v968
    %998 = vst.msk [vmem:[#allocation2 + $0x58] sm:$0xff] %vm986, %v970
    %vm999 = vcmask 255104
    %1000 = vst.msk [vmem:[#allocation2 + $0x60] sm:$0x3] %vm999, %v972
    %1014 = vrot.lane.b32.xlu0 %v713, 112
    %v1015 = vpop.permute.xlu0 %1014
    %1016 = vrot.lane.b32.xlu0 %v715, 112
    %v1017 = vpop.permute.xlu0 %1016
    %1018 = vrot.lane.b32.xlu0 %v717, 112
    %v1019 = vpop.permute.xlu0 %1018
    %1020 = vrot.lane.b32.xlu0 %v719, 112
    %v1021 = vpop.permute.xlu0 %1020
    %1022 = vrot.lane.b32.xlu0 %v721, 112
    %v1023 = vpop.permute.xlu0 %1022
    %1024 = vrot.lane.b32.xlu0 %v723, 112
    %v1025 = vpop.permute.xlu0 %1024
    %1026 = vrot.lane.b32.xlu0 %v725, 112
    %v1027 = vpop.permute.xlu0 %1026
    %1028 = vrot.lane.b32.xlu0 %v727, 112
    %v1029 = vpop.permute.xlu0 %1028
    %1030 = vrot.lane.b32.xlu0 %v729, 112
    %v1031 = vpop.permute.xlu0 %1030
    %1032 = vrot.lane.b32.xlu0 %v731, 112
    %v1033 = vpop.permute.xlu0 %1032
    %1034 = vrot.lane.b32.xlu0 %v733, 112
    %v1035 = vpop.permute.xlu0 %1034
    %1036 = vrot.lane.b32.xlu0 %v735, 112
    %v1037 = vpop.permute.xlu0 %1036
    %1038 = vrot.lane.b32.xlu0 %v737, 112
    %v1039 = vpop.permute.xlu0 %1038
    %v1053 = vmax.f32 %v713, %v1015
    %v1054 = vmax.f32 %v715, %v1017
    %v1055 = vmax.f32 %v717, %v1019
    %v1056 = vmax.f32 %v719, %v1021
    %v1057 = vmax.f32 %v721, %v1023
    %v1058 = vmax.f32 %v723, %v1025
    %v1059 = vmax.f32 %v725, %v1027
    %v1060 = vmax.f32 %v727, %v1029
    %v1061 = vmax.f32 %v729, %v1031
    %v1062 = vmax.f32 %v731, %v1033
    %v1063 = vmax.f32 %v733, %v1035
    %v1064 = vmax.f32 %v735, %v1037
    %v1065 = vmax.f32 %v737, %v1039
    %1066 = vrot.lane.b32.xlu0 %v713, 64
    %v1067 = vpop.permute.xlu0 %1066
    %1068 = vrot.lane.b32.xlu0 %v715, 64
    %v1069 = vpop.permute.xlu0 %1068
    %1070 = vrot.lane.b32.xlu0 %v717, 64
    %v1071 = vpop.permute.xlu0 %1070
    %1072 = vrot.lane.b32.xlu0 %v719, 64
    %v1073 = vpop.permute.xlu0 %1072
    %1074 = vrot.lane.b32.xlu0 %v721, 64
    %v1075 = vpop.permute.xlu0 %1074
    %1076 = vrot.lane.b32.xlu0 %v723, 64
    %v1077 = vpop.permute.xlu0 %1076
    %1078 = vrot.lane.b32.xlu0 %v725, 64
    %v1079 = vpop.permute.xlu0 %1078
    %1080 = vrot.lane.b32.xlu0 %v727, 64
    %v1081 = vpop.permute.xlu0 %1080
    %1082 = vrot.lane.b32.xlu0 %v729, 64
    %v1083 = vpop.permute.xlu0 %1082
    %1084 = vrot.lane.b32.xlu0 %v731, 64
    %v1085 = vpop.permute.xlu0 %1084
    %1086 = vrot.lane.b32.xlu0 %v733, 64
    %v1087 = vpop.permute.xlu0 %1086
    %1088 = vrot.lane.b32.xlu0 %v735, 64
    %v1089 = vpop.permute.xlu0 %1088
    %1090 = vrot.lane.b32.xlu0 %v737, 64
    %v1091 = vpop.permute.xlu0 %1090
    %v1105 = vmax.f32 %v1053, %v1067
    %v1106 = vmax.f32 %v1054, %v1069
    %v1107 = vmax.f32 %v1055, %v1071
    %v1108 = vmax.f32 %v1056, %v1073
    %v1109 = vmax.f32 %v1057, %v1075
    %v1110 = vmax.f32 %v1058, %v1077
    %v1111 = vmax.f32 %v1059, %v1079
    %v1112 = vmax.f32 %v1060, %v1081
    %v1113 = vmax.f32 %v1061, %v1083
    %v1114 = vmax.f32 %v1062, %v1085
    %v1115 = vmax.f32 %v1063, %v1087
    %v1116 = vmax.f32 %v1064, %v1089
    %v1117 = vmax.f32 %v1065, %v1091
    %1118 = vrot.lane.b32.xlu0 %v713, 48
    %v1119 = vpop.permute.xlu0 %1118
    %1120 = vrot.lane.b32.xlu0 %v715, 48
    %v1121 = vpop.permute.xlu0 %1120
    %1122 = vrot.lane.b32.xlu0 %v717, 48
    %v1123 = vpop.permute.xlu0 %1122
    %1124 = vrot.lane.b32.xlu0 %v719, 48
    %v1125 = vpop.permute.xlu0 %1124
    %1126 = vrot.lane.b32.xlu0 %v721, 48
    %v1127 = vpop.permute.xlu0 %1126
    %1128 = vrot.lane.b32.xlu0 %v723, 48
    %v1129 = vpop.permute.xlu0 %1128
    %1130 = vrot.lane.b32.xlu0 %v725, 48
    %v1131 = vpop.permute.xlu0 %1130
    %1132 = vrot.lane.b32.xlu0 %v727, 48
    %v1133 = vpop.permute.xlu0 %1132
    %1134 = vrot.lane.b32.xlu0 %v729, 48
    %v1135 = vpop.permute.xlu0 %1134
    %1136 = vrot.lane.b32.xlu0 %v731, 48
    %v1137 = vpop.permute.xlu0 %1136
    %1138 = vrot.lane.b32.xlu0 %v733, 48
    %v1139 = vpop.permute.xlu0 %1138
    %1140 = vrot.lane.b32.xlu0 %v735, 48
    %v1141 = vpop.permute.xlu0 %1140
    %1142 = vrot.lane.b32.xlu0 %v737, 48
    %v1143 = vpop.permute.xlu0 %1142
    %v1157 = vmax.f32 %v1105, %v1119
    %v1158 = vmax.f32 %v1106, %v1121
    %v1159 = vmax.f32 %v1107, %v1123
    %v1160 = vmax.f32 %v1108, %v1125
    %v1161 = vmax.f32 %v1109, %v1127
    %v1162 = vmax.f32 %v1110, %v1129
    %v1163 = vmax.f32 %v1111, %v1131
    %v1164 = vmax.f32 %v1112, %v1133
    %v1165 = vmax.f32 %v1113, %v1135
    %v1166 = vmax.f32 %v1114, %v1137
    %v1167 = vmax.f32 %v1115, %v1139
    %v1168 = vmax.f32 %v1116, %v1141
    %v1169 = vmax.f32 %v1117, %v1143
    %v1170 = vmax.f32 %v1157, 0.0
    %v1171 = vmax.f32 %v1158, 0.0
    %v1172 = vmax.f32 %v1159, 0.0
    %v1173 = vmax.f32 %v1160, 0.0
    %v1174 = vmax.f32 %v1161, 0.0
    %v1175 = vmax.f32 %v1162, 0.0
    %v1176 = vmax.f32 %v1163, 0.0
    %v1177 = vmax.f32 %v1164, 0.0
    %v1178 = vmax.f32 %v1165, 0.0
    %v1179 = vmax.f32 %v1166, 0.0
    %v1180 = vmax.f32 %v1167, 0.0
    %v1181 = vmax.f32 %v1168, 0.0
    %v1182 = vmax.f32 %v1169, 0.0
    %1196 = vrot.lane.b32.xlu0 %v1170, 32
    %v1197 = vpop.permute.xlu0 %1196
    %1198 = vrot.lane.b32.xlu0 %v1171, 32
    %v1199 = vpop.permute.xlu0 %1198
    %1200 = vrot.lane.b32.xlu0 %v1172, 32
    %v1201 = vpop.permute.xlu0 %1200
    %1202 = vrot.lane.b32.xlu0 %v1173, 32
    %v1203 = vpop.permute.xlu0 %1202
    %1204 = vrot.lane.b32.xlu0 %v1174, 32
    %v1205 = vpop.permute.xlu0 %1204
    %1206 = vrot.lane.b32.xlu0 %v1175, 32
    %v1207 = vpop.permute.xlu0 %1206
    %1208 = vrot.lane.b32.xlu0 %v1176, 32
    %v1209 = vpop.permute.xlu0 %1208
    %1210 = vrot.lane.b32.xlu0 %v1177, 32
    %v1211 = vpop.permute.xlu0 %1210
    %1212 = vrot.lane.b32.xlu0 %v1178, 32
    %v1213 = vpop.permute.xlu0 %1212
    %1214 = vrot.lane.b32.xlu0 %v1179, 32
    %v1215 = vpop.permute.xlu0 %1214
    %1216 = vrot.lane.b32.xlu0 %v1180, 32
    %v1217 = vpop.permute.xlu0 %1216
    %1218 = vrot.lane.b32.xlu0 %v1181, 32
    %v1219 = vpop.permute.xlu0 %1218
    %1220 = vrot.lane.b32.xlu0 %v1182, 32
    %v1221 = vpop.permute.xlu0 %1220
    %vm1235 = vcmask 392448
    %1236 = vst.msk [vmem:[#allocation2] sm:$0xff] %vm1235, %v1197
    %1237 = vst.msk [vmem:[#allocation2 + $0x8] sm:$0xff] %vm1235, %v1199
    %1238 = vst.msk [vmem:[#allocation2 + $0x10] sm:$0xff] %vm1235, %v1201
    %1239 = vst.msk [vmem:[#allocation2 + $0x18] sm:$0xff] %vm1235, %v1203
    %1240 = vst.msk [vmem:[#allocation2 + $0x20] sm:$0xff] %vm1235, %v1205
    %1241 = vst.msk [vmem:[#allocation2 + $0x28] sm:$0xff] %vm1235, %v1207
    %1242 = vst.msk [vmem:[#allocation2 + $0x30] sm:$0xff] %vm1235, %v1209
    %1243 = vst.msk [vmem:[#allocation2 + $0x38] sm:$0xff] %vm1235, %v1211
    %1244 = vst.msk [vmem:[#allocation2 + $0x40] sm:$0xff] %vm1235, %v1213
    %1245 = vst.msk [vmem:[#allocation2 + $0x48] sm:$0xff] %vm1235, %v1215
    %1246 = vst.msk [vmem:[#allocation2 + $0x50] sm:$0xff] %vm1235, %v1217
    %1247 = vst.msk [vmem:[#allocation2 + $0x58] sm:$0xff] %vm1235, %v1219
    %vm1248 = vcmask 386304
    %1249 = vst.msk [vmem:[#allocation2 + $0x60] sm:$0x3] %vm1248, %v1221
    %1250 = vrot.lane.b32.xlu0 %v1170, 16
    %v1251 = vpop.permute.xlu0 %1250
    %1252 = vrot.lane.b32.xlu0 %v1171, 16
    %v1253 = vpop.permute.xlu0 %1252
    %1254 = vrot.lane.b32.xlu0 %v1172, 16
    %v1255 = vpop.permute.xlu0 %1254
    %1256 = vrot.lane.b32.xlu0 %v1173, 16
    %v1257 = vpop.permute.xlu0 %1256
    %1258 = vrot.lane.b32.xlu0 %v1174, 16
    %v1259 = vpop.permute.xlu0 %1258
    %1260 = vrot.lane.b32.xlu0 %v1175, 16
    %v1261 = vpop.permute.xlu0 %1260
    %1262 = vrot.lane.b32.xlu0 %v1176, 16
    %v1263 = vpop.permute.xlu0 %1262
    %1264 = vrot.lane.b32.xlu0 %v1177, 16
    %v1265 = vpop.permute.xlu0 %1264
    %1266 = vrot.lane.b32.xlu0 %v1178, 16
    %v1267 = vpop.permute.xlu0 %1266
    %1268 = vrot.lane.b32.xlu0 %v1179, 16
    %v1269 = vpop.permute.xlu0 %1268
    %1270 = vrot.lane.b32.xlu0 %v1180, 16
    %v1271 = vpop.permute.xlu0 %1270
    %1272 = vrot.lane.b32.xlu0 %v1181, 16
    %v1273 = vpop.permute.xlu0 %1272
    %1274 = vrot.lane.b32.xlu0 %v1182, 16
    %v1275 = vpop.permute.xlu0 %1274
    %vm1289 = vcmask 523648
    %1290 = vst.msk [vmem:[#allocation2] sm:$0xff] %vm1289, %v1251
    %1291 = vst.msk [vmem:[#allocation2 + $0x8] sm:$0xff] %vm1289, %v1253
    %1292 = vst.msk [vmem:[#allocation2 + $0x10] sm:$0xff] %vm1289, %v1255
    %1293 = vst.msk [vmem:[#allocation2 + $0x18] sm:$0xff] %vm1289, %v1257
    %1294 = vst.msk [vmem:[#allocation2 + $0x20] sm:$0xff] %vm1289, %v1259
    %1295 = vst.msk [vmem:[#allocation2 + $0x28] sm:$0xff] %vm1289, %v1261
    %1296 = vst.msk [vmem:[#allocation2 + $0x30] sm:$0xff] %vm1289, %v1263
    %1297 = vst.msk [vmem:[#allocation2 + $0x38] sm:$0xff] %vm1289, %v1265
    %1298 = vst.msk [vmem:[#allocation2 + $0x40] sm:$0xff] %vm1289, %v1267
    %1299 = vst.msk [vmem:[#allocation2 + $0x48] sm:$0xff] %vm1289, %v1269
    %1300 = vst.msk [vmem:[#allocation2 + $0x50] sm:$0xff] %vm1289, %v1271
    %1301 = vst.msk [vmem:[#allocation2 + $0x58] sm:$0xff] %vm1289, %v1273
    %vm1302 = vcmask 517504
    %1303 = vst.msk [vmem:[#allocation2 + $0x60] sm:$0x3] %vm1302, %v1275
    %vm1304 = vcmask 523264
    %1305 = vst.msk [vmem:[#allocation2 + $0x62] sm:$0xff] %vm1304, 0.0
    %1306 = vst.msk [vmem:[#allocation2 + $0x6a] sm:$0xff] %vm1304, 0.0
    %v1307 = vld [vmem:[#allocation2] sm:$0xff]
    %v1308 = vld [vmem:[#allocation2 + $0x8] sm:$0xff]
    %v1309 = vld [vmem:[#allocation2 + $0x10] sm:$0xff]
    %v1310 = vld [vmem:[#allocation2 + $0x18] sm:$0xff]
    %v1311 = vld [vmem:[#allocation2 + $0x20] sm:$0xff]
    %v1312 = vld [vmem:[#allocation2 + $0x28] sm:$0xff]
    %v1313 = vld [vmem:[#allocation2 + $0x30] sm:$0xff]
    %v1314 = vld [vmem:[#allocation2 + $0x38] sm:$0xff]
    %v1315 = vld [vmem:[#allocation2 + $0x40] sm:$0xff]
    %v1316 = vld [vmem:[#allocation2 + $0x48] sm:$0xff]
    %v1317 = vld [vmem:[#allocation2 + $0x50] sm:$0xff]
    %v1318 = vld [vmem:[#allocation2 + $0x58] sm:$0xff]
    %v1319 = vld [vmem:[#allocation2 + $0x60] sm:$0x3]
    %v1320 = vpack.c.bf16 %v1308, %v1307
    %v1321 = vpack.c.bf16 %v1310, %v1309
    %v1322 = vpack.c.bf16 %v1312, %v1311
    %v1323 = vpack.c.bf16 %v1314, %v1313
    %v1324 = vpack.c.bf16 %v1316, %v1315
    %v1325 = vpack.c.bf16 %v1318, %v1317
    %v1326 = vpack.c.bf16 %v1319, %v1319
    %v1327 = vld [vmem:[%s3] sm:$0xf]
    %v1328 = vld [vmem:[%s3 + $0x4] sm:$0xf]
    %v1329 = vld [vmem:[%s3 + $0x8] sm:$0xf]
    %v1330 = vld [vmem:[%s3 + $0xc] sm:$0xf]
    %v1331 = vld [vmem:[%s3 + $0x10] sm:$0xf]
    %v1332 = vld [vmem:[%s3 + $0x14] sm:$0xf]
    %v1333 = vld [vmem:[%s3 + $0x18] sm:$0xf]
    %v1334 = vld [vmem:[%s3 + $0x1c] sm:$0xf]
    %v1335 = vld [vmem:[#allocation2 + $0x1] sm:$0xff]
    %v1336 = vld [vmem:[#allocation2 + $0x9] sm:$0xff]
    %v1337 = vld [vmem:[#allocation2 + $0x11] sm:$0xff]
    %v1338 = vld [vmem:[#allocation2 + $0x19] sm:$0xff]
    %v1339 = vld [vmem:[#allocation2 + $0x21] sm:$0xff]
    %v1340 = vld [vmem:[#allocation2 + $0x29] sm:$0xff]
    %v1341 = vld [vmem:[#allocation2 + $0x31] sm:$0xff]
    %v1342 = vld [vmem:[#allocation2 + $0x39] sm:$0xff]
    %v1343 = vld [vmem:[#allocation2 + $0x41] sm:$0xff]
    %v1344 = vld [vmem:[#allocation2 + $0x49] sm:$0xff]
    %v1345 = vld [vmem:[#allocation2 + $0x51] sm:$0xff]
    %v1346 = vld [vmem:[#allocation2 + $0x59] sm:$0xff]
    %v1347 = vld [vmem:[#allocation2 + $0x61] sm:$0x3]
    %v1348 = vpack.c.bf16 %v1336, %v1335
    %v1349 = vpack.c.bf16 %v1338, %v1337
    %v1350 = vpack.c.bf16 %v1340, %v1339
    %v1351 = vpack.c.bf16 %v1342, %v1341
    %v1352 = vpack.c.bf16 %v1344, %v1343
    %v1353 = vpack.c.bf16 %v1346, %v1345
    %v1354 = vpack.c.bf16 %v1347, %v1347
    %s1355 = scalar_lea.vmem %s3, 32
    %v1356 = vld [vmem:[%s1355] sm:$0xf]
    %v1357 = vld [vmem:[%s1355 + $0x4] sm:$0xf]
    %v1358 = vld [vmem:[%s1355 + $0x8] sm:$0xf]
    %v1359 = vld [vmem:[%s1355 + $0xc] sm:$0xf]
    %v1360 = vld [vmem:[%s1355 + $0x10] sm:$0xf]
    %v1361 = vld [vmem:[%s1355 + $0x14] sm:$0xf]
    %v1362 = vld [vmem:[%s1355 + $0x18] sm:$0xf]
    %v1363 = vld [vmem:[%s1355 + $0x1c] sm:$0xf]
    %v1372 = vunpack.c.l.b16 %v1356
    %v1373 = vunpack.c.l.b16 %v1357
    %v1374 = vunpack.c.l.b16 %v1358
    %v1375 = vunpack.c.l.b16 %v1359
    %v1376 = vunpack.c.l.b16 %v1360
    %v1377 = vunpack.c.l.b16 %v1361
    %v1378 = vunpack.c.l.b16 %v1362
    %v1379 = vunpack.c.l.b16 %v1363
    %v1380 = vpack.c.b16 %v1373, %v1372
    %v1381 = vpack.c.b16 %v1375, %v1374
    %v1382 = vpack.c.b16 %v1377, %v1376
    %v1383 = vpack.c.b16 %v1379, %v1378
    %v1389 = vsel %vm1304, %v1348, 0
    %v1392 = vsel %vm1304, %v1349, 0
    %v1395 = vsel %vm1304, %v1350, 0
    %v1398 = vsel %vm1304, %v1351, 0
    %v1401 = vsel %vm1304, %v1352, 0
    %v1404 = vsel %vm1304, %v1353, 0
    %v1407 = vsel %vm1304, %v1354, 0
    %1409 = vmatprep.subr.bf16.mxu0 0
    %1410 = vmatpush1.bf16.msra.mxu0 0
    %1411 = vmatprep.subr.bf16.mxu0 0
    %1412 = vmatpush1.bf16.msra.mxu0 0
    %1413 = vmatprep.subr.bf16.mxu0 0
    %1414 = vmatpush1.bf16.msra.mxu0 0
    %1415 = vmatprep.subr.bf16.mxu0 0
    %1416 = vmatpush1.bf16.msra.mxu0 0
    %1417 = vmatprep.subr.bf16.mxu0 0
    %1418 = vmatpush1.bf16.msra.mxu0 %v1383
    %1419 = vmatprep.subr.bf16.mxu0 0
    %1420 = vmatpush1.bf16.msra.mxu0 %v1382
    %1421 = vmatprep.subr.bf16.mxu0 0
    %1422 = vmatpush1.bf16.msra.mxu0 %v1381
    %1423 = vmatprep.subr.bf16.mxu0 0
    %1424 = vmatpush1.bf16.msra.mxu0 %v1380
    %1425 = vmatprep.subr.bf16.mxu0 0
    %1426 = vmatpush2.bf16.msra.mxu0 0
    %1427 = vmatprep.subr.bf16.mxu0 0
    %1428 = vmatpush2.bf16.msra.mxu0 0
    %1429 = vmatprep.subr.bf16.mxu0 0
    %1430 = vmatpush2.bf16.msra.mxu0 0
    %1431 = vmatprep.subr.bf16.mxu0 0
    %1432 = vmatpush2.bf16.msra.mxu0 0
    %1433 = vmatprep.subr.bf16.mxu0 0
    %1434 = vmatpush2.bf16.msra.mxu0 0
    %1435 = vmatprep.subr.bf16.mxu0 0
    %1436 = vmatpush2.bf16.msra.mxu0 0
    %1437 = vmatprep.subr.bf16.mxu0 0
    %1438 = vmatpush2.bf16.msra.mxu0 0
    %1439 = vmatprep.subr.bf16.mxu0 0
    %1440 = vmatpush2.bf16.msra.mxu0 0
    %1441 = vmatprep.mubr.bf16.mxu0 0
    %1442 = vmatmul.mubr.bf16.gmra.mxu0 %v1389
    %v1443 = vpop.f32.mrf.mxu0
    %v1444 = vadd.f32 0.0, %v1443
    %v1445 = vpop.f32.mrf.mxu0
    %v1446 = vpop.f32.mrf.mxu0
    %v1447 = vadd.f32 0.0, %v1446
    %v1448 = vpop.f32.mrf.mxu0
    %1449 = vmatprep.mubr.bf16.mxu0 0
    %1450 = vmatmul.mubr.bf16.gmra.mxu0 %v1392
    %v1451 = vpop.f32.mrf.mxu0
    %v1452 = vadd.f32 0.0, %v1451
    %v1453 = vpop.f32.mrf.mxu0
    %v1454 = vpop.f32.mrf.mxu0
    %v1455 = vadd.f32 0.0, %v1454
    %v1456 = vpop.f32.mrf.mxu0
    %1457 = vmatprep.mubr.bf16.mxu0 0
    %1458 = vmatmul.mubr.bf16.gmra.mxu0 %v1395
    %v1459 = vpop.f32.mrf.mxu0
    %v1460 = vadd.f32 0.0, %v1459
    %v1461 = vpop.f32.mrf.mxu0
    %v1462 = vpop.f32.mrf.mxu0
    %v1463 = vadd.f32 0.0, %v1462
    %v1464 = vpop.f32.mrf.mxu0
    %1465 = vmatprep.mubr.bf16.mxu0 0
    %1466 = vmatmul.mubr.bf16.gmra.mxu0 %v1398
    %v1467 = vpop.f32.mrf.mxu0
    %v1468 = vadd.f32 0.0, %v1467
    %v1469 = vpop.f32.mrf.mxu0
    %v1470 = vpop.f32.mrf.mxu0
    %v1471 = vadd.f32 0.0, %v1470
    %v1472 = vpop.f32.mrf.mxu0
    %1473 = vmatprep.mubr.bf16.mxu0 0
    %1474 = vmatmul.mubr.bf16.gmra.mxu0 %v1401
    %v1475 = vpop.f32.mrf.mxu0
    %v1476 = vadd.f32 0.0, %v1475
    %v1477 = vpop.f32.mrf.mxu0
    %v1478 = vpop.f32.mrf.mxu0
    %v1479 = vadd.f32 0.0, %v1478
    %v1480 = vpop.f32.mrf.mxu0
    %1481 = vmatprep.mubr.bf16.mxu0 0
    %1482 = vmatmul.mubr.bf16.gmra.mxu0 %v1404
    %v1483 = vpop.f32.mrf.mxu0
    %v1484 = vadd.f32 0.0, %v1483
    %v1485 = vpop.f32.mrf.mxu0
    %v1486 = vpop.f32.mrf.mxu0
    %v1487 = vadd.f32 0.0, %v1486
    %v1488 = vpop.f32.mrf.mxu0
    %1489 = vmatprep.mubr.bf16.mxu0 0
    %1490 = vmatmul.mubr.bf16.gmra.mxu0 %v1407
    %v1491 = vpop.f32.mrf.mxu0
    %v1492 = vadd.f32 0.0, %v1491
    %v1493 = vpop.f32.mrf.mxu0
    %v1494 = vpop.f32.mrf.mxu0
    %v1495 = vpop.f32.mrf.mxu0
    %1496 = vdwg.mxu0
    %v1505 = vunpack.c.l.b16 %v1327
    %v1506 = vunpack.c.l.b16 %v1328
    %v1507 = vunpack.c.l.b16 %v1329
    %v1508 = vunpack.c.l.b16 %v1330
    %v1509 = vunpack.c.l.b16 %v1331
    %v1510 = vunpack.c.l.b16 %v1332
    %v1511 = vunpack.c.l.b16 %v1333
    %v1512 = vunpack.c.l.b16 %v1334
    %v1513 = vpack.c.b16 %v1506, %v1505
    %v1514 = vpack.c.b16 %v1508, %v1507
    %v1515 = vpack.c.b16 %v1510, %v1509
    %v1516 = vpack.c.b16 %v1512, %v1511
    %v1522 = vsel %vm1304, %v1320, 0
    %v1525 = vsel %vm1304, %v1321, 0
    %v1528 = vsel %vm1304, %v1322, 0
    %v1531 = vsel %vm1304, %v1323, 0
    %v1534 = vsel %vm1304, %v1324, 0
    %v1537 = vsel %vm1304, %v1325, 0
    %v1540 = vsel %vm1304, %v1326, 0
    %1542 = vmatprep.subr.bf16.mxu0 0
    %1543 = vmatpush1.bf16.msra.mxu0 0
    %1544 = vmatprep.subr.bf16.mxu0 0
    %1545 = vmatpush1.bf16.msra.mxu0 0
    %1546 = vmatprep.subr.bf16.mxu0 0
    %1547 = vmatpush1.bf16.msra.mxu0 0
    %1548 = vmatprep.subr.bf16.mxu0 0
    %1549 = vmatpush1.bf16.msra.mxu0 0
    %1550 = vmatprep.subr.bf16.mxu0 0
    %1551 = vmatpush1.bf16.msra.mxu0 %v1516
    %1552 = vmatprep.subr.bf16.mxu0 0
    %1553 = vmatpush1.bf16.msra.mxu0 %v1515
    %1554 = vmatprep.subr.bf16.mxu0 0
    %1555 = vmatpush1.bf16.msra.mxu0 %v1514
    %1556 = vmatprep.subr.bf16.mxu0 0
    %1557 = vmatpush1.bf16.msra.mxu0 %v1513
    %1558 = vmatprep.subr.bf16.mxu0 0
    %1559 = vmatpush2.bf16.msra.mxu0 0
    %1560 = vmatprep.subr.bf16.mxu0 0
    %1561 = vmatpush2.bf16.msra.mxu0 0
    %1562 = vmatprep.subr.bf16.mxu0 0
    %1563 = vmatpush2.bf16.msra.mxu0 0
    %1564 = vmatprep.subr.bf16.mxu0 0
    %1565 = vmatpush2.bf16.msra.mxu0 0
    %1566 = vmatprep.subr.bf16.mxu0 0
    %1567 = vmatpush2.bf16.msra.mxu0 0
    %1568 = vmatprep.subr.bf16.mxu0 0
    %1569 = vmatpush2.bf16.msra.mxu0 0
    %1570 = vmatprep.subr.bf16.mxu0 0
    %1571 = vmatpush2.bf16.msra.mxu0 0
    %1572 = vmatprep.subr.bf16.mxu0 0
    %1573 = vmatpush2.bf16.msra.mxu0 0
    %1574 = vmatprep.mubr.bf16.mxu0 0
    %1575 = vmatmul.mubr.bf16.gmra.mxu0 %v1522
    %v1576 = vpop.f32.mrf.mxu0
    %v1577 = vadd.f32 %v1444, %v1576
    %v1578 = vpop.f32.mrf.mxu0
    %v1579 = vpop.f32.mrf.mxu0
    %v1580 = vadd.f32 %v1447, %v1579
    %v1581 = vpop.f32.mrf.mxu0
    %1582 = vmatprep.mubr.bf16.mxu0 0
    %1583 = vmatmul.mubr.bf16.gmra.mxu0 %v1525
    %v1584 = vpop.f32.mrf.mxu0
    %v1585 = vadd.f32 %v1452, %v1584
    %v1586 = vpop.f32.mrf.mxu0
    %v1587 = vpop.f32.mrf.mxu0
    %v1588 = vadd.f32 %v1455, %v1587
    %v1589 = vpop.f32.mrf.mxu0
    %1590 = vmatprep.mubr.bf16.mxu0 0
    %1591 = vmatmul.mubr.bf16.gmra.mxu0 %v1528
    %v1592 = vpop.f32.mrf.mxu0
    %v1593 = vadd.f32 %v1460, %v1592
    %v1594 = vpop.f32.mrf.mxu0
    %v1595 = vpop.f32.mrf.mxu0
    %v1596 = vadd.f32 %v1463, %v1595
    %v1597 = vpop.f32.mrf.mxu0
    %1598 = vmatprep.mubr.bf16.mxu0 0
    %1599 = vmatmul.mubr.bf16.gmra.mxu0 %v1531
    %v1600 = vpop.f32.mrf.mxu0
    %v1601 = vadd.f32 %v1468, %v1600
    %v1602 = vpop.f32.mrf.mxu0
    %v1603 = vpop.f32.mrf.mxu0
    %v1604 = vadd.f32 %v1471, %v1603
    %v1605 = vpop.f32.mrf.mxu0
    %1606 = vmatprep.mubr.bf16.mxu0 0
    %1607 = vmatmul.mubr.bf16.gmra.mxu0 %v1534
    %v1608 = vpop.f32.mrf.mxu0
    %v1609 = vadd.f32 %v1476, %v1608
    %v1610 = vpop.f32.mrf.mxu0
    %v1611 = vpop.f32.mrf.mxu0
    %v1612 = vadd.f32 %v1479, %v1611
    %v1613 = vpop.f32.mrf.mxu0
    %1614 = vmatprep.mubr.bf16.mxu0 0
    %1615 = vmatmul.mubr.bf16.gmra.mxu0 %v1537
    %v1616 = vpop.f32.mrf.mxu0
    %v1617 = vadd.f32 %v1484, %v1616
    %v1618 = vpop.f32.mrf.mxu0
    %v1619 = vpop.f32.mrf.mxu0
    %v1620 = vadd.f32 %v1487, %v1619
    %v1621 = vpop.f32.mrf.mxu0
    %1622 = vmatprep.mubr.bf16.mxu0 0
    %1623 = vmatmul.mubr.bf16.gmra.mxu0 %v1540
    %v1624 = vpop.f32.mrf.mxu0
    %v1625 = vadd.f32 %v1492, %v1624
    %v1626 = vpop.f32.mrf.mxu0
    %v1627 = vpop.f32.mrf.mxu0
    %v1628 = vpop.f32.mrf.mxu0
    %1629 = vdwg.mxu0
    %v1630 = vld [vmem:[#allocation2 + $0x2] sm:$0xff]
    %v1631 = vld [vmem:[#allocation2 + $0xa] sm:$0xff]
    %v1632 = vld [vmem:[#allocation2 + $0x12] sm:$0xff]
    %v1633 = vld [vmem:[#allocation2 + $0x1a] sm:$0xff]
    %v1634 = vld [vmem:[#allocation2 + $0x22] sm:$0xff]
    %v1635 = vld [vmem:[#allocation2 + $0x2a] sm:$0xff]
    %v1636 = vld [vmem:[#allocation2 + $0x32] sm:$0xff]
    %v1637 = vld [vmem:[#allocation2 + $0x3a] sm:$0xff]
    %v1638 = vld [vmem:[#allocation2 + $0x42] sm:$0xff]
    %v1639 = vld [vmem:[#allocation2 + $0x4a] sm:$0xff]
    %v1640 = vld [vmem:[#allocation2 + $0x52] sm:$0xff]
    %v1641 = vld [vmem:[#allocation2 + $0x5a] sm:$0xff]
    %v1642 = vld [vmem:[#allocation2 + $0x62] sm:$0x3]
    %v1643 = vpack.c.bf16 %v1631, %v1630
    %v1644 = vpack.c.bf16 %v1633, %v1632
    %v1645 = vpack.c.bf16 %v1635, %v1634
    %v1646 = vpack.c.bf16 %v1637, %v1636
    %v1647 = vpack.c.bf16 %v1639, %v1638
    %v1648 = vpack.c.bf16 %v1641, %v1640
    %v1649 = vpack.c.bf16 %v1642, %v1642
    %s1650 = scalar_lea.vmem %s3, 64
    %v1651 = vld [vmem:[%s1650] sm:$0xf]
    %v1652 = vld [vmem:[%s1650 + $0x4] sm:$0xf]
    %v1653 = vld [vmem:[%s1650 + $0x8] sm:$0xf]
    %v1654 = vld [vmem:[%s1650 + $0xc] sm:$0xf]
    %v1655 = vld [vmem:[%s1650 + $0x10] sm:$0xf]
    %v1656 = vld [vmem:[%s1650 + $0x14] sm:$0xf]
    %v1657 = vld [vmem:[%s1650 + $0x18] sm:$0xf]
    %v1658 = vld [vmem:[%s1650 + $0x1c] sm:$0xf]
    %v1667 = vunpack.c.l.b16 %v1651
    %v1668 = vunpack.c.l.b16 %v1652
    %v1669 = vunpack.c.l.b16 %v1653
    %v1670 = vunpack.c.l.b16 %v1654
    %v1671 = vunpack.c.l.b16 %v1655
    %v1672 = vunpack.c.l.b16 %v1656
    %v1673 = vunpack.c.l.b16 %v1657
    %v1674 = vunpack.c.l.b16 %v1658
    %v1675 = vpack.c.b16 %v1668, %v1667
    %v1676 = vpack.c.b16 %v1670, %v1669
    %v1677 = vpack.c.b16 %v1672, %v1671
    %v1678 = vpack.c.b16 %v1674, %v1673
    %v1684 = vsel %vm1304, %v1643, 0
    %v1687 = vsel %vm1304, %v1644, 0
    %v1690 = vsel %vm1304, %v1645, 0
    %v1693 = vsel %vm1304, %v1646, 0
    %v1696 = vsel %vm1304, %v1647, 0
    %v1699 = vsel %vm1304, %v1648, 0
    %v1702 = vsel %vm1304, %v1649, 0
    %1704 = vmatprep.subr.bf16.mxu0 0
    %1705 = vmatpush1.bf16.msra.mxu0 0
    %1706 = vmatprep.subr.bf16.mxu0 0
    %1707 = vmatpush1.bf16.msra.mxu0 0
    %1708 = vmatprep.subr.bf16.mxu0 0
    %1709 = vmatpush1.bf16.msra.mxu0 0
    %1710 = vmatprep.subr.bf16.mxu0 0
    %1711 = vmatpush1.bf16.msra.mxu0 0
    %1712 = vmatprep.subr.bf16.mxu0 0
    %1713 = vmatpush1.bf16.msra.mxu0 %v1678
    %1714 = vmatprep.subr.bf16.mxu0 0
    %1715 = vmatpush1.bf16.msra.mxu0 %v1677
    %1716 = vmatprep.subr.bf16.mxu0 0
    %1717 = vmatpush1.bf16.msra.mxu0 %v1676
    %1718 = vmatprep.subr.bf16.mxu0 0
    %1719 = vmatpush1.bf16.msra.mxu0 %v1675
    %1720 = vmatprep.subr.bf16.mxu0 0
    %1721 = vmatpush2.bf16.msra.mxu0 0
    %1722 = vmatprep.subr.bf16.mxu0 0
    %1723 = vmatpush2.bf16.msra.mxu0 0
    %1724 = vmatprep.subr.bf16.mxu0 0
    %1725 = vmatpush2.bf16.msra.mxu0 0
    %1726 = vmatprep.subr.bf16.mxu0 0
    %1727 = vmatpush2.bf16.msra.mxu0 0
    %1728 = vmatprep.subr.bf16.mxu0 0
    %1729 = vmatpush2.bf16.msra.mxu0 0
    %1730 = vmatprep.subr.bf16.mxu0 0
    %1731 = vmatpush2.bf16.msra.mxu0 0
    %1732 = vmatprep.subr.bf16.mxu0 0
    %1733 = vmatpush2.bf16.msra.mxu0 0
    %1734 = vmatprep.subr.bf16.mxu0 0
    %1735 = vmatpush2.bf16.msra.mxu0 0
    %1736 = vmatprep.mubr.bf16.mxu0 0
    %1737 = vmatmul.mubr.bf16.gmra.mxu0 %v1684
    %v1738 = vpop.f32.mrf.mxu0
    %v1739 = vadd.f32 0.0, %v1738
    %v1740 = vpop.f32.mrf.mxu0
    %v1741 = vpop.f32.mrf.mxu0
    %v1742 = vadd.f32 0.0, %v1741
    %v1743 = vpop.f32.mrf.mxu0
    %1744 = vmatprep.mubr.bf16.mxu0 0
    %1745 = vmatmul.mubr.bf16.gmra.mxu0 %v1687
    %v1746 = vpop.f32.mrf.mxu0
    %v1747 = vadd.f32 0.0, %v1746
    %v1748 = vpop.f32.mrf.mxu0
    %v1749 = vpop.f32.mrf.mxu0
    %v1750 = vadd.f32 0.0, %v1749
    %v1751 = vpop.f32.mrf.mxu0
    %1752 = vmatprep.mubr.bf16.mxu0 0
    %1753 = vmatmul.mubr.bf16.gmra.mxu0 %v1690
    %v1754 = vpop.f32.mrf.mxu0
    %v1755 = vadd.f32 0.0, %v1754
    %v1756 = vpop.f32.mrf.mxu0
    %v1757 = vpop.f32.mrf.mxu0
    %v1758 = vadd.f32 0.0, %v1757
    %v1759 = vpop.f32.mrf.mxu0
    %1760 = vmatprep.mubr.bf16.mxu0 0
    %1761 = vmatmul.mubr.bf16.gmra.mxu0 %v1693
    %v1762 = vpop.f32.mrf.mxu0
    %v1763 = vadd.f32 0.0, %v1762
    %v1764 = vpop.f32.mrf.mxu0
    %v1765 = vpop.f32.mrf.mxu0
    %v1766 = vadd.f32 0.0, %v1765
    %v1767 = vpop.f32.mrf.mxu0
    %1768 = vmatprep.mubr.bf16.mxu0 0
    %1769 = vmatmul.mubr.bf16.gmra.mxu0 %v1696
    %v1770 = vpop.f32.mrf.mxu0
    %v1771 = vadd.f32 0.0, %v1770
    %v1772 = vpop.f32.mrf.mxu0
    %v1773 = vpop.f32.mrf.mxu0
    %v1774 = vadd.f32 0.0, %v1773
    %v1775 = vpop.f32.mrf.mxu0
    %1776 = vmatprep.mubr.bf16.mxu0 0
    %1777 = vmatmul.mubr.bf16.gmra.mxu0 %v1699
    %v1778 = vpop.f32.mrf.mxu0
    %v1779 = vadd.f32 0.0, %v1778
    %v1780 = vpop.f32.mrf.mxu0
    %v1781 = vpop.f32.mrf.mxu0
    %v1782 = vadd.f32 0.0, %v1781
    %v1783 = vpop.f32.mrf.mxu0
    %1784 = vmatprep.mubr.bf16.mxu0 0
    %1785 = vmatmul.mubr.bf16.gmra.mxu0 %v1702
    %v1786 = vpop.f32.mrf.mxu0
    %v1787 = vadd.f32 0.0, %v1786
    %v1788 = vpop.f32.mrf.mxu0
    %v1789 = vpop.f32.mrf.mxu0
    %v1790 = vpop.f32.mrf.mxu0
    %1791 = vdwg.mxu0
    %v1792 = vadd.f32 %v1577, %v1739
    %v1793 = vadd.f32 %v1580, %v1742
    %v1794 = vadd.f32 %v1585, %v1747
    %v1795 = vadd.f32 %v1588, %v1750
    %v1796 = vadd.f32 %v1593, %v1755
    %v1797 = vadd.f32 %v1596, %v1758
    %v1798 = vadd.f32 %v1601, %v1763
    %v1799 = vadd.f32 %v1604, %v1766
    %v1800 = vadd.f32 %v1609, %v1771
    %v1801 = vadd.f32 %v1612, %v1774
    %v1802 = vadd.f32 %v1617, %v1779
    %v1803 = vadd.f32 %v1620, %v1782
    %v1804 = vadd.f32 %v1625, %v1787
    %v1805 = vld [vmem:[#allocation2 + $0x7] sm:$0xff]
    %v1806 = vld [vmem:[#allocation2 + $0xf] sm:$0xff]
    %v1807 = vld [vmem:[#allocation2 + $0x17] sm:$0xff]
    %v1808 = vld [vmem:[#allocation2 + $0x1f] sm:$0xff]
    %v1809 = vld [vmem:[#allocation2 + $0x27] sm:$0xff]
    %v1810 = vld [vmem:[#allocation2 + $0x2f] sm:$0xff]
    %v1811 = vld [vmem:[#allocation2 + $0x37] sm:$0xff]
    %v1812 = vld [vmem:[#allocation2 + $0x3f] sm:$0xff]
    %v1813 = vld [vmem:[#allocation2 + $0x47] sm:$0xff]
    %v1814 = vld [vmem:[#allocation2 + $0x4f] sm:$0xff]
    %v1815 = vld [vmem:[#allocation2 + $0x57] sm:$0xff]
    %v1816 = vld [vmem:[#allocation2 + $0x5f] sm:$0xff]
    %v1817 = vld [vmem:[#allocation2 + $0x67] sm:$0x3]
    %v1818 = vpack.c.bf16 %v1806, %v1805
    %v1819 = vpack.c.bf16 %v1808, %v1807
    %v1820 = vpack.c.bf16 %v1810, %v1809
    %v1821 = vpack.c.bf16 %v1812, %v1811
    %v1822 = vpack.c.bf16 %v1814, %v1813
    %v1823 = vpack.c.bf16 %v1816, %v1815
    %v1824 = vpack.c.bf16 %v1817, %v1817
    %s1825 = scalar_lea.vmem %s3, 96
    %v1826 = vld [vmem:[%s1825] sm:$0xf]
    %v1827 = vld [vmem:[%s1825 + $0x4] sm:$0xf]
    %v1828 = vld [vmem:[%s1825 + $0x8] sm:$0xf]
    %v1829 = vld [vmem:[%s1825 + $0xc] sm:$0xf]
    %v1830 = vld [vmem:[%s1825 + $0x10] sm:$0xf]
    %v1831 = vld [vmem:[%s1825 + $0x14] sm:$0xf]
    %v1832 = vld [vmem:[%s1825 + $0x18] sm:$0xf]
    %v1833 = vld [vmem:[%s1825 + $0x1c] sm:$0xf]
    %v1842 = vunpack.c.l.b16 %v1826
    %v1843 = vunpack.c.l.b16 %v1827
    %v1844 = vunpack.c.l.b16 %v1828
    %v1845 = vunpack.c.l.b16 %v1829
    %v1846 = vunpack.c.l.b16 %v1830
    %v1847 = vunpack.c.l.b16 %v1831
    %v1848 = vunpack.c.l.b16 %v1832
    %v1849 = vunpack.c.l.b16 %v1833
    %v1850 = vpack.c.b16 %v1843, %v1842
    %v1851 = vpack.c.b16 %v1845, %v1844
    %v1852 = vpack.c.b16 %v1847, %v1846
    %v1853 = vpack.c.b16 %v1849, %v1848
    %v1859 = vsel %vm1304, %v1818, 0
    %v1862 = vsel %vm1304, %v1819, 0
    %v1865 = vsel %vm1304, %v1820, 0
    %v1868 = vsel %vm1304, %v1821, 0
    %v1871 = vsel %vm1304, %v1822, 0
    %v1874 = vsel %vm1304, %v1823, 0
    %v1877 = vsel %vm1304, %v1824, 0
    %1879 = vmatprep.subr.bf16.mxu0 0
    %1880 = vmatpush1.bf16.msra.mxu0 0
    %1881 = vmatprep.subr.bf16.mxu0 0
    %1882 = vmatpush1.bf16.msra.mxu0 0
    %1883 = vmatprep.subr.bf16.mxu0 0
    %1884 = vmatpush1.bf16.msra.mxu0 0
    %1885 = vmatprep.subr.bf16.mxu0 0
    %1886 = vmatpush1.bf16.msra.mxu0 0
    %1887 = vmatprep.subr.bf16.mxu0 0
    %1888 = vmatpush1.bf16.msra.mxu0 %v1853
    %1889 = vmatprep.subr.bf16.mxu0 0
    %1890 = vmatpush1.bf16.msra.mxu0 %v1852
    %1891 = vmatprep.subr.bf16.mxu0 0
    %1892 = vmatpush1.bf16.msra.mxu0 %v1851
    %1893 = vmatprep.subr.bf16.mxu0 0
    %1894 = vmatpush1.bf16.msra.mxu0 %v1850
    %1895 = vmatprep.subr.bf16.mxu0 0
    %1896 = vmatpush2.bf16.msra.mxu0 0
    %1897 = vmatprep.subr.bf16.mxu0 0
    %1898 = vmatpush2.bf16.msra.mxu0 0
    %1899 = vmatprep.subr.bf16.mxu0 0
    %1900 = vmatpush2.bf16.msra.mxu0 0
    %1901 = vmatprep.subr.bf16.mxu0 0
    %1902 = vmatpush2.bf16.msra.mxu0 0
    %1903 = vmatprep.subr.bf16.mxu0 0
    %1904 = vmatpush2.bf16.msra.mxu0 0
    %1905 = vmatprep.subr.bf16.mxu0 0
    %1906 = vmatpush2.bf16.msra.mxu0 0
    %1907 = vmatprep.subr.bf16.mxu0 0
    %1908 = vmatpush2.bf16.msra.mxu0 0
    %1909 = vmatprep.subr.bf16.mxu0 0
    %1910 = vmatpush2.bf16.msra.mxu0 0
    %1911 = vmatprep.mubr.bf16.mxu0 0
    %1912 = vmatmul.mubr.bf16.gmra.mxu0 %v1859
    %v1913 = vpop.f32.mrf.mxu0
    %v1914 = vadd.f32 0.0, %v1913
    %v1915 = vpop.f32.mrf.mxu0
    %v1916 = vpop.f32.mrf.mxu0
    %v1917 = vadd.f32 0.0, %v1916
    %v1918 = vpop.f32.mrf.mxu0
    %1919 = vmatprep.mubr.bf16.mxu0 0
    %1920 = vmatmul.mubr.bf16.gmra.mxu0 %v1862
    %v1921 = vpop.f32.mrf.mxu0
    %v1922 = vadd.f32 0.0, %v1921
    %v1923 = vpop.f32.mrf.mxu0
    %v1924 = vpop.f32.mrf.mxu0
    %v1925 = vadd.f32 0.0, %v1924
    %v1926 = vpop.f32.mrf.mxu0
    %1927 = vmatprep.mubr.bf16.mxu0 0
    %1928 = vmatmul.mubr.bf16.gmra.mxu0 %v1865
    %v1929 = vpop.f32.mrf.mxu0
    %v1930 = vadd.f32 0.0, %v1929
    %v1931 = vpop.f32.mrf.mxu0
    %v1932 = vpop.f32.mrf.mxu0
    %v1933 = vadd.f32 0.0, %v1932
    %v1934 = vpop.f32.mrf.mxu0
    %1935 = vmatprep.mubr.bf16.mxu0 0
    %1936 = vmatmul.mubr.bf16.gmra.mxu0 %v1868
    %v1937 = vpop.f32.mrf.mxu0
    %v1938 = vadd.f32 0.0, %v1937
    %v1939 = vpop.f32.mrf.mxu0
    %v1940 = vpop.f32.mrf.mxu0
    %v1941 = vadd.f32 0.0, %v1940
    %v1942 = vpop.f32.mrf.mxu0
    %1943 = vmatprep.mubr.bf16.mxu0 0
    %1944 = vmatmul.mubr.bf16.gmra.mxu0 %v1871
    %v1945 = vpop.f32.mrf.mxu0
    %v1946 = vadd.f32 0.0, %v1945
    %v1947 = vpop.f32.mrf.mxu0
    %v1948 = vpop.f32.mrf.mxu0
    %v1949 = vadd.f32 0.0, %v1948
    %v1950 = vpop.f32.mrf.mxu0
    %1951 = vmatprep.mubr.bf16.mxu0 0
    %1952 = vmatmul.mubr.bf16.gmra.mxu0 %v1874
    %v1953 = vpop.f32.mrf.mxu0
    %v1954 = vadd.f32 0.0, %v1953
    %v1955 = vpop.f32.mrf.mxu0
    %v1956 = vpop.f32.mrf.mxu0
    %v1957 = vadd.f32 0.0, %v1956
    %v1958 = vpop.f32.mrf.mxu0
    %1959 = vmatprep.mubr.bf16.mxu0 0
    %1960 = vmatmul.mubr.bf16.gmra.mxu0 %v1877
    %v1961 = vpop.f32.mrf.mxu0
    %v1962 = vadd.f32 0.0, %v1961
    %v1963 = vpop.f32.mrf.mxu0
    %v1964 = vpop.f32.mrf.mxu0
    %v1965 = vpop.f32.mrf.mxu0
    %1966 = vdwg.mxu0
    %v1967 = vadd.f32 %v1792, %v1914
    %v1968 = vadd.f32 %v1793, %v1917
    %v1969 = vadd.f32 %v1794, %v1922
    %v1970 = vadd.f32 %v1795, %v1925
    %v1971 = vadd.f32 %v1796, %v1930
    %v1972 = vadd.f32 %v1797, %v1933
    %v1973 = vadd.f32 %v1798, %v1938
    %v1974 = vadd.f32 %v1799, %v1941
    %v1975 = vadd.f32 %v1800, %v1946
    %v1976 = vadd.f32 %v1801, %v1949
    %v1977 = vadd.f32 %v1802, %v1954
    %v1978 = vadd.f32 %v1803, %v1957
    %v1979 = vadd.f32 %v1804, %v1962
    %v1980 = vld [vmem:[#allocation2 + $0x8] sm:$0xff]
    %v1981 = vld [vmem:[#allocation2 + $0x10] sm:$0xff]
    %v1982 = vld [vmem:[#allocation2 + $0x18] sm:$0xff]
    %v1983 = vld [vmem:[#allocation2 + $0x20] sm:$0xff]
    %v1984 = vld [vmem:[#allocation2 + $0x28] sm:$0xff]
    %v1985 = vld [vmem:[#allocation2 + $0x30] sm:$0xff]
    %v1986 = vld [vmem:[#allocation2 + $0x38] sm:$0xff]
    %v1987 = vld [vmem:[#allocation2 + $0x40] sm:$0xff]
    %v1988 = vld [vmem:[#allocation2 + $0x48] sm:$0xff]
    %v1989 = vld [vmem:[#allocation2 + $0x50] sm:$0xff]
    %v1990 = vld [vmem:[#allocation2 + $0x58] sm:$0xff]
    %v1991 = vld [vmem:[#allocation2 + $0x60] sm:$0xff]
    %v1992 = vld [vmem:[#allocation2 + $0x68] sm:$0x3]
    %v1993 = vpack.c.bf16 %v1981, %v1980
    %v1994 = vpack.c.bf16 %v1983, %v1982
    %v1995 = vpack.c.bf16 %v1985, %v1984
    %v1996 = vpack.c.bf16 %v1987, %v1986
    %v1997 = vpack.c.bf16 %v1989, %v1988
    %v1998 = vpack.c.bf16 %v1991, %v1990
    %v1999 = vpack.c.bf16 %v1992, %v1992
    %s2000 = scalar_lea.vmem %s3, 128
    %v2001 = vld [vmem:[%s2000] sm:$0xf]
    %v2002 = vld [vmem:[%s2000 + $0x4] sm:$0xf]
    %v2003 = vld [vmem:[%s2000 + $0x8] sm:$0xf]
    %v2004 = vld [vmem:[%s2000 + $0xc] sm:$0xf]
    %v2005 = vld [vmem:[%s2000 + $0x10] sm:$0xf]
    %v2006 = vld [vmem:[%s2000 + $0x14] sm:$0xf]
    %v2007 = vld [vmem:[%s2000 + $0x18] sm:$0xf]
    %v2008 = vld [vmem:[%s2000 + $0x1c] sm:$0xf]
    %v2017 = vunpack.c.l.b16 %v2001
    %v2018 = vunpack.c.l.b16 %v2002
    %v2019 = vunpack.c.l.b16 %v2003
    %v2020 = vunpack.c.l.b16 %v2004
    %v2021 = vunpack.c.l.b16 %v2005
    %v2022 = vunpack.c.l.b16 %v2006
    %v2023 = vunpack.c.l.b16 %v2007
    %v2024 = vunpack.c.l.b16 %v2008
    %v2025 = vpack.c.b16 %v2018, %v2017
    %v2026 = vpack.c.b16 %v2020, %v2019
    %v2027 = vpack.c.b16 %v2022, %v2021
    %v2028 = vpack.c.b16 %v2024, %v2023
    %v2034 = vsel %vm1304, %v1993, 0
    %v2037 = vsel %vm1304, %v1994, 0
    %v2040 = vsel %vm1304, %v1995, 0
    %v2043 = vsel %vm1304, %v1996, 0
    %v2046 = vsel %vm1304, %v1997, 0
    %v2049 = vsel %vm1304, %v1998, 0
    %v2052 = vsel %vm1304, %v1999, 0
    %2054 = vmatprep.subr.bf16.mxu0 0
    %2055 = vmatpush1.bf16.msra.mxu0 0
    %2056 = vmatprep.subr.bf16.mxu0 0
    %2057 = vmatpush1.bf16.msra.mxu0 0
    %2058 = vmatprep.subr.bf16.mxu0 0
    %2059 = vmatpush1.bf16.msra.mxu0 0
    %2060 = vmatprep.subr.bf16.mxu0 0
    %2061 = vmatpush1.bf16.msra.mxu0 0
    %2062 = vmatprep.subr.bf16.mxu0 0
    %2063 = vmatpush1.bf16.msra.mxu0 %v2028
    %2064 = vmatprep.subr.bf16.mxu0 0
    %2065 = vmatpush1.bf16.msra.mxu0 %v2027
    %2066 = vmatprep.subr.bf16.mxu0 0
    %2067 = vmatpush1.bf16.msra.mxu0 %v2026
    %2068 = vmatprep.subr.bf16.mxu0 0
    %2069 = vmatpush1.bf16.msra.mxu0 %v2025
    %2070 = vmatprep.subr.bf16.mxu0 0
    %2071 = vmatpush2.bf16.msra.mxu0 0
    %2072 = vmatprep.subr.bf16.mxu0 0
    %2073 = vmatpush2.bf16.msra.mxu0 0
    %2074 = vmatprep.subr.bf16.mxu0 0
    %2075 = vmatpush2.bf16.msra.mxu0 0
    %2076 = vmatprep.subr.bf16.mxu0 0
    %2077 = vmatpush2.bf16.msra.mxu0 0
    %2078 = vmatprep.subr.bf16.mxu0 0
    %2079 = vmatpush2.bf16.msra.mxu0 0
    %2080 = vmatprep.subr.bf16.mxu0 0
    %2081 = vmatpush2.bf16.msra.mxu0 0
    %2082 = vmatprep.subr.bf16.mxu0 0
    %2083 = vmatpush2.bf16.msra.mxu0 0
    %2084 = vmatprep.subr.bf16.mxu0 0
    %2085 = vmatpush2.bf16.msra.mxu0 0
    %2086 = vmatprep.mubr.bf16.mxu0 0
    %2087 = vmatmul.mubr.bf16.gmra.mxu0 %v2034
    %v2088 = vpop.f32.mrf.mxu0
    %v2089 = vadd.f32 0.0, %v2088
    %v2090 = vpop.f32.mrf.mxu0
    %v2091 = vpop.f32.mrf.mxu0
    %v2092 = vadd.f32 0.0, %v2091
    %v2093 = vpop.f32.mrf.mxu0
    %2094 = vmatprep.mubr.bf16.mxu0 0
    %2095 = vmatmul.mubr.bf16.gmra.mxu0 %v2037
    %v2096 = vpop.f32.mrf.mxu0
    %v2097 = vadd.f32 0.0, %v2096
    %v2098 = vpop.f32.mrf.mxu0
    %v2099 = vpop.f32.mrf.mxu0
    %v2100 = vadd.f32 0.0, %v2099
    %v2101 = vpop.f32.mrf.mxu0
    %2102 = vmatprep.mubr.bf16.mxu0 0
    %2103 = vmatmul.mubr.bf16.gmra.mxu0 %v2040
    %v2104 = vpop.f32.mrf.mxu0
    %v2105 = vadd.f32 0.0, %v2104
    %v2106 = vpop.f32.mrf.mxu0
    %v2107 = vpop.f32.mrf.mxu0
    %v2108 = vadd.f32 0.0, %v2107
    %v2109 = vpop.f32.mrf.mxu0
    %2110 = vmatprep.mubr.bf16.mxu0 0
    %2111 = vmatmul.mubr.bf16.gmra.mxu0 %v2043
    %v2112 = vpop.f32.mrf.mxu0
    %v2113 = vadd.f32 0.0, %v2112
    %v2114 = vpop.f32.mrf.mxu0
    %v2115 = vpop.f32.mrf.mxu0
    %v2116 = vadd.f32 0.0, %v2115
    %v2117 = vpop.f32.mrf.mxu0
    %2118 = vmatprep.mubr.bf16.mxu0 0
    %2119 = vmatmul.mubr.bf16.gmra.mxu0 %v2046
    %v2120 = vpop.f32.mrf.mxu0
    %v2121 = vadd.f32 0.0, %v2120
    %v2122 = vpop.f32.mrf.mxu0
    %v2123 = vpop.f32.mrf.mxu0
    %v2124 = vadd.f32 0.0, %v2123
    %v2125 = vpop.f32.mrf.mxu0
    %2126 = vmatprep.mubr.bf16.mxu0 0
    %2127 = vmatmul.mubr.bf16.gmra.mxu0 %v2049
    %v2128 = vpop.f32.mrf.mxu0
    %v2129 = vadd.f32 0.0, %v2128
    %v2130 = vpop.f32.mrf.mxu0
    %v2131 = vpop.f32.mrf.mxu0
    %v2132 = vadd.f32 0.0, %v2131
    %v2133 = vpop.f32.mrf.mxu0
    %2134 = vmatprep.mubr.bf16.mxu0 0
    %2135 = vmatmul.mubr.bf16.gmra.mxu0 %v2052
    %v2136 = vpop.f32.mrf.mxu0
    %v2137 = vadd.f32 0.0, %v2136
    %v2138 = vpop.f32.mrf.mxu0
    %v2139 = vpop.f32.mrf.mxu0
    %v2140 = vpop.f32.mrf.mxu0
    %2141 = vdwg.mxu0
    %v2142 = vadd.f32 %v1967, %v2089
    %v2143 = vadd.f32 %v1968, %v2092
    %v2144 = vadd.f32 %v1969, %v2097
    %v2145 = vadd.f32 %v1970, %v2100
    %v2146 = vadd.f32 %v1971, %v2105
    %v2147 = vadd.f32 %v1972, %v2108
    %v2148 = vadd.f32 %v1973, %v2113
    %v2149 = vadd.f32 %v1974, %v2116
    %v2150 = vadd.f32 %v1975, %v2121
    %v2151 = vadd.f32 %v1976, %v2124
    %v2152 = vadd.f32 %v1977, %v2129
    %v2153 = vadd.f32 %v1978, %v2132
    %v2154 = vadd.f32 %v1979, %v2137
    %v2155 = vld [vmem:[#allocation2 + $0x9] sm:$0xff]
    %v2156 = vld [vmem:[#allocation2 + $0x11] sm:$0xff]
    %v2157 = vld [vmem:[#allocation2 + $0x19] sm:$0xff]
    %v2158 = vld [vmem:[#allocation2 + $0x21] sm:$0xff]
    %v2159 = vld [vmem:[#allocation2 + $0x29] sm:$0xff]
    %v2160 = vld [vmem:[#allocation2 + $0x31] sm:$0xff]
    %v2161 = vld [vmem:[#allocation2 + $0x39] sm:$0xff]
    %v2162 = vld [vmem:[#allocation2 + $0x41] sm:$0xff]
    %v2163 = vld [vmem:[#allocation2 + $0x49] sm:$0xff]
    %v2164 = vld [vmem:[#allocation2 + $0x51] sm:$0xff]
    %v2165 = vld [vmem:[#allocation2 + $0x59] sm:$0xff]
    %v2166 = vld [vmem:[#allocation2 + $0x61] sm:$0xff]
    %v2167 = vld [vmem:[#allocation2 + $0x69] sm:$0x3]
    %v2168 = vpack.c.bf16 %v2156, %v2155
    %v2169 = vpack.c.bf16 %v2158, %v2157
    %v2170 = vpack.c.bf16 %v2160, %v2159
    %v2171 = vpack.c.bf16 %v2162, %v2161
    %v2172 = vpack.c.bf16 %v2164, %v2163
    %v2173 = vpack.c.bf16 %v2166, %v2165
    %v2174 = vpack.c.bf16 %v2167, %v2167
    %s2175 = scalar_lea.vmem %s3, 160
    %v2176 = vld [vmem:[%s2175] sm:$0xf]
    %v2177 = vld [vmem:[%s2175 + $0x4] sm:$0xf]
    %v2178 = vld [vmem:[%s2175 + $0x8] sm:$0xf]
    %v2179 = vld [vmem:[%s2175 + $0xc] sm:$0xf]
    %v2180 = vld [vmem:[%s2175 + $0x10] sm:$0xf]
    %v2181 = vld [vmem:[%s2175 + $0x14] sm:$0xf]
    %v2182 = vld [vmem:[%s2175 + $0x18] sm:$0xf]
    %v2183 = vld [vmem:[%s2175 + $0x1c] sm:$0xf]
    %v2192 = vunpack.c.l.b16 %v2176
    %v2193 = vunpack.c.l.b16 %v2177
    %v2194 = vunpack.c.l.b16 %v2178
    %v2195 = vunpack.c.l.b16 %v2179
    %v2196 = vunpack.c.l.b16 %v2180
    %v2197 = vunpack.c.l.b16 %v2181
    %v2198 = vunpack.c.l.b16 %v2182
    %v2199 = vunpack.c.l.b16 %v2183
    %v2200 = vpack.c.b16 %v2193, %v2192
    %v2201 = vpack.c.b16 %v2195, %v2194
    %v2202 = vpack.c.b16 %v2197, %v2196
    %v2203 = vpack.c.b16 %v2199, %v2198
    %v2209 = vsel %vm1304, %v2168, 0
    %v2212 = vsel %vm1304, %v2169, 0
    %v2215 = vsel %vm1304, %v2170, 0
    %v2218 = vsel %vm1304, %v2171, 0
    %v2221 = vsel %vm1304, %v2172, 0
    %v2224 = vsel %vm1304, %v2173, 0
    %v2227 = vsel %vm1304, %v2174, 0
    %2229 = vmatprep.subr.bf16.mxu0 0
    %2230 = vmatpush1.bf16.msra.mxu0 0
    %2231 = vmatprep.subr.bf16.mxu0 0
    %2232 = vmatpush1.bf16.msra.mxu0 0
    %2233 = vmatprep.subr.bf16.mxu0 0
    %2234 = vmatpush1.bf16.msra.mxu0 0
    %2235 = vmatprep.subr.bf16.mxu0 0
    %2236 = vmatpush1.bf16.msra.mxu0 0
    %2237 = vmatprep.subr.bf16.mxu0 0
    %2238 = vmatpush1.bf16.msra.mxu0 %v2203
    %2239 = vmatprep.subr.bf16.mxu0 0
    %2240 = vmatpush1.bf16.msra.mxu0 %v2202
    %2241 = vmatprep.subr.bf16.mxu0 0
    %2242 = vmatpush1.bf16.msra.mxu0 %v2201
    %2243 = vmatprep.subr.bf16.mxu0 0
    %2244 = vmatpush1.bf16.msra.mxu0 %v2200
    %2245 = vmatprep.subr.bf16.mxu0 0
    %2246 = vmatpush2.bf16.msra.mxu0 0
    %2247 = vmatprep.subr.bf16.mxu0 0
    %2248 = vmatpush2.bf16.msra.mxu0 0
    %2249 = vmatprep.subr.bf16.mxu0 0
    %2250 = vmatpush2.bf16.msra.mxu0 0
    %2251 = vmatprep.subr.bf16.mxu0 0
    %2252 = vmatpush2.bf16.msra.mxu0 0
    %2253 = vmatprep.subr.bf16.mxu0 0
    %2254 = vmatpush2.bf16.msra.mxu0 0
    %2255 = vmatprep.subr.bf16.mxu0 0
    %2256 = vmatpush2.bf16.msra.mxu0 0
    %2257 = vmatprep.subr.bf16.mxu0 0
    %2258 = vmatpush2.bf16.msra.mxu0 0
    %2259 = vmatprep.subr.bf16.mxu0 0
    %2260 = vmatpush2.bf16.msra.mxu0 0
    %2261 = vmatprep.mubr.bf16.mxu0 0
    %2262 = vmatmul.mubr.bf16.gmra.mxu0 %v2209
    %v2263 = vpop.f32.mrf.mxu0
    %v2264 = vadd.f32 0.0, %v2263
    %v2265 = vpop.f32.mrf.mxu0
    %v2266 = vpop.f32.mrf.mxu0
    %v2267 = vadd.f32 0.0, %v2266
    %v2268 = vpop.f32.mrf.mxu0
    %2269 = vmatprep.mubr.bf16.mxu0 0
    %2270 = vmatmul.mubr.bf16.gmra.mxu0 %v2212
    %v2271 = vpop.f32.mrf.mxu0
    %v2272 = vadd.f32 0.0, %v2271
    %v2273 = vpop.f32.mrf.mxu0
    %v2274 = vpop.f32.mrf.mxu0
    %v2275 = vadd.f32 0.0, %v2274
    %v2276 = vpop.f32.mrf.mxu0
    %2277 = vmatprep.mubr.bf16.mxu0 0
    %2278 = vmatmul.mubr.bf16.gmra.mxu0 %v2215
    %v2279 = vpop.f32.mrf.mxu0
    %v2280 = vadd.f32 0.0, %v2279
    %v2281 = vpop.f32.mrf.mxu0
    %v2282 = vpop.f32.mrf.mxu0
    %v2283 = vadd.f32 0.0, %v2282
    %v2284 = vpop.f32.mrf.mxu0
    %2285 = vmatprep.mubr.bf16.mxu0 0
    %2286 = vmatmul.mubr.bf16.gmra.mxu0 %v2218
    %v2287 = vpop.f32.mrf.mxu0
    %v2288 = vadd.f32 0.0, %v2287
    %v2289 = vpop.f32.mrf.mxu0
    %v2290 = vpop.f32.mrf.mxu0
    %v2291 = vadd.f32 0.0, %v2290
    %v2292 = vpop.f32.mrf.mxu0
    %2293 = vmatprep.mubr.bf16.mxu0 0
    %2294 = vmatmul.mubr.bf16.gmra.mxu0 %v2221
    %v2295 = vpop.f32.mrf.mxu0
    %v2296 = vadd.f32 0.0, %v2295
    %v2297 = vpop.f32.mrf.mxu0
    %v2298 = vpop.f32.mrf.mxu0
    %v2299 = vadd.f32 0.0, %v2298
    %v2300 = vpop.f32.mrf.mxu0
    %2301 = vmatprep.mubr.bf16.mxu0 0
    %2302 = vmatmul.mubr.bf16.gmra.mxu0 %v2224
    %v2303 = vpop.f32.mrf.mxu0
    %v2304 = vadd.f32 0.0, %v2303
    %v2305 = vpop.f32.mrf.mxu0
    %v2306 = vpop.f32.mrf.mxu0
    %v2307 = vadd.f32 0.0, %v2306
    %v2308 = vpop.f32.mrf.mxu0
    %2309 = vmatprep.mubr.bf16.mxu0 0
    %2310 = vmatmul.mubr.bf16.gmra.mxu0 %v2227
    %v2311 = vpop.f32.mrf.mxu0
    %v2312 = vadd.f32 0.0, %v2311
    %v2313 = vpop.f32.mrf.mxu0
    %v2314 = vpop.f32.mrf.mxu0
    %v2315 = vpop.f32.mrf.mxu0
    %2316 = vdwg.mxu0
    %v2317 = vadd.f32 %v2142, %v2264
    %v2318 = vadd.f32 %v2143, %v2267
    %v2319 = vadd.f32 %v2144, %v2272
    %v2320 = vadd.f32 %v2145, %v2275
    %v2321 = vadd.f32 %v2146, %v2280
    %v2322 = vadd.f32 %v2147, %v2283
    %v2323 = vadd.f32 %v2148, %v2288
    %v2324 = vadd.f32 %v2149, %v2291
    %v2325 = vadd.f32 %v2150, %v2296
    %v2326 = vadd.f32 %v2151, %v2299
    %v2327 = vadd.f32 %v2152, %v2304
    %v2328 = vadd.f32 %v2153, %v2307
    %v2329 = vadd.f32 %v2154, %v2312
    %v2330 = vld [vmem:[#allocation2 + $0xe] sm:$0xff]
    %v2331 = vld [vmem:[#allocation2 + $0x16] sm:$0xff]
    %v2332 = vld [vmem:[#allocation2 + $0x1e] sm:$0xff]
    %v2333 = vld [vmem:[#allocation2 + $0x26] sm:$0xff]
    %v2334 = vld [vmem:[#allocation2 + $0x2e] sm:$0xff]
    %v2335 = vld [vmem:[#allocation2 + $0x36] sm:$0xff]
    %v2336 = vld [vmem:[#allocation2 + $0x3e] sm:$0xff]
    %v2337 = vld [vmem:[#allocation2 + $0x46] sm:$0xff]
    %v2338 = vld [vmem:[#allocation2 + $0x4e] sm:$0xff]
    %v2339 = vld [vmem:[#allocation2 + $0x56] sm:$0xff]
    %v2340 = vld [vmem:[#allocation2 + $0x5e] sm:$0xff]
    %v2341 = vld [vmem:[#allocation2 + $0x66] sm:$0xff]
    %v2342 = vld [vmem:[#allocation2 + $0x6e] sm:$0x3]
    %v2343 = vpack.c.bf16 %v2331, %v2330
    %v2344 = vpack.c.bf16 %v2333, %v2332
    %v2345 = vpack.c.bf16 %v2335, %v2334
    %v2346 = vpack.c.bf16 %v2337, %v2336
    %v2347 = vpack.c.bf16 %v2339, %v2338
    %v2348 = vpack.c.bf16 %v2341, %v2340
    %v2349 = vpack.c.bf16 %v2342, %v2342
    %s2350 = scalar_lea.vmem %s3, 192
    %v2351 = vld [vmem:[%s2350] sm:$0xf]
    %v2352 = vld [vmem:[%s2350 + $0x4] sm:$0xf]
    %v2353 = vld [vmem:[%s2350 + $0x8] sm:$0xf]
    %v2354 = vld [vmem:[%s2350 + $0xc] sm:$0xf]
    %v2355 = vld [vmem:[%s2350 + $0x10] sm:$0xf]
    %v2356 = vld [vmem:[%s2350 + $0x14] sm:$0xf]
    %v2357 = vld [vmem:[%s2350 + $0x18] sm:$0xf]
    %v2358 = vld [vmem:[%s2350 + $0x1c] sm:$0xf]
    %v2367 = vunpack.c.l.b16 %v2351
    %v2368 = vunpack.c.l.b16 %v2352
    %v2369 = vunpack.c.l.b16 %v2353
    %v2370 = vunpack.c.l.b16 %v2354
    %v2371 = vunpack.c.l.b16 %v2355
    %v2372 = vunpack.c.l.b16 %v2356
    %v2373 = vunpack.c.l.b16 %v2357
    %v2374 = vunpack.c.l.b16 %v2358
    %v2375 = vpack.c.b16 %v2368, %v2367
    %v2376 = vpack.c.b16 %v2370, %v2369
    %v2377 = vpack.c.b16 %v2372, %v2371
    %v2378 = vpack.c.b16 %v2374, %v2373
    %v2384 = vsel %vm1304, %v2343, 0
    %v2387 = vsel %vm1304, %v2344, 0
    %v2390 = vsel %vm1304, %v2345, 0
    %v2393 = vsel %vm1304, %v2346, 0
    %v2396 = vsel %vm1304, %v2347, 0
    %v2399 = vsel %vm1304, %v2348, 0
    %v2402 = vsel %vm1304, %v2349, 0
    %2404 = vmatprep.subr.bf16.mxu0 0
    %2405 = vmatpush1.bf16.msra.mxu0 0
    %2406 = vmatprep.subr.bf16.mxu0 0
    %2407 = vmatpush1.bf16.msra.mxu0 0
    %2408 = vmatprep.subr.bf16.mxu0 0
    %2409 = vmatpush1.bf16.msra.mxu0 0
    %2410 = vmatprep.subr.bf16.mxu0 0
    %2411 = vmatpush1.bf16.msra.mxu0 0
    %2412 = vmatprep.subr.bf16.mxu0 0
    %2413 = vmatpush1.bf16.msra.mxu0 %v2378
    %2414 = vmatprep.subr.bf16.mxu0 0
    %2415 = vmatpush1.bf16.msra.mxu0 %v2377
    %2416 = vmatprep.subr.bf16.mxu0 0
    %2417 = vmatpush1.bf16.msra.mxu0 %v2376
    %2418 = vmatprep.subr.bf16.mxu0 0
    %2419 = vmatpush1.bf16.msra.mxu0 %v2375
    %2420 = vmatprep.subr.bf16.mxu0 0
    %2421 = vmatpush2.bf16.msra.mxu0 0
    %2422 = vmatprep.subr.bf16.mxu0 0
    %2423 = vmatpush2.bf16.msra.mxu0 0
    %2424 = vmatprep.subr.bf16.mxu0 0
    %2425 = vmatpush2.bf16.msra.mxu0 0
    %2426 = vmatprep.subr.bf16.mxu0 0
    %2427 = vmatpush2.bf16.msra.mxu0 0
    %2428 = vmatprep.subr.bf16.mxu0 0
    %2429 = vmatpush2.bf16.msra.mxu0 0
    %2430 = vmatprep.subr.bf16.mxu0 0
    %2431 = vmatpush2.bf16.msra.mxu0 0
    %2432 = vmatprep.subr.bf16.mxu0 0
    %2433 = vmatpush2.bf16.msra.mxu0 0
    %2434 = vmatprep.subr.bf16.mxu0 0
    %2435 = vmatpush2.bf16.msra.mxu0 0
    %2436 = vmatprep.mubr.bf16.mxu0 0
    %2437 = vmatmul.mubr.bf16.gmra.mxu0 %v2384
    %v2438 = vpop.f32.mrf.mxu0
    %v2439 = vadd.f32 0.0, %v2438
    %v2440 = vpop.f32.mrf.mxu0
    %v2441 = vpop.f32.mrf.mxu0
    %v2442 = vadd.f32 0.0, %v2441
    %v2443 = vpop.f32.mrf.mxu0
    %2444 = vmatprep.mubr.bf16.mxu0 0
    %2445 = vmatmul.mubr.bf16.gmra.mxu0 %v2387
    %v2446 = vpop.f32.mrf.mxu0
    %v2447 = vadd.f32 0.0, %v2446
    %v2448 = vpop.f32.mrf.mxu0
    %v2449 = vpop.f32.mrf.mxu0
    %v2450 = vadd.f32 0.0, %v2449
    %v2451 = vpop.f32.mrf.mxu0
    %2452 = vmatprep.mubr.bf16.mxu0 0
    %2453 = vmatmul.mubr.bf16.gmra.mxu0 %v2390
    %v2454 = vpop.f32.mrf.mxu0
    %v2455 = vadd.f32 0.0, %v2454
    %v2456 = vpop.f32.mrf.mxu0
    %v2457 = vpop.f32.mrf.mxu0
    %v2458 = vadd.f32 0.0, %v2457
    %v2459 = vpop.f32.mrf.mxu0
    %2460 = vmatprep.mubr.bf16.mxu0 0
    %2461 = vmatmul.mubr.bf16.gmra.mxu0 %v2393
    %v2462 = vpop.f32.mrf.mxu0
    %v2463 = vadd.f32 0.0, %v2462
    %v2464 = vpop.f32.mrf.mxu0
    %v2465 = vpop.f32.mrf.mxu0
    %v2466 = vadd.f32 0.0, %v2465
    %v2467 = vpop.f32.mrf.mxu0
    %2468 = vmatprep.mubr.bf16.mxu0 0
    %2469 = vmatmul.mubr.bf16.gmra.mxu0 %v2396
    %v2470 = vpop.f32.mrf.mxu0
    %v2471 = vadd.f32 0.0, %v2470
    %v2472 = vpop.f32.mrf.mxu0
    %v2473 = vpop.f32.mrf.mxu0
    %v2474 = vadd.f32 0.0, %v2473
    %v2475 = vpop.f32.mrf.mxu0
    %2476 = vmatprep.mubr.bf16.mxu0 0
    %2477 = vmatmul.mubr.bf16.gmra.mxu0 %v2399
    %v2478 = vpop.f32.mrf.mxu0
    %v2479 = vadd.f32 0.0, %v2478
    %v2480 = vpop.f32.mrf.mxu0
    %v2481 = vpop.f32.mrf.mxu0
    %v2482 = vadd.f32 0.0, %v2481
    %v2483 = vpop.f32.mrf.mxu0
    %2484 = vmatprep.mubr.bf16.mxu0 0
    %2485 = vmatmul.mubr.bf16.gmra.mxu0 %v2402
    %v2486 = vpop.f32.mrf.mxu0
    %v2487 = vadd.f32 0.0, %v2486
    %v2488 = vpop.f32.mrf.mxu0
    %v2489 = vpop.f32.mrf.mxu0
    %v2490 = vpop.f32.mrf.mxu0
    %2491 = vdwg.mxu0
    %v2492 = vadd.f32 %v2317, %v2439
    %v2493 = vadd.f32 %v2318, %v2442
    %v2494 = vadd.f32 %v2319, %v2447
    %v2495 = vadd.f32 %v2320, %v2450
    %v2496 = vadd.f32 %v2321, %v2455
    %v2497 = vadd.f32 %v2322, %v2458
    %v2498 = vadd.f32 %v2323, %v2463
    %v2499 = vadd.f32 %v2324, %v2466
    %v2500 = vadd.f32 %v2325, %v2471
    %v2501 = vadd.f32 %v2326, %v2474
    %v2502 = vadd.f32 %v2327, %v2479
    %v2503 = vadd.f32 %v2328, %v2482
    %v2504 = vadd.f32 %v2329, %v2487
    %v2505 = vld [vmem:[#allocation2 + $0xf] sm:$0xff]
    %v2506 = vld [vmem:[#allocation2 + $0x17] sm:$0xff]
    %v2507 = vld [vmem:[#allocation2 + $0x1f] sm:$0xff]
    %v2508 = vld [vmem:[#allocation2 + $0x27] sm:$0xff]
    %v2509 = vld [vmem:[#allocation2 + $0x2f] sm:$0xff]
    %v2510 = vld [vmem:[#allocation2 + $0x37] sm:$0xff]
    %v2511 = vld [vmem:[#allocation2 + $0x3f] sm:$0xff]
    %v2512 = vld [vmem:[#allocation2 + $0x47] sm:$0xff]
    %v2513 = vld [vmem:[#allocation2 + $0x4f] sm:$0xff]
    %v2514 = vld [vmem:[#allocation2 + $0x57] sm:$0xff]
    %v2515 = vld [vmem:[#allocation2 + $0x5f] sm:$0xff]
    %v2516 = vld [vmem:[#allocation2 + $0x67] sm:$0xff]
    %v2517 = vld [vmem:[#allocation2 + $0x6f] sm:$0x3]
    %v2518 = vpack.c.bf16 %v2506, %v2505
    %v2519 = vpack.c.bf16 %v2508, %v2507
    %v2520 = vpack.c.bf16 %v2510, %v2509
    %v2521 = vpack.c.bf16 %v2512, %v2511
    %v2522 = vpack.c.bf16 %v2514, %v2513
    %v2523 = vpack.c.bf16 %v2516, %v2515
    %v2524 = vpack.c.bf16 %v2517, %v2517
    %s2525 = scalar_lea.vmem %s3, 224
    %v2526 = vld [vmem:[%s2525] sm:$0xf]
    %v2527 = vld [vmem:[%s2525 + $0x4] sm:$0xf]
    %v2528 = vld [vmem:[%s2525 + $0x8] sm:$0xf]
    %v2529 = vld [vmem:[%s2525 + $0xc] sm:$0xf]
    %v2530 = vld [vmem:[%s2525 + $0x10] sm:$0xf]
    %v2531 = vld [vmem:[%s2525 + $0x14] sm:$0xf]
    %v2532 = vld [vmem:[%s2525 + $0x18] sm:$0xf]
    %v2533 = vld [vmem:[%s2525 + $0x1c] sm:$0xf]
    %v2542 = vunpack.c.l.b16 %v2526
    %v2543 = vunpack.c.l.b16 %v2527
    %v2544 = vunpack.c.l.b16 %v2528
    %v2545 = vunpack.c.l.b16 %v2529
    %v2546 = vunpack.c.l.b16 %v2530
    %v2547 = vunpack.c.l.b16 %v2531
    %v2548 = vunpack.c.l.b16 %v2532
    %v2549 = vunpack.c.l.b16 %v2533
    %v2550 = vpack.c.b16 %v2543, %v2542
    %v2551 = vpack.c.b16 %v2545, %v2544
    %v2552 = vpack.c.b16 %v2547, %v2546
    %v2553 = vpack.c.b16 %v2549, %v2548
    %v2559 = vsel %vm1304, %v2518, 0
    %v2562 = vsel %vm1304, %v2519, 0
    %v2565 = vsel %vm1304, %v2520, 0
    %v2568 = vsel %vm1304, %v2521, 0
    %v2571 = vsel %vm1304, %v2522, 0
    %v2574 = vsel %vm1304, %v2523, 0
    %v2577 = vsel %vm1304, %v2524, 0
    %2579 = vmatprep.subr.bf16.mxu0 0
    %2580 = vmatpush1.bf16.msra.mxu0 0
    %2581 = vmatprep.subr.bf16.mxu0 0
    %2582 = vmatpush1.bf16.msra.mxu0 0
    %2583 = vmatprep.subr.bf16.mxu0 0
    %2584 = vmatpush1.bf16.msra.mxu0 0
    %2585 = vmatprep.subr.bf16.mxu0 0
    %2586 = vmatpush1.bf16.msra.mxu0 0
    %2587 = vmatprep.subr.bf16.mxu0 0
    %2588 = vmatpush1.bf16.msra.mxu0 %v2553
    %2589 = vmatprep.subr.bf16.mxu0 0
    %2590 = vmatpush1.bf16.msra.mxu0 %v2552
    %2591 = vmatprep.subr.bf16.mxu0 0
    %2592 = vmatpush1.bf16.msra.mxu0 %v2551
    %2593 = vmatprep.subr.bf16.mxu0 0
    %2594 = vmatpush1.bf16.msra.mxu0 %v2550
    %2595 = vmatprep.subr.bf16.mxu0 0
    %2596 = vmatpush2.bf16.msra.mxu0 0
    %2597 = vmatprep.subr.bf16.mxu0 0
    %2598 = vmatpush2.bf16.msra.mxu0 0
    %2599 = vmatprep.subr.bf16.mxu0 0
    %2600 = vmatpush2.bf16.msra.mxu0 0
    %2601 = vmatprep.subr.bf16.mxu0 0
    %2602 = vmatpush2.bf16.msra.mxu0 0
    %2603 = vmatprep.subr.bf16.mxu0 0
    %2604 = vmatpush2.bf16.msra.mxu0 0
    %2605 = vmatprep.subr.bf16.mxu0 0
    %2606 = vmatpush2.bf16.msra.mxu0 0
    %2607 = vmatprep.subr.bf16.mxu0 0
    %2608 = vmatpush2.bf16.msra.mxu0 0
    %2609 = vmatprep.subr.bf16.mxu0 0
    %2610 = vmatpush2.bf16.msra.mxu0 0
    %2611 = vmatprep.mubr.bf16.mxu0 0
    %2612 = vmatmul.mubr.bf16.gmra.mxu0 %v2559
    %v2613 = vpop.f32.mrf.mxu0
    %v2614 = vadd.f32 0.0, %v2613
    %v2615 = vpop.f32.mrf.mxu0
    %v2616 = vpop.f32.mrf.mxu0
    %v2617 = vadd.f32 0.0, %v2616
    %v2618 = vpop.f32.mrf.mxu0
    %2619 = vmatprep.mubr.bf16.mxu0 0
    %2620 = vmatmul.mubr.bf16.gmra.mxu0 %v2562
    %v2621 = vpop.f32.mrf.mxu0
    %v2622 = vadd.f32 0.0, %v2621
    %v2623 = vpop.f32.mrf.mxu0
    %v2624 = vpop.f32.mrf.mxu0
    %v2625 = vadd.f32 0.0, %v2624
    %v2626 = vpop.f32.mrf.mxu0
    %2627 = vmatprep.mubr.bf16.mxu0 0
    %2628 = vmatmul.mubr.bf16.gmra.mxu0 %v2565
    %v2629 = vpop.f32.mrf.mxu0
    %v2630 = vadd.f32 0.0, %v2629
    %v2631 = vpop.f32.mrf.mxu0
    %v2632 = vpop.f32.mrf.mxu0
    %v2633 = vadd.f32 0.0, %v2632
    %v2634 = vpop.f32.mrf.mxu0
    %2635 = vmatprep.mubr.bf16.mxu0 0
    %2636 = vmatmul.mubr.bf16.gmra.mxu0 %v2568
    %v2637 = vpop.f32.mrf.mxu0
    %v2638 = vadd.f32 0.0, %v2637
    %v2639 = vpop.f32.mrf.mxu0
    %v2640 = vpop.f32.mrf.mxu0
    %v2641 = vadd.f32 0.0, %v2640
    %v2642 = vpop.f32.mrf.mxu0
    %2643 = vmatprep.mubr.bf16.mxu0 0
    %2644 = vmatmul.mubr.bf16.gmra.mxu0 %v2571
    %v2645 = vpop.f32.mrf.mxu0
    %v2646 = vadd.f32 0.0, %v2645
    %v2647 = vpop.f32.mrf.mxu0
    %v2648 = vpop.f32.mrf.mxu0
    %v2649 = vadd.f32 0.0, %v2648
    %v2650 = vpop.f32.mrf.mxu0
    %2651 = vmatprep.mubr.bf16.mxu0 0
    %2652 = vmatmul.mubr.bf16.gmra.mxu0 %v2574
    %v2653 = vpop.f32.mrf.mxu0
    %v2654 = vadd.f32 0.0, %v2653
    %v2655 = vpop.f32.mrf.mxu0
    %v2656 = vpop.f32.mrf.mxu0
    %v2657 = vadd.f32 0.0, %v2656
    %v2658 = vpop.f32.mrf.mxu0
    %2659 = vmatprep.mubr.bf16.mxu0 0
    %2660 = vmatmul.mubr.bf16.gmra.mxu0 %v2577
    %v2661 = vpop.f32.mrf.mxu0
    %v2662 = vadd.f32 0.0, %v2661
    %v2663 = vpop.f32.mrf.mxu0
    %v2664 = vpop.f32.mrf.mxu0
    %v2665 = vpop.f32.mrf.mxu0
    %2666 = vdwg.mxu0
    %v2667 = vadd.f32 %v2492, %v2614
    %v2668 = vadd.f32 %v2493, %v2617
    %v2669 = vadd.f32 %v2494, %v2622
    %v2670 = vadd.f32 %v2495, %v2625
    %v2671 = vadd.f32 %v2496, %v2630
    %v2672 = vadd.f32 %v2497, %v2633
    %v2673 = vadd.f32 %v2498, %v2638
    %v2674 = vadd.f32 %v2499, %v2641
    %v2675 = vadd.f32 %v2500, %v2646
    %v2676 = vadd.f32 %v2501, %v2649
    %v2677 = vadd.f32 %v2502, %v2654
    %v2678 = vadd.f32 %v2503, %v2657
    %v2679 = vadd.f32 %v2504, %v2662
    %v2680 = vld [vmem:[#allocation2 + $0x10] sm:$0xff]
    %v2681 = vld [vmem:[#allocation2 + $0x18] sm:$0xff]
    %v2682 = vld [vmem:[#allocation2 + $0x20] sm:$0xff]
    %v2683 = vld [vmem:[#allocation2 + $0x28] sm:$0xff]
    %v2684 = vld [vmem:[#allocation2 + $0x30] sm:$0xff]
    %v2685 = vld [vmem:[#allocation2 + $0x38] sm:$0xff]
    %v2686 = vld [vmem:[#allocation2 + $0x40] sm:$0xff]
    %v2687 = vld [vmem:[#allocation2 + $0x48] sm:$0xff]
    %v2688 = vld [vmem:[#allocation2 + $0x50] sm:$0xff]
    %v2689 = vld [vmem:[#allocation2 + $0x58] sm:$0xff]
    %v2690 = vld [vmem:[#allocation2 + $0x60] sm:$0xff]
    %v2691 = vld [vmem:[#allocation2 + $0x68] sm:$0xff]
    %v2692 = vld [vmem:[#allocation2 + $0x70] sm:$0x3]
    %v2693 = vpack.c.bf16 %v2681, %v2680
    %v2694 = vpack.c.bf16 %v2683, %v2682
    %v2695 = vpack.c.bf16 %v2685, %v2684
    %v2696 = vpack.c.bf16 %v2687, %v2686
    %v2697 = vpack.c.bf16 %v2689, %v2688
    %v2698 = vpack.c.bf16 %v2691, %v2690
    %v2699 = vpack.c.bf16 %v2692, %v2692
    %s2700 = scalar_lea.vmem %s3, 256
    %v2701 = vld [vmem:[%s2700] sm:$0xf]
    %v2702 = vld [vmem:[%s2700 + $0x4] sm:$0xf]
    %v2703 = vld [vmem:[%s2700 + $0x8] sm:$0xf]
    %v2704 = vld [vmem:[%s2700 + $0xc] sm:$0xf]
    %v2705 = vld [vmem:[%s2700 + $0x10] sm:$0xf]
    %v2706 = vld [vmem:[%s2700 + $0x14] sm:$0xf]
    %v2707 = vld [vmem:[%s2700 + $0x18] sm:$0xf]
    %v2708 = vld [vmem:[%s2700 + $0x1c] sm:$0xf]
    %v2717 = vunpack.c.l.b16 %v2701
    %v2718 = vunpack.c.l.b16 %v2702
    %v2719 = vunpack.c.l.b16 %v2703
    %v2720 = vunpack.c.l.b16 %v2704
    %v2721 = vunpack.c.l.b16 %v2705
    %v2722 = vunpack.c.l.b16 %v2706
    %v2723 = vunpack.c.l.b16 %v2707
    %v2724 = vunpack.c.l.b16 %v2708
    %v2725 = vpack.c.b16 %v2718, %v2717
    %v2726 = vpack.c.b16 %v2720, %v2719
    %v2727 = vpack.c.b16 %v2722, %v2721
    %v2728 = vpack.c.b16 %v2724, %v2723
    %v2734 = vsel %vm1304, %v2693, 0
    %v2737 = vsel %vm1304, %v2694, 0
    %v2740 = vsel %vm1304, %v2695, 0
    %v2743 = vsel %vm1304, %v2696, 0
    %v2746 = vsel %vm1304, %v2697, 0
    %v2749 = vsel %vm1304, %v2698, 0
    %v2752 = vsel %vm1304, %v2699, 0
    %2754 = vmatprep.subr.bf16.mxu0 0
    %2755 = vmatpush1.bf16.msra.mxu0 0
    %2756 = vmatprep.subr.bf16.mxu0 0
    %2757 = vmatpush1.bf16.msra.mxu0 0
    %2758 = vmatprep.subr.bf16.mxu0 0
    %2759 = vmatpush1.bf16.msra.mxu0 0
    %2760 = vmatprep.subr.bf16.mxu0 0
    %2761 = vmatpush1.bf16.msra.mxu0 0
    %2762 = vmatprep.subr.bf16.mxu0 0
    %2763 = vmatpush1.bf16.msra.mxu0 %v2728
    %2764 = vmatprep.subr.bf16.mxu0 0
    %2765 = vmatpush1.bf16.msra.mxu0 %v2727
    %2766 = vmatprep.subr.bf16.mxu0 0
    %2767 = vmatpush1.bf16.msra.mxu0 %v2726
    %2768 = vmatprep.subr.bf16.mxu0 0
    %2769 = vmatpush1.bf16.msra.mxu0 %v2725
    %2770 = vmatprep.subr.bf16.mxu0 0
    %2771 = vmatpush2.bf16.msra.mxu0 0
    %2772 = vmatprep.subr.bf16.mxu0 0
    %2773 = vmatpush2.bf16.msra.mxu0 0
    %2774 = vmatprep.subr.bf16.mxu0 0
    %2775 = vmatpush2.bf16.msra.mxu0 0
    %2776 = vmatprep.subr.bf16.mxu0 0
    %2777 = vmatpush2.bf16.msra.mxu0 0
    %2778 = vmatprep.subr.bf16.mxu0 0
    %2779 = vmatpush2.bf16.msra.mxu0 0
    %2780 = vmatprep.subr.bf16.mxu0 0
    %2781 = vmatpush2.bf16.msra.mxu0 0
    %2782 = vmatprep.subr.bf16.mxu0 0
    %2783 = vmatpush2.bf16.msra.mxu0 0
    %2784 = vmatprep.subr.bf16.mxu0 0
    %2785 = vmatpush2.bf16.msra.mxu0 0
    %2786 = vmatprep.mubr.bf16.mxu0 0
    %2787 = vmatmul.mubr.bf16.gmra.mxu0 %v2734
    %v2788 = vpop.f32.mrf.mxu0
    %v2789 = vadd.f32 0.0, %v2788
    %v2790 = vpop.f32.mrf.mxu0
    %v2791 = vpop.f32.mrf.mxu0
    %v2792 = vadd.f32 0.0, %v2791
    %v2793 = vpop.f32.mrf.mxu0
    %2794 = vmatprep.mubr.bf16.mxu0 0
    %2795 = vmatmul.mubr.bf16.gmra.mxu0 %v2737
    %v2796 = vpop.f32.mrf.mxu0
    %v2797 = vadd.f32 0.0, %v2796
    %v2798 = vpop.f32.mrf.mxu0
    %v2799 = vpop.f32.mrf.mxu0
    %v2800 = vadd.f32 0.0, %v2799
    %v2801 = vpop.f32.mrf.mxu0
    %2802 = vmatprep.mubr.bf16.mxu0 0
    %2803 = vmatmul.mubr.bf16.gmra.mxu0 %v2740
    %v2804 = vpop.f32.mrf.mxu0
    %v2805 = vadd.f32 0.0, %v2804
    %v2806 = vpop.f32.mrf.mxu0
    %v2807 = vpop.f32.mrf.mxu0
    %v2808 = vadd.f32 0.0, %v2807
    %v2809 = vpop.f32.mrf.mxu0
    %2810 = vmatprep.mubr.bf16.mxu0 0
    %2811 = vmatmul.mubr.bf16.gmra.mxu0 %v2743
    %v2812 = vpop.f32.mrf.mxu0
    %v2813 = vadd.f32 0.0, %v2812
    %v2814 = vpop.f32.mrf.mxu0
    %v2815 = vpop.f32.mrf.mxu0
    %v2816 = vadd.f32 0.0, %v2815
    %v2817 = vpop.f32.mrf.mxu0
    %2818 = vmatprep.mubr.bf16.mxu0 0
    %2819 = vmatmul.mubr.bf16.gmra.mxu0 %v2746
    %v2820 = vpop.f32.mrf.mxu0
    %v2821 = vadd.f32 0.0, %v2820
    %v2822 = vpop.f32.mrf.mxu0
    %v2823 = vpop.f32.mrf.mxu0
    %v2824 = vadd.f32 0.0, %v2823
    %v2825 = vpop.f32.mrf.mxu0
    %2826 = vmatprep.mubr.bf16.mxu0 0
    %2827 = vmatmul.mubr.bf16.gmra.mxu0 %v2749
    %v2828 = vpop.f32.mrf.mxu0
    %v2829 = vadd.f32 0.0, %v2828
    %v2830 = vpop.f32.mrf.mxu0
    %v2831 = vpop.f32.mrf.mxu0
    %v2832 = vadd.f32 0.0, %v2831
    %v2833 = vpop.f32.mrf.mxu0
    %2834 = vmatprep.mubr.bf16.mxu0 0
    %2835 = vmatmul.mubr.bf16.gmra.mxu0 %v2752
    %v2836 = vpop.f32.mrf.mxu0
    %v2837 = vadd.f32 0.0, %v2836
    %v2838 = vpop.f32.mrf.mxu0
    %v2839 = vpop.f32.mrf.mxu0
    %v2840 = vpop.f32.mrf.mxu0
    %2841 = vdwg.mxu0
    %v2842 = vadd.f32 %v2667, %v2789
    %v2843 = vadd.f32 %v2668, %v2792
    %v2844 = vadd.f32 %v2669, %v2797
    %v2845 = vadd.f32 %v2670, %v2800
    %v2846 = vadd.f32 %v2671, %v2805
    %v2847 = vadd.f32 %v2672, %v2808
    %v2848 = vadd.f32 %v2673, %v2813
    %v2849 = vadd.f32 %v2674, %v2816
    %v2850 = vadd.f32 %v2675, %v2821
    %v2851 = vadd.f32 %v2676, %v2824
    %v2852 = vadd.f32 %v2677, %v2829
    %v2853 = vadd.f32 %v2678, %v2832
    %v2854 = vadd.f32 %v2679, %v2837
    %v2855 = vld [vmem:[%s4] sm:$0x1]
    %v2857 = vlaneseq
    %v2858 = vshrl.u32 %v2857, 7
    %v2859 = vsub.s32 0, %v2858
    %v2860 = vrot.slane %v2855, %v2859
    %v2862 = vadd.f32 %v2842, %v2860
    %v2863 = vadd.f32 %v2843, %v2860
    %v2864 = vadd.f32 %v2844, %v2860
    %v2865 = vadd.f32 %v2845, %v2860
    %v2866 = vadd.f32 %v2846, %v2860
    %v2867 = vadd.f32 %v2847, %v2860
    %v2868 = vadd.f32 %v2848, %v2860
    %v2869 = vadd.f32 %v2849, %v2860
    %v2870 = vadd.f32 %v2850, %v2860
    %v2871 = vadd.f32 %v2851, %v2860
    %v2872 = vadd.f32 %v2852, %v2860
    %v2873 = vadd.f32 %v2853, %v2860
    %v2874 = vadd.f32 %v2854, %v2860
    %2888 = vrot.lane.b32.xlu0 %v2862, 96
    %v2889 = vpop.permute.xlu0 %2888
    %2890 = vrot.lane.b32.xlu0 %v2863, 96
    %v2891 = vpop.permute.xlu0 %2890
    %2892 = vrot.lane.b32.xlu0 %v2864, 96
    %v2893 = vpop.permute.xlu0 %2892
    %2894 = vrot.lane.b32.xlu0 %v2865, 96
    %v2895 = vpop.permute.xlu0 %2894
    %2896 = vrot.lane.b32.xlu0 %v2866, 96
    %v2897 = vpop.permute.xlu0 %2896
    %2898 = vrot.lane.b32.xlu0 %v2867, 96
    %v2899 = vpop.permute.xlu0 %2898
    %2900 = vrot.lane.b32.xlu0 %v2868, 96
    %v2901 = vpop.permute.xlu0 %2900
    %2902 = vrot.lane.b32.xlu0 %v2869, 96
    %v2903 = vpop.permute.xlu0 %2902
    %2904 = vrot.lane.b32.xlu0 %v2870, 96
    %v2905 = vpop.permute.xlu0 %2904
    %2906 = vrot.lane.b32.xlu0 %v2871, 96
    %v2907 = vpop.permute.xlu0 %2906
    %2908 = vrot.lane.b32.xlu0 %v2872, 96
    %v2909 = vpop.permute.xlu0 %2908
    %2910 = vrot.lane.b32.xlu0 %v2873, 96
    %v2911 = vpop.permute.xlu0 %2910
    %2912 = vrot.lane.b32.xlu0 %v2874, 96
    %v2913 = vpop.permute.xlu0 %2912
    %v2927 = vmax.f32 %v2862, %v2889
    %v2928 = vmax.f32 %v2863, %v2891
    %v2929 = vmax.f32 %v2864, %v2893
    %v2930 = vmax.f32 %v2865, %v2895
    %v2931 = vmax.f32 %v2866, %v2897
    %v2932 = vmax.f32 %v2867, %v2899
    %v2933 = vmax.f32 %v2868, %v2901
    %v2934 = vmax.f32 %v2869, %v2903
    %v2935 = vmax.f32 %v2870, %v2905
    %v2936 = vmax.f32 %v2871, %v2907
    %v2937 = vmax.f32 %v2872, %v2909
    %v2938 = vmax.f32 %v2873, %v2911
    %v2939 = vmax.f32 %v2874, %v2913
    %2940 = vrot.lane.b32.xlu0 %v2862, 64
    %v2941 = vpop.permute.xlu0 %2940
    %2942 = vrot.lane.b32.xlu0 %v2863, 64
    %v2943 = vpop.permute.xlu0 %2942
    %2944 = vrot.lane.b32.xlu0 %v2864, 64
    %v2945 = vpop.permute.xlu0 %2944
    %2946 = vrot.lane.b32.xlu0 %v2865, 64
    %v2947 = vpop.permute.xlu0 %2946
    %2948 = vrot.lane.b32.xlu0 %v2866, 64
    %v2949 = vpop.permute.xlu0 %2948
    %2950 = vrot.lane.b32.xlu0 %v2867, 64
    %v2951 = vpop.permute.xlu0 %2950
    %2952 = vrot.lane.b32.xlu0 %v2868, 64
    %v2953 = vpop.permute.xlu0 %2952
    %2954 = vrot.lane.b32.xlu0 %v2869, 64
    %v2955 = vpop.permute.xlu0 %2954
    %2956 = vrot.lane.b32.xlu0 %v2870, 64
    %v2957 = vpop.permute.xlu0 %2956
    %2958 = vrot.lane.b32.xlu0 %v2871, 64
    %v2959 = vpop.permute.xlu0 %2958
    %2960 = vrot.lane.b32.xlu0 %v2872, 64
    %v2961 = vpop.permute.xlu0 %2960
    %2962 = vrot.lane.b32.xlu0 %v2873, 64
    %v2963 = vpop.permute.xlu0 %2962
    %2964 = vrot.lane.b32.xlu0 %v2874, 64
    %v2965 = vpop.permute.xlu0 %2964
    %v2979 = vmax.f32 %v2927, %v2941
    %v2980 = vmax.f32 %v2928, %v2943
    %v2981 = vmax.f32 %v2929, %v2945
    %v2982 = vmax.f32 %v2930, %v2947
    %v2983 = vmax.f32 %v2931, %v2949
    %v2984 = vmax.f32 %v2932, %v2951
    %v2985 = vmax.f32 %v2933, %v2953
    %v2986 = vmax.f32 %v2934, %v2955
    %v2987 = vmax.f32 %v2935, %v2957
    %v2988 = vmax.f32 %v2936, %v2959
    %v2989 = vmax.f32 %v2937, %v2961
    %v2990 = vmax.f32 %v2938, %v2963
    %v2991 = vmax.f32 %v2939, %v2965
    %2992 = vrot.lane.b32.xlu0 %v2862, 32
    %v2993 = vpop.permute.xlu0 %2992
    %2994 = vrot.lane.b32.xlu0 %v2863, 32
    %v2995 = vpop.permute.xlu0 %2994
    %2996 = vrot.lane.b32.xlu0 %v2864, 32
    %v2997 = vpop.permute.xlu0 %2996
    %2998 = vrot.lane.b32.xlu0 %v2865, 32
    %v2999 = vpop.permute.xlu0 %2998
    %3000 = vrot.lane.b32.xlu0 %v2866, 32
    %v3001 = vpop.permute.xlu0 %3000
    %3002 = vrot.lane.b32.xlu0 %v2867, 32
    %v3003 = vpop.permute.xlu0 %3002
    %3004 = vrot.lane.b32.xlu0 %v2868, 32
    %v3005 = vpop.permute.xlu0 %3004
    %3006 = vrot.lane.b32.xlu0 %v2869, 32
    %v3007 = vpop.permute.xlu0 %3006
    %3008 = vrot.lane.b32.xlu0 %v2870, 32
    %v3009 = vpop.permute.xlu0 %3008
    %3010 = vrot.lane.b32.xlu0 %v2871, 32
    %v3011 = vpop.permute.xlu0 %3010
    %3012 = vrot.lane.b32.xlu0 %v2872, 32
    %v3013 = vpop.permute.xlu0 %3012
    %3014 = vrot.lane.b32.xlu0 %v2873, 32
    %v3015 = vpop.permute.xlu0 %3014
    %3016 = vrot.lane.b32.xlu0 %v2874, 32
    %v3017 = vpop.permute.xlu0 %3016
    %v3031 = vmax.f32 %v2979, %v2993
    %v3032 = vmax.f32 %v2980, %v2995
    %v3033 = vmax.f32 %v2981, %v2997
    %v3034 = vmax.f32 %v2982, %v2999
    %v3035 = vmax.f32 %v2983, %v3001
    %v3036 = vmax.f32 %v2984, %v3003
    %v3037 = vmax.f32 %v2985, %v3005
    %v3038 = vmax.f32 %v2986, %v3007
    %v3039 = vmax.f32 %v2987, %v3009
    %v3040 = vmax.f32 %v2988, %v3011
    %v3041 = vmax.f32 %v2989, %v3013
    %v3042 = vmax.f32 %v2990, %v3015
    %v3043 = vmax.f32 %v2991, %v3017
    %v3044 = vmax.f32 %v3031, 0.0
    %v3045 = vmax.f32 %v3032, 0.0
    %v3046 = vmax.f32 %v3033, 0.0
    %v3047 = vmax.f32 %v3034, 0.0
    %v3048 = vmax.f32 %v3035, 0.0
    %v3049 = vmax.f32 %v3036, 0.0
    %v3050 = vmax.f32 %v3037, 0.0
    %v3051 = vmax.f32 %v3038, 0.0
    %v3052 = vmax.f32 %v3039, 0.0
    %v3053 = vmax.f32 %v3040, 0.0
    %v3054 = vmax.f32 %v3041, 0.0
    %v3055 = vmax.f32 %v3042, 0.0
    %v3056 = vmax.f32 %v3043, 0.0
    %vm3057 = vcmask 261120
    %3058 = vst.msk [vmem:[#allocation3] sm:$0xff] %vm3057, %v3044
    %3059 = vst.msk [vmem:[#allocation3 + $0x8] sm:$0xff] %vm3057, %v3045
    %3060 = vst.msk [vmem:[#allocation3 + $0x10] sm:$0xff] %vm3057, %v3046
    %3061 = vst.msk [vmem:[#allocation3 + $0x18] sm:$0xff] %vm3057, %v3047
    %3062 = vst.msk [vmem:[#allocation3 + $0x20] sm:$0xff] %vm3057, %v3048
    %3063 = vst.msk [vmem:[#allocation3 + $0x28] sm:$0xff] %vm3057, %v3049
    %3064 = vst.msk [vmem:[#allocation3 + $0x30] sm:$0xff] %vm3057, %v3050
    %3065 = vst.msk [vmem:[#allocation3 + $0x38] sm:$0xff] %vm3057, %v3051
    %3066 = vst.msk [vmem:[#allocation3 + $0x40] sm:$0xff] %vm3057, %v3052
    %3067 = vst.msk [vmem:[#allocation3 + $0x48] sm:$0xff] %vm3057, %v3053
    %3068 = vst.msk [vmem:[#allocation3 + $0x50] sm:$0xff] %vm3057, %v3054
    %3069 = vst.msk [vmem:[#allocation3 + $0x58] sm:$0xff] %vm3057, %v3055
    %vm3070 = vcmask 254976
    %3071 = vst.msk [vmem:[#allocation3 + $0x60] sm:$0x3] %vm3070, %v3056
    %3072 = vst.msk [vmem:[#allocation3 + $0x62] sm:$0xff] %vm3057, 0.0
    %3073 = vst.msk [vmem:[#allocation3 + $0x6a] sm:$0xff] %vm3057, 0.0
    %3074 = vst.msk [vmem:[#allocation3 + $0x72] sm:$0xff] %vm3057, 0.0
    %v3075 = vld [vmem:[#allocation3] sm:$0xff]
    %v3076 = vld [vmem:[#allocation3 + $0x8] sm:$0xff]
    %v3077 = vld [vmem:[#allocation3 + $0x10] sm:$0xff]
    %v3078 = vld [vmem:[#allocation3 + $0x18] sm:$0xff]
    %v3079 = vld [vmem:[#allocation3 + $0x20] sm:$0xff]
    %v3080 = vld [vmem:[#allocation3 + $0x28] sm:$0xff]
    %v3081 = vld [vmem:[#allocation3 + $0x30] sm:$0xff]
    %v3082 = vld [vmem:[#allocation3 + $0x38] sm:$0xff]
    %v3083 = vld [vmem:[#allocation3 + $0x40] sm:$0xff]
    %v3084 = vld [vmem:[#allocation3 + $0x48] sm:$0xff]
    %v3085 = vld [vmem:[#allocation3 + $0x50] sm:$0xff]
    %v3086 = vld [vmem:[#allocation3 + $0x58] sm:$0xff]
    %v3087 = vld [vmem:[#allocation3 + $0x60] sm:$0x3]
    %v3088 = vpack.c.bf16 %v3076, %v3075
    %v3089 = vpack.c.bf16 %v3078, %v3077
    %v3090 = vpack.c.bf16 %v3080, %v3079
    %v3091 = vpack.c.bf16 %v3082, %v3081
    %v3092 = vpack.c.bf16 %v3084, %v3083
    %v3093 = vpack.c.bf16 %v3086, %v3085
    %v3094 = vpack.c.bf16 %v3087, %v3087
    %v3095 = vld [vmem:[%s5] sm:$0xf]
    %v3096 = vld [vmem:[%s5 + $0x4] sm:$0xf]
    %v3097 = vld [vmem:[%s5 + $0x8] sm:$0xf]
    %v3098 = vld [vmem:[%s5 + $0xc] sm:$0xf]
    %v3099 = vld [vmem:[#allocation3 + $0x1] sm:$0xff]
    %v3100 = vld [vmem:[#allocation3 + $0x9] sm:$0xff]
    %v3101 = vld [vmem:[#allocation3 + $0x11] sm:$0xff]
    %v3102 = vld [vmem:[#allocation3 + $0x19] sm:$0xff]
    %v3103 = vld [vmem:[#allocation3 + $0x21] sm:$0xff]
    %v3104 = vld [vmem:[#allocation3 + $0x29] sm:$0xff]
    %v3105 = vld [vmem:[#allocation3 + $0x31] sm:$0xff]
    %v3106 = vld [vmem:[#allocation3 + $0x39] sm:$0xff]
    %v3107 = vld [vmem:[#allocation3 + $0x41] sm:$0xff]
    %v3108 = vld [vmem:[#allocation3 + $0x49] sm:$0xff]
    %v3109 = vld [vmem:[#allocation3 + $0x51] sm:$0xff]
    %v3110 = vld [vmem:[#allocation3 + $0x59] sm:$0xff]
    %v3111 = vld [vmem:[#allocation3 + $0x61] sm:$0x3]
    %v3112 = vpack.c.bf16 %v3100, %v3099
    %v3113 = vpack.c.bf16 %v3102, %v3101
    %v3114 = vpack.c.bf16 %v3104, %v3103
    %v3115 = vpack.c.bf16 %v3106, %v3105
    %v3116 = vpack.c.bf16 %v3108, %v3107
    %v3117 = vpack.c.bf16 %v3110, %v3109
    %v3118 = vpack.c.bf16 %v3111, %v3111
    %s3119 = scalar_lea.vmem %s5, 16
    %v3120 = vld [vmem:[%s3119] sm:$0xf]
    %v3121 = vld [vmem:[%s3119 + $0x4] sm:$0xf]
    %v3122 = vld [vmem:[%s3119 + $0x8] sm:$0xf]
    %v3123 = vld [vmem:[%s3119 + $0xc] sm:$0xf]
    %v3128 = vunpack.c.l.b16 %v3120
    %v3129 = vunpack.c.l.b16 %v3121
    %v3130 = vunpack.c.l.b16 %v3122
    %v3131 = vunpack.c.l.b16 %v3123
    %v3132 = vpack.c.b16 %v3129, %v3128
    %v3133 = vpack.c.b16 %v3131, %v3130
    %v3137 = vsel %vm3057, %v3112, 0
    %v3140 = vsel %vm3057, %v3113, 0
    %v3143 = vsel %vm3057, %v3114, 0
    %v3146 = vsel %vm3057, %v3115, 0
    %v3149 = vsel %vm3057, %v3116, 0
    %v3152 = vsel %vm3057, %v3117, 0
    %v3155 = vsel %vm3057, %v3118, 0
    %3157 = vmatprep.subr.bf16.mxu0 0
    %3158 = vmatpush1.bf16.msra.mxu0 0
    %3159 = vmatprep.subr.bf16.mxu0 0
    %3160 = vmatpush1.bf16.msra.mxu0 0
    %3161 = vmatprep.subr.bf16.mxu0 0
    %3162 = vmatpush1.bf16.msra.mxu0 0
    %3163 = vmatprep.subr.bf16.mxu0 0
    %3164 = vmatpush1.bf16.msra.mxu0 0
    %3165 = vmatprep.subr.bf16.mxu0 0
    %3166 = vmatpush1.bf16.msra.mxu0 0
    %3167 = vmatprep.subr.bf16.mxu0 0
    %3168 = vmatpush1.bf16.msra.mxu0 0
    %3169 = vmatprep.subr.bf16.mxu0 0
    %3170 = vmatpush1.bf16.msra.mxu0 %v3133
    %3171 = vmatprep.subr.bf16.mxu0 0
    %3172 = vmatpush1.bf16.msra.mxu0 %v3132
    %3173 = vmatprep.subr.bf16.mxu0 0
    %3174 = vmatpush2.bf16.msra.mxu0 0
    %3175 = vmatprep.subr.bf16.mxu0 0
    %3176 = vmatpush2.bf16.msra.mxu0 0
    %3177 = vmatprep.subr.bf16.mxu0 0
    %3178 = vmatpush2.bf16.msra.mxu0 0
    %3179 = vmatprep.subr.bf16.mxu0 0
    %3180 = vmatpush2.bf16.msra.mxu0 0
    %3181 = vmatprep.subr.bf16.mxu0 0
    %3182 = vmatpush2.bf16.msra.mxu0 0
    %3183 = vmatprep.subr.bf16.mxu0 0
    %3184 = vmatpush2.bf16.msra.mxu0 0
    %3185 = vmatprep.subr.bf16.mxu0 0
    %3186 = vmatpush2.bf16.msra.mxu0 0
    %3187 = vmatprep.subr.bf16.mxu0 0
    %3188 = vmatpush2.bf16.msra.mxu0 0
    %3189 = vmatprep.mubr.bf16.mxu0 0
    %3190 = vmatmul.mubr.bf16.gmra.mxu0 %v3137
    %v3191 = vpop.f32.mrf.mxu0
    %v3192 = vadd.f32 0.0, %v3191
    %v3193 = vpop.f32.mrf.mxu0
    %v3194 = vpop.f32.mrf.mxu0
    %v3195 = vadd.f32 0.0, %v3194
    %v3196 = vpop.f32.mrf.mxu0
    %3197 = vmatprep.mubr.bf16.mxu0 0
    %3198 = vmatmul.mubr.bf16.gmra.mxu0 %v3140
    %v3199 = vpop.f32.mrf.mxu0
    %v3200 = vadd.f32 0.0, %v3199
    %v3201 = vpop.f32.mrf.mxu0
    %v3202 = vpop.f32.mrf.mxu0
    %v3203 = vadd.f32 0.0, %v3202
    %v3204 = vpop.f32.mrf.mxu0
    %3205 = vmatprep.mubr.bf16.mxu0 0
    %3206 = vmatmul.mubr.bf16.gmra.mxu0 %v3143
    %v3207 = vpop.f32.mrf.mxu0
    %v3208 = vadd.f32 0.0, %v3207
    %v3209 = vpop.f32.mrf.mxu0
    %v3210 = vpop.f32.mrf.mxu0
    %v3211 = vadd.f32 0.0, %v3210
    %v3212 = vpop.f32.mrf.mxu0
    %3213 = vmatprep.mubr.bf16.mxu0 0
    %3214 = vmatmul.mubr.bf16.gmra.mxu0 %v3146
    %v3215 = vpop.f32.mrf.mxu0
    %v3216 = vadd.f32 0.0, %v3215
    %v3217 = vpop.f32.mrf.mxu0
    %v3218 = vpop.f32.mrf.mxu0
    %v3219 = vadd.f32 0.0, %v3218
    %v3220 = vpop.f32.mrf.mxu0
    %3221 = vmatprep.mubr.bf16.mxu0 0
    %3222 = vmatmul.mubr.bf16.gmra.mxu0 %v3149
    %v3223 = vpop.f32.mrf.mxu0
    %v3224 = vadd.f32 0.0, %v3223
    %v3225 = vpop.f32.mrf.mxu0
    %v3226 = vpop.f32.mrf.mxu0
    %v3227 = vadd.f32 0.0, %v3226
    %v3228 = vpop.f32.mrf.mxu0
    %3229 = vmatprep.mubr.bf16.mxu0 0
    %3230 = vmatmul.mubr.bf16.gmra.mxu0 %v3152
    %v3231 = vpop.f32.mrf.mxu0
    %v3232 = vadd.f32 0.0, %v3231
    %v3233 = vpop.f32.mrf.mxu0
    %v3234 = vpop.f32.mrf.mxu0
    %v3235 = vadd.f32 0.0, %v3234
    %v3236 = vpop.f32.mrf.mxu0
    %3237 = vmatprep.mubr.bf16.mxu0 0
    %3238 = vmatmul.mubr.bf16.gmra.mxu0 %v3155
    %v3239 = vpop.f32.mrf.mxu0
    %v3240 = vadd.f32 0.0, %v3239
    %v3241 = vpop.f32.mrf.mxu0
    %v3242 = vpop.f32.mrf.mxu0
    %v3243 = vpop.f32.mrf.mxu0
    %3244 = vdwg.mxu0
    %v3249 = vunpack.c.l.b16 %v3095
    %v3250 = vunpack.c.l.b16 %v3096
    %v3251 = vunpack.c.l.b16 %v3097
    %v3252 = vunpack.c.l.b16 %v3098
    %v3253 = vpack.c.b16 %v3250, %v3249
    %v3254 = vpack.c.b16 %v3252, %v3251
    %v3258 = vsel %vm3057, %v3088, 0
    %v3261 = vsel %vm3057, %v3089, 0
    %v3264 = vsel %vm3057, %v3090, 0
    %v3267 = vsel %vm3057, %v3091, 0
    %v3270 = vsel %vm3057, %v3092, 0
    %v3273 = vsel %vm3057, %v3093, 0
    %v3276 = vsel %vm3057, %v3094, 0
    %3278 = vmatprep.subr.bf16.mxu0 0
    %3279 = vmatpush1.bf16.msra.mxu0 0
    %3280 = vmatprep.subr.bf16.mxu0 0
    %3281 = vmatpush1.bf16.msra.mxu0 0
    %3282 = vmatprep.subr.bf16.mxu0 0
    %3283 = vmatpush1.bf16.msra.mxu0 0
    %3284 = vmatprep.subr.bf16.mxu0 0
    %3285 = vmatpush1.bf16.msra.mxu0 0
    %3286 = vmatprep.subr.bf16.mxu0 0
    %3287 = vmatpush1.bf16.msra.mxu0 0
    %3288 = vmatprep.subr.bf16.mxu0 0
    %3289 = vmatpush1.bf16.msra.mxu0 0
    %3290 = vmatprep.subr.bf16.mxu0 0
    %3291 = vmatpush1.bf16.msra.mxu0 %v3254
    %3292 = vmatprep.subr.bf16.mxu0 0
    %3293 = vmatpush1.bf16.msra.mxu0 %v3253
    %3294 = vmatprep.subr.bf16.mxu0 0
    %3295 = vmatpush2.bf16.msra.mxu0 0
    %3296 = vmatprep.subr.bf16.mxu0 0
    %3297 = vmatpush2.bf16.msra.mxu0 0
    %3298 = vmatprep.subr.bf16.mxu0 0
    %3299 = vmatpush2.bf16.msra.mxu0 0
    %3300 = vmatprep.subr.bf16.mxu0 0
    %3301 = vmatpush2.bf16.msra.mxu0 0
    %3302 = vmatprep.subr.bf16.mxu0 0
    %3303 = vmatpush2.bf16.msra.mxu0 0
    %3304 = vmatprep.subr.bf16.mxu0 0
    %3305 = vmatpush2.bf16.msra.mxu0 0
    %3306 = vmatprep.subr.bf16.mxu0 0
    %3307 = vmatpush2.bf16.msra.mxu0 0
    %3308 = vmatprep.subr.bf16.mxu0 0
    %3309 = vmatpush2.bf16.msra.mxu0 0
    %3310 = vmatprep.mubr.bf16.mxu0 0
    %3311 = vmatmul.mubr.bf16.gmra.mxu0 %v3258
    %v3312 = vpop.f32.mrf.mxu0
    %v3313 = vadd.f32 %v3192, %v3312
    %v3314 = vpop.f32.mrf.mxu0
    %v3315 = vpop.f32.mrf.mxu0
    %v3316 = vadd.f32 %v3195, %v3315
    %v3317 = vpop.f32.mrf.mxu0
    %3318 = vmatprep.mubr.bf16.mxu0 0
    %3319 = vmatmul.mubr.bf16.gmra.mxu0 %v3261
    %v3320 = vpop.f32.mrf.mxu0
    %v3321 = vadd.f32 %v3200, %v3320
    %v3322 = vpop.f32.mrf.mxu0
    %v3323 = vpop.f32.mrf.mxu0
    %v3324 = vadd.f32 %v3203, %v3323
    %v3325 = vpop.f32.mrf.mxu0
    %3326 = vmatprep.mubr.bf16.mxu0 0
    %3327 = vmatmul.mubr.bf16.gmra.mxu0 %v3264
    %v3328 = vpop.f32.mrf.mxu0
    %v3329 = vadd.f32 %v3208, %v3328
    %v3330 = vpop.f32.mrf.mxu0
    %v3331 = vpop.f32.mrf.mxu0
    %v3332 = vadd.f32 %v3211, %v3331
    %v3333 = vpop.f32.mrf.mxu0
    %3334 = vmatprep.mubr.bf16.mxu0 0
    %3335 = vmatmul.mubr.bf16.gmra.mxu0 %v3267
    %v3336 = vpop.f32.mrf.mxu0
    %v3337 = vadd.f32 %v3216, %v3336
    %v3338 = vpop.f32.mrf.mxu0
    %v3339 = vpop.f32.mrf.mxu0
    %v3340 = vadd.f32 %v3219, %v3339
    %v3341 = vpop.f32.mrf.mxu0
    %3342 = vmatprep.mubr.bf16.mxu0 0
    %3343 = vmatmul.mubr.bf16.gmra.mxu0 %v3270
    %v3344 = vpop.f32.mrf.mxu0
    %v3345 = vadd.f32 %v3224, %v3344
    %v3346 = vpop.f32.mrf.mxu0
    %v3347 = vpop.f32.mrf.mxu0
    %v3348 = vadd.f32 %v3227, %v3347
    %v3349 = vpop.f32.mrf.mxu0
    %3350 = vmatprep.mubr.bf16.mxu0 0
    %3351 = vmatmul.mubr.bf16.gmra.mxu0 %v3273
    %v3352 = vpop.f32.mrf.mxu0
    %v3353 = vadd.f32 %v3232, %v3352
    %v3354 = vpop.f32.mrf.mxu0
    %v3355 = vpop.f32.mrf.mxu0
    %v3356 = vadd.f32 %v3235, %v3355
    %v3357 = vpop.f32.mrf.mxu0
    %3358 = vmatprep.mubr.bf16.mxu0 0
    %3359 = vmatmul.mubr.bf16.gmra.mxu0 %v3276
    %v3360 = vpop.f32.mrf.mxu0
    %v3361 = vadd.f32 %v3240, %v3360
    %v3362 = vpop.f32.mrf.mxu0
    %v3363 = vpop.f32.mrf.mxu0
    %v3364 = vpop.f32.mrf.mxu0
    %3365 = vdwg.mxu0
    %v3366 = vld [vmem:[#allocation3 + $0x2] sm:$0xff]
    %v3367 = vld [vmem:[#allocation3 + $0xa] sm:$0xff]
    %v3368 = vld [vmem:[#allocation3 + $0x12] sm:$0xff]
    %v3369 = vld [vmem:[#allocation3 + $0x1a] sm:$0xff]
    %v3370 = vld [vmem:[#allocation3 + $0x22] sm:$0xff]
    %v3371 = vld [vmem:[#allocation3 + $0x2a] sm:$0xff]
    %v3372 = vld [vmem:[#allocation3 + $0x32] sm:$0xff]
    %v3373 = vld [vmem:[#allocation3 + $0x3a] sm:$0xff]
    %v3374 = vld [vmem:[#allocation3 + $0x42] sm:$0xff]
    %v3375 = vld [vmem:[#allocation3 + $0x4a] sm:$0xff]
    %v3376 = vld [vmem:[#allocation3 + $0x52] sm:$0xff]
    %v3377 = vld [vmem:[#allocation3 + $0x5a] sm:$0xff]
    %v3378 = vld [vmem:[#allocation3 + $0x62] sm:$0x3]
    %v3379 = vpack.c.bf16 %v3367, %v3366
    %v3380 = vpack.c.bf16 %v3369, %v3368
    %v3381 = vpack.c.bf16 %v3371, %v3370
    %v3382 = vpack.c.bf16 %v3373, %v3372
    %v3383 = vpack.c.bf16 %v3375, %v3374
    %v3384 = vpack.c.bf16 %v3377, %v3376
    %v3385 = vpack.c.bf16 %v3378, %v3378
    %s3386 = scalar_lea.vmem %s5, 32
    %v3387 = vld [vmem:[%s3386] sm:$0xf]
    %v3388 = vld [vmem:[%s3386 + $0x4] sm:$0xf]
    %v3389 = vld [vmem:[%s3386 + $0x8] sm:$0xf]
    %v3390 = vld [vmem:[%s3386 + $0xc] sm:$0xf]
    %v3395 = vunpack.c.l.b16 %v3387
    %v3396 = vunpack.c.l.b16 %v3388
    %v3397 = vunpack.c.l.b16 %v3389
    %v3398 = vunpack.c.l.b16 %v3390
    %v3399 = vpack.c.b16 %v3396, %v3395
    %v3400 = vpack.c.b16 %v3398, %v3397
    %v3404 = vsel %vm3057, %v3379, 0
    %v3407 = vsel %vm3057, %v3380, 0
    %v3410 = vsel %vm3057, %v3381, 0
    %v3413 = vsel %vm3057, %v3382, 0
    %v3416 = vsel %vm3057, %v3383, 0
    %v3419 = vsel %vm3057, %v3384, 0
    %v3422 = vsel %vm3057, %v3385, 0
    %3424 = vmatprep.subr.bf16.mxu0 0
    %3425 = vmatpush1.bf16.msra.mxu0 0
    %3426 = vmatprep.subr.bf16.mxu0 0
    %3427 = vmatpush1.bf16.msra.mxu0 0
    %3428 = vmatprep.subr.bf16.mxu0 0
    %3429 = vmatpush1.bf16.msra.mxu0 0
    %3430 = vmatprep.subr.bf16.mxu0 0
    %3431 = vmatpush1.bf16.msra.mxu0 0
    %3432 = vmatprep.subr.bf16.mxu0 0
    %3433 = vmatpush1.bf16.msra.mxu0 0
    %3434 = vmatprep.subr.bf16.mxu0 0
    %3435 = vmatpush1.bf16.msra.mxu0 0
    %3436 = vmatprep.subr.bf16.mxu0 0
    %3437 = vmatpush1.bf16.msra.mxu0 %v3400
    %3438 = vmatprep.subr.bf16.mxu0 0
    %3439 = vmatpush1.bf16.msra.mxu0 %v3399
    %3440 = vmatprep.subr.bf16.mxu0 0
    %3441 = vmatpush2.bf16.msra.mxu0 0
    %3442 = vmatprep.subr.bf16.mxu0 0
    %3443 = vmatpush2.bf16.msra.mxu0 0
    %3444 = vmatprep.subr.bf16.mxu0 0
    %3445 = vmatpush2.bf16.msra.mxu0 0
    %3446 = vmatprep.subr.bf16.mxu0 0
    %3447 = vmatpush2.bf16.msra.mxu0 0
    %3448 = vmatprep.subr.bf16.mxu0 0
    %3449 = vmatpush2.bf16.msra.mxu0 0
    %3450 = vmatprep.subr.bf16.mxu0 0
    %3451 = vmatpush2.bf16.msra.mxu0 0
    %3452 = vmatprep.subr.bf16.mxu0 0
    %3453 = vmatpush2.bf16.msra.mxu0 0
    %3454 = vmatprep.subr.bf16.mxu0 0
    %3455 = vmatpush2.bf16.msra.mxu0 0
    %3456 = vmatprep.mubr.bf16.mxu0 0
    %3457 = vmatmul.mubr.bf16.gmra.mxu0 %v3404
    %v3458 = vpop.f32.mrf.mxu0
    %v3459 = vadd.f32 0.0, %v3458
    %v3460 = vpop.f32.mrf.mxu0
    %v3461 = vpop.f32.mrf.mxu0
    %v3462 = vadd.f32 0.0, %v3461
    %v3463 = vpop.f32.mrf.mxu0
    %3464 = vmatprep.mubr.bf16.mxu0 0
    %3465 = vmatmul.mubr.bf16.gmra.mxu0 %v3407
    %v3466 = vpop.f32.mrf.mxu0
    %v3467 = vadd.f32 0.0, %v3466
    %v3468 = vpop.f32.mrf.mxu0
    %v3469 = vpop.f32.mrf.mxu0
    %v3470 = vadd.f32 0.0, %v3469
    %v3471 = vpop.f32.mrf.mxu0
    %3472 = vmatprep.mubr.bf16.mxu0 0
    %3473 = vmatmul.mubr.bf16.gmra.mxu0 %v3410
    %v3474 = vpop.f32.mrf.mxu0
    %v3475 = vadd.f32 0.0, %v3474
    %v3476 = vpop.f32.mrf.mxu0
    %v3477 = vpop.f32.mrf.mxu0
    %v3478 = vadd.f32 0.0, %v3477
    %v3479 = vpop.f32.mrf.mxu0
    %3480 = vmatprep.mubr.bf16.mxu0 0
    %3481 = vmatmul.mubr.bf16.gmra.mxu0 %v3413
    %v3482 = vpop.f32.mrf.mxu0
    %v3483 = vadd.f32 0.0, %v3482
    %v3484 = vpop.f32.mrf.mxu0
    %v3485 = vpop.f32.mrf.mxu0
    %v3486 = vadd.f32 0.0, %v3485
    %v3487 = vpop.f32.mrf.mxu0
    %3488 = vmatprep.mubr.bf16.mxu0 0
    %3489 = vmatmul.mubr.bf16.gmra.mxu0 %v3416
    %v3490 = vpop.f32.mrf.mxu0
    %v3491 = vadd.f32 0.0, %v3490
    %v3492 = vpop.f32.mrf.mxu0
    %v3493 = vpop.f32.mrf.mxu0
    %v3494 = vadd.f32 0.0, %v3493
    %v3495 = vpop.f32.mrf.mxu0
    %3496 = vmatprep.mubr.bf16.mxu0 0
    %3497 = vmatmul.mubr.bf16.gmra.mxu0 %v3419
    %v3498 = vpop.f32.mrf.mxu0
    %v3499 = vadd.f32 0.0, %v3498
    %v3500 = vpop.f32.mrf.mxu0
    %v3501 = vpop.f32.mrf.mxu0
    %v3502 = vadd.f32 0.0, %v3501
    %v3503 = vpop.f32.mrf.mxu0
    %3504 = vmatprep.mubr.bf16.mxu0 0
    %3505 = vmatmul.mubr.bf16.gmra.mxu0 %v3422
    %v3506 = vpop.f32.mrf.mxu0
    %v3507 = vadd.f32 0.0, %v3506
    %v3508 = vpop.f32.mrf.mxu0
    %v3509 = vpop.f32.mrf.mxu0
    %v3510 = vpop.f32.mrf.mxu0
    %3511 = vdwg.mxu0
    %v3512 = vadd.f32 %v3313, %v3459
    %v3513 = vadd.f32 %v3316, %v3462
    %v3514 = vadd.f32 %v3321, %v3467
    %v3515 = vadd.f32 %v3324, %v3470
    %v3516 = vadd.f32 %v3329, %v3475
    %v3517 = vadd.f32 %v3332, %v3478
    %v3518 = vadd.f32 %v3337, %v3483
    %v3519 = vadd.f32 %v3340, %v3486
    %v3520 = vadd.f32 %v3345, %v3491
    %v3521 = vadd.f32 %v3348, %v3494
    %v3522 = vadd.f32 %v3353, %v3499
    %v3523 = vadd.f32 %v3356, %v3502
    %v3524 = vadd.f32 %v3361, %v3507
    %v3525 = vld [vmem:[#allocation3 + $0x3] sm:$0xff]
    %v3526 = vld [vmem:[#allocation3 + $0xb] sm:$0xff]
    %v3527 = vld [vmem:[#allocation3 + $0x13] sm:$0xff]
    %v3528 = vld [vmem:[#allocation3 + $0x1b] sm:$0xff]
    %v3529 = vld [vmem:[#allocation3 + $0x23] sm:$0xff]
    %v3530 = vld [vmem:[#allocation3 + $0x2b] sm:$0xff]
    %v3531 = vld [vmem:[#allocation3 + $0x33] sm:$0xff]
    %v3532 = vld [vmem:[#allocation3 + $0x3b] sm:$0xff]
    %v3533 = vld [vmem:[#allocation3 + $0x43] sm:$0xff]
    %v3534 = vld [vmem:[#allocation3 + $0x4b] sm:$0xff]
    %v3535 = vld [vmem:[#allocation3 + $0x53] sm:$0xff]
    %v3536 = vld [vmem:[#allocation3 + $0x5b] sm:$0xff]
    %v3537 = vld [vmem:[#allocation3 + $0x63] sm:$0x3]
    %v3538 = vpack.c.bf16 %v3526, %v3525
    %v3539 = vpack.c.bf16 %v3528, %v3527
    %v3540 = vpack.c.bf16 %v3530, %v3529
    %v3541 = vpack.c.bf16 %v3532, %v3531
    %v3542 = vpack.c.bf16 %v3534, %v3533
    %v3543 = vpack.c.bf16 %v3536, %v3535
    %v3544 = vpack.c.bf16 %v3537, %v3537
    %s3545 = scalar_lea.vmem %s5, 48
    %v3546 = vld [vmem:[%s3545] sm:$0xf]
    %v3547 = vld [vmem:[%s3545 + $0x4] sm:$0xf]
    %v3548 = vld [vmem:[%s3545 + $0x8] sm:$0xf]
    %v3549 = vld [vmem:[%s3545 + $0xc] sm:$0xf]
    %v3554 = vunpack.c.l.b16 %v3546
    %v3555 = vunpack.c.l.b16 %v3547
    %v3556 = vunpack.c.l.b16 %v3548
    %v3557 = vunpack.c.l.b16 %v3549
    %v3558 = vpack.c.b16 %v3555, %v3554
    %v3559 = vpack.c.b16 %v3557, %v3556
    %v3563 = vsel %vm3057, %v3538, 0
    %v3566 = vsel %vm3057, %v3539, 0
    %v3569 = vsel %vm3057, %v3540, 0
    %v3572 = vsel %vm3057, %v3541, 0
    %v3575 = vsel %vm3057, %v3542, 0
    %v3578 = vsel %vm3057, %v3543, 0
    %v3581 = vsel %vm3057, %v3544, 0
    %3583 = vmatprep.subr.bf16.mxu0 0
    %3584 = vmatpush1.bf16.msra.mxu0 0
    %3585 = vmatprep.subr.bf16.mxu0 0
    %3586 = vmatpush1.bf16.msra.mxu0 0
    %3587 = vmatprep.subr.bf16.mxu0 0
    %3588 = vmatpush1.bf16.msra.mxu0 0
    %3589 = vmatprep.subr.bf16.mxu0 0
    %3590 = vmatpush1.bf16.msra.mxu0 0
    %3591 = vmatprep.subr.bf16.mxu0 0
    %3592 = vmatpush1.bf16.msra.mxu0 0
    %3593 = vmatprep.subr.bf16.mxu0 0
    %3594 = vmatpush1.bf16.msra.mxu0 0
    %3595 = vmatprep.subr.bf16.mxu0 0
    %3596 = vmatpush1.bf16.msra.mxu0 %v3559
    %3597 = vmatprep.subr.bf16.mxu0 0
    %3598 = vmatpush1.bf16.msra.mxu0 %v3558
    %3599 = vmatprep.subr.bf16.mxu0 0
    %3600 = vmatpush2.bf16.msra.mxu0 0
    %3601 = vmatprep.subr.bf16.mxu0 0
    %3602 = vmatpush2.bf16.msra.mxu0 0
    %3603 = vmatprep.subr.bf16.mxu0 0
    %3604 = vmatpush2.bf16.msra.mxu0 0
    %3605 = vmatprep.subr.bf16.mxu0 0
    %3606 = vmatpush2.bf16.msra.mxu0 0
    %3607 = vmatprep.subr.bf16.mxu0 0
    %3608 = vmatpush2.bf16.msra.mxu0 0
    %3609 = vmatprep.subr.bf16.mxu0 0
    %3610 = vmatpush2.bf16.msra.mxu0 0
    %3611 = vmatprep.subr.bf16.mxu0 0
    %3612 = vmatpush2.bf16.msra.mxu0 0
    %3613 = vmatprep.subr.bf16.mxu0 0
    %3614 = vmatpush2.bf16.msra.mxu0 0
    %3615 = vmatprep.mubr.bf16.mxu0 0
    %3616 = vmatmul.mubr.bf16.gmra.mxu0 %v3563
    %v3617 = vpop.f32.mrf.mxu0
    %v3618 = vadd.f32 0.0, %v3617
    %v3619 = vpop.f32.mrf.mxu0
    %v3620 = vpop.f32.mrf.mxu0
    %v3621 = vadd.f32 0.0, %v3620
    %v3622 = vpop.f32.mrf.mxu0
    %3623 = vmatprep.mubr.bf16.mxu0 0
    %3624 = vmatmul.mubr.bf16.gmra.mxu0 %v3566
    %v3625 = vpop.f32.mrf.mxu0
    %v3626 = vadd.f32 0.0, %v3625
    %v3627 = vpop.f32.mrf.mxu0
    %v3628 = vpop.f32.mrf.mxu0
    %v3629 = vadd.f32 0.0, %v3628
    %v3630 = vpop.f32.mrf.mxu0
    %3631 = vmatprep.mubr.bf16.mxu0 0
    %3632 = vmatmul.mubr.bf16.gmra.mxu0 %v3569
    %v3633 = vpop.f32.mrf.mxu0
    %v3634 = vadd.f32 0.0, %v3633
    %v3635 = vpop.f32.mrf.mxu0
    %v3636 = vpop.f32.mrf.mxu0
    %v3637 = vadd.f32 0.0, %v3636
    %v3638 = vpop.f32.mrf.mxu0
    %3639 = vmatprep.mubr.bf16.mxu0 0
    %3640 = vmatmul.mubr.bf16.gmra.mxu0 %v3572
    %v3641 = vpop.f32.mrf.mxu0
    %v3642 = vadd.f32 0.0, %v3641
    %v3643 = vpop.f32.mrf.mxu0
    %v3644 = vpop.f32.mrf.mxu0
    %v3645 = vadd.f32 0.0, %v3644
    %v3646 = vpop.f32.mrf.mxu0
    %3647 = vmatprep.mubr.bf16.mxu0 0
    %3648 = vmatmul.mubr.bf16.gmra.mxu0 %v3575
    %v3649 = vpop.f32.mrf.mxu0
    %v3650 = vadd.f32 0.0, %v3649
    %v3651 = vpop.f32.mrf.mxu0
    %v3652 = vpop.f32.mrf.mxu0
    %v3653 = vadd.f32 0.0, %v3652
    %v3654 = vpop.f32.mrf.mxu0
    %3655 = vmatprep.mubr.bf16.mxu0 0
    %3656 = vmatmul.mubr.bf16.gmra.mxu0 %v3578
    %v3657 = vpop.f32.mrf.mxu0
    %v3658 = vadd.f32 0.0, %v3657
    %v3659 = vpop.f32.mrf.mxu0
    %v3660 = vpop.f32.mrf.mxu0
    %v3661 = vadd.f32 0.0, %v3660
    %v3662 = vpop.f32.mrf.mxu0
    %3663 = vmatprep.mubr.bf16.mxu0 0
    %3664 = vmatmul.mubr.bf16.gmra.mxu0 %v3581
    %v3665 = vpop.f32.mrf.mxu0
    %v3666 = vadd.f32 0.0, %v3665
    %v3667 = vpop.f32.mrf.mxu0
    %v3668 = vpop.f32.mrf.mxu0
    %v3669 = vpop.f32.mrf.mxu0
    %3670 = vdwg.mxu0
    %v3671 = vadd.f32 %v3512, %v3618
    %v3672 = vadd.f32 %v3513, %v3621
    %v3673 = vadd.f32 %v3514, %v3626
    %v3674 = vadd.f32 %v3515, %v3629
    %v3675 = vadd.f32 %v3516, %v3634
    %v3676 = vadd.f32 %v3517, %v3637
    %v3677 = vadd.f32 %v3518, %v3642
    %v3678 = vadd.f32 %v3519, %v3645
    %v3679 = vadd.f32 %v3520, %v3650
    %v3680 = vadd.f32 %v3521, %v3653
    %v3681 = vadd.f32 %v3522, %v3658
    %v3682 = vadd.f32 %v3523, %v3661
    %v3683 = vadd.f32 %v3524, %v3666
    %v3684 = vld [vmem:[#allocation3 + $0x7] sm:$0xff]
    %v3685 = vld [vmem:[#allocation3 + $0xf] sm:$0xff]
    %v3686 = vld [vmem:[#allocation3 + $0x17] sm:$0xff]
    %v3687 = vld [vmem:[#allocation3 + $0x1f] sm:$0xff]
    %v3688 = vld [vmem:[#allocation3 + $0x27] sm:$0xff]
    %v3689 = vld [vmem:[#allocation3 + $0x2f] sm:$0xff]
    %v3690 = vld [vmem:[#allocation3 + $0x37] sm:$0xff]
    %v3691 = vld [vmem:[#allocation3 + $0x3f] sm:$0xff]
    %v3692 = vld [vmem:[#allocation3 + $0x47] sm:$0xff]
    %v3693 = vld [vmem:[#allocation3 + $0x4f] sm:$0xff]
    %v3694 = vld [vmem:[#allocation3 + $0x57] sm:$0xff]
    %v3695 = vld [vmem:[#allocation3 + $0x5f] sm:$0xff]
    %v3696 = vld [vmem:[#allocation3 + $0x67] sm:$0x3]
    %v3697 = vpack.c.bf16 %v3685, %v3684
    %v3698 = vpack.c.bf16 %v3687, %v3686
    %v3699 = vpack.c.bf16 %v3689, %v3688
    %v3700 = vpack.c.bf16 %v3691, %v3690
    %v3701 = vpack.c.bf16 %v3693, %v3692
    %v3702 = vpack.c.bf16 %v3695, %v3694
    %v3703 = vpack.c.bf16 %v3696, %v3696
    %s3704 = scalar_lea.vmem %s5, 64
    %v3705 = vld [vmem:[%s3704] sm:$0xf]
    %v3706 = vld [vmem:[%s3704 + $0x4] sm:$0xf]
    %v3707 = vld [vmem:[%s3704 + $0x8] sm:$0xf]
    %v3708 = vld [vmem:[%s3704 + $0xc] sm:$0xf]
    %v3713 = vunpack.c.l.b16 %v3705
    %v3714 = vunpack.c.l.b16 %v3706
    %v3715 = vunpack.c.l.b16 %v3707
    %v3716 = vunpack.c.l.b16 %v3708
    %v3717 = vpack.c.b16 %v3714, %v3713
    %v3718 = vpack.c.b16 %v3716, %v3715
    %v3722 = vsel %vm3057, %v3697, 0
    %v3725 = vsel %vm3057, %v3698, 0
    %v3728 = vsel %vm3057, %v3699, 0
    %v3731 = vsel %vm3057, %v3700, 0
    %v3734 = vsel %vm3057, %v3701, 0
    %v3737 = vsel %vm3057, %v3702, 0
    %v3740 = vsel %vm3057, %v3703, 0
    %3742 = vmatprep.subr.bf16.mxu0 0
    %3743 = vmatpush1.bf16.msra.mxu0 0
    %3744 = vmatprep.subr.bf16.mxu0 0
    %3745 = vmatpush1.bf16.msra.mxu0 0
    %3746 = vmatprep.subr.bf16.mxu0 0
    %3747 = vmatpush1.bf16.msra.mxu0 0
    %3748 = vmatprep.subr.bf16.mxu0 0
    %3749 = vmatpush1.bf16.msra.mxu0 0
    %3750 = vmatprep.subr.bf16.mxu0 0
    %3751 = vmatpush1.bf16.msra.mxu0 0
    %3752 = vmatprep.subr.bf16.mxu0 0
    %3753 = vmatpush1.bf16.msra.mxu0 0
    %3754 = vmatprep.subr.bf16.mxu0 0
    %3755 = vmatpush1.bf16.msra.mxu0 %v3718
    %3756 = vmatprep.subr.bf16.mxu0 0
    %3757 = vmatpush1.bf16.msra.mxu0 %v3717
    %3758 = vmatprep.subr.bf16.mxu0 0
    %3759 = vmatpush2.bf16.msra.mxu0 0
    %3760 = vmatprep.subr.bf16.mxu0 0
    %3761 = vmatpush2.bf16.msra.mxu0 0
    %3762 = vmatprep.subr.bf16.mxu0 0
    %3763 = vmatpush2.bf16.msra.mxu0 0
    %3764 = vmatprep.subr.bf16.mxu0 0
    %3765 = vmatpush2.bf16.msra.mxu0 0
    %3766 = vmatprep.subr.bf16.mxu0 0
    %3767 = vmatpush2.bf16.msra.mxu0 0
    %3768 = vmatprep.subr.bf16.mxu0 0
    %3769 = vmatpush2.bf16.msra.mxu0 0
    %3770 = vmatprep.subr.bf16.mxu0 0
    %3771 = vmatpush2.bf16.msra.mxu0 0
    %3772 = vmatprep.subr.bf16.mxu0 0
    %3773 = vmatpush2.bf16.msra.mxu0 0
    %3774 = vmatprep.mubr.bf16.mxu0 0
    %3775 = vmatmul.mubr.bf16.gmra.mxu0 %v3722
    %v3776 = vpop.f32.mrf.mxu0
    %v3777 = vadd.f32 0.0, %v3776
    %v3778 = vpop.f32.mrf.mxu0
    %v3779 = vpop.f32.mrf.mxu0
    %v3780 = vadd.f32 0.0, %v3779
    %v3781 = vpop.f32.mrf.mxu0
    %3782 = vmatprep.mubr.bf16.mxu0 0
    %3783 = vmatmul.mubr.bf16.gmra.mxu0 %v3725
    %v3784 = vpop.f32.mrf.mxu0
    %v3785 = vadd.f32 0.0, %v3784
    %v3786 = vpop.f32.mrf.mxu0
    %v3787 = vpop.f32.mrf.mxu0
    %v3788 = vadd.f32 0.0, %v3787
    %v3789 = vpop.f32.mrf.mxu0
    %3790 = vmatprep.mubr.bf16.mxu0 0
    %3791 = vmatmul.mubr.bf16.gmra.mxu0 %v3728
    %v3792 = vpop.f32.mrf.mxu0
    %v3793 = vadd.f32 0.0, %v3792
    %v3794 = vpop.f32.mrf.mxu0
    %v3795 = vpop.f32.mrf.mxu0
    %v3796 = vadd.f32 0.0, %v3795
    %v3797 = vpop.f32.mrf.mxu0
    %3798 = vmatprep.mubr.bf16.mxu0 0
    %3799 = vmatmul.mubr.bf16.gmra.mxu0 %v3731
    %v3800 = vpop.f32.mrf.mxu0
    %v3801 = vadd.f32 0.0, %v3800
    %v3802 = vpop.f32.mrf.mxu0
    %v3803 = vpop.f32.mrf.mxu0
    %v3804 = vadd.f32 0.0, %v3803
    %v3805 = vpop.f32.mrf.mxu0
    %3806 = vmatprep.mubr.bf16.mxu0 0
    %3807 = vmatmul.mubr.bf16.gmra.mxu0 %v3734
    %v3808 = vpop.f32.mrf.mxu0
    %v3809 = vadd.f32 0.0, %v3808
    %v3810 = vpop.f32.mrf.mxu0
    %v3811 = vpop.f32.mrf.mxu0
    %v3812 = vadd.f32 0.0, %v3811
    %v3813 = vpop.f32.mrf.mxu0
    %3814 = vmatprep.mubr.bf16.mxu0 0
    %3815 = vmatmul.mubr.bf16.gmra.mxu0 %v3737
    %v3816 = vpop.f32.mrf.mxu0
    %v3817 = vadd.f32 0.0, %v3816
    %v3818 = vpop.f32.mrf.mxu0
    %v3819 = vpop.f32.mrf.mxu0
    %v3820 = vadd.f32 0.0, %v3819
    %v3821 = vpop.f32.mrf.mxu0
    %3822 = vmatprep.mubr.bf16.mxu0 0
    %3823 = vmatmul.mubr.bf16.gmra.mxu0 %v3740
    %v3824 = vpop.f32.mrf.mxu0
    %v3825 = vadd.f32 0.0, %v3824
    %v3826 = vpop.f32.mrf.mxu0
    %v3827 = vpop.f32.mrf.mxu0
    %v3828 = vpop.f32.mrf.mxu0
    %3829 = vdwg.mxu0
    %v3830 = vadd.f32 %v3671, %v3777
    %v3831 = vadd.f32 %v3672, %v3780
    %v3832 = vadd.f32 %v3673, %v3785
    %v3833 = vadd.f32 %v3674, %v3788
    %v3834 = vadd.f32 %v3675, %v3793
    %v3835 = vadd.f32 %v3676, %v3796
    %v3836 = vadd.f32 %v3677, %v3801
    %v3837 = vadd.f32 %v3678, %v3804
    %v3838 = vadd.f32 %v3679, %v3809
    %v3839 = vadd.f32 %v3680, %v3812
    %v3840 = vadd.f32 %v3681, %v3817
    %v3841 = vadd.f32 %v3682, %v3820
    %v3842 = vadd.f32 %v3683, %v3825
    %v3843 = vld [vmem:[#allocation3 + $0x8] sm:$0xff]
    %v3844 = vld [vmem:[#allocation3 + $0x10] sm:$0xff]
    %v3845 = vld [vmem:[#allocation3 + $0x18] sm:$0xff]
    %v3846 = vld [vmem:[#allocation3 + $0x20] sm:$0xff]
    %v3847 = vld [vmem:[#allocation3 + $0x28] sm:$0xff]
    %v3848 = vld [vmem:[#allocation3 + $0x30] sm:$0xff]
    %v3849 = vld [vmem:[#allocation3 + $0x38] sm:$0xff]
    %v3850 = vld [vmem:[#allocation3 + $0x40] sm:$0xff]
    %v3851 = vld [vmem:[#allocation3 + $0x48] sm:$0xff]
    %v3852 = vld [vmem:[#allocation3 + $0x50] sm:$0xff]
    %v3853 = vld [vmem:[#allocation3 + $0x58] sm:$0xff]
    %v3854 = vld [vmem:[#allocation3 + $0x60] sm:$0xff]
    %v3855 = vld [vmem:[#allocation3 + $0x68] sm:$0x3]
    %v3856 = vpack.c.bf16 %v3844, %v3843
    %v3857 = vpack.c.bf16 %v3846, %v3845
    %v3858 = vpack.c.bf16 %v3848, %v3847
    %v3859 = vpack.c.bf16 %v3850, %v3849
    %v3860 = vpack.c.bf16 %v3852, %v3851
    %v3861 = vpack.c.bf16 %v3854, %v3853
    %v3862 = vpack.c.bf16 %v3855, %v3855
    %s3863 = scalar_lea.vmem %s5, 80
    %v3864 = vld [vmem:[%s3863] sm:$0xf]
    %v3865 = vld [vmem:[%s3863 + $0x4] sm:$0xf]
    %v3866 = vld [vmem:[%s3863 + $0x8] sm:$0xf]
    %v3867 = vld [vmem:[%s3863 + $0xc] sm:$0xf]
    %v3872 = vunpack.c.l.b16 %v3864
    %v3873 = vunpack.c.l.b16 %v3865
    %v3874 = vunpack.c.l.b16 %v3866
    %v3875 = vunpack.c.l.b16 %v3867
    %v3876 = vpack.c.b16 %v3873, %v3872
    %v3877 = vpack.c.b16 %v3875, %v3874
    %v3881 = vsel %vm3057, %v3856, 0
    %v3884 = vsel %vm3057, %v3857, 0
    %v3887 = vsel %vm3057, %v3858, 0
    %v3890 = vsel %vm3057, %v3859, 0
    %v3893 = vsel %vm3057, %v3860, 0
    %v3896 = vsel %vm3057, %v3861, 0
    %v3899 = vsel %vm3057, %v3862, 0
    %3901 = vmatprep.subr.bf16.mxu0 0
    %3902 = vmatpush1.bf16.msra.mxu0 0
    %3903 = vmatprep.subr.bf16.mxu0 0
    %3904 = vmatpush1.bf16.msra.mxu0 0
    %3905 = vmatprep.subr.bf16.mxu0 0
    %3906 = vmatpush1.bf16.msra.mxu0 0
    %3907 = vmatprep.subr.bf16.mxu0 0
    %3908 = vmatpush1.bf16.msra.mxu0 0
    %3909 = vmatprep.subr.bf16.mxu0 0
    %3910 = vmatpush1.bf16.msra.mxu0 0
    %3911 = vmatprep.subr.bf16.mxu0 0
    %3912 = vmatpush1.bf16.msra.mxu0 0
    %3913 = vmatprep.subr.bf16.mxu0 0
    %3914 = vmatpush1.bf16.msra.mxu0 %v3877
    %3915 = vmatprep.subr.bf16.mxu0 0
    %3916 = vmatpush1.bf16.msra.mxu0 %v3876
    %3917 = vmatprep.subr.bf16.mxu0 0
    %3918 = vmatpush2.bf16.msra.mxu0 0
    %3919 = vmatprep.subr.bf16.mxu0 0
    %3920 = vmatpush2.bf16.msra.mxu0 0
    %3921 = vmatprep.subr.bf16.mxu0 0
    %3922 = vmatpush2.bf16.msra.mxu0 0
    %3923 = vmatprep.subr.bf16.mxu0 0
    %3924 = vmatpush2.bf16.msra.mxu0 0
    %3925 = vmatprep.subr.bf16.mxu0 0
    %3926 = vmatpush2.bf16.msra.mxu0 0
    %3927 = vmatprep.subr.bf16.mxu0 0
    %3928 = vmatpush2.bf16.msra.mxu0 0
    %3929 = vmatprep.subr.bf16.mxu0 0
    %3930 = vmatpush2.bf16.msra.mxu0 0
    %3931 = vmatprep.subr.bf16.mxu0 0
    %3932 = vmatpush2.bf16.msra.mxu0 0
    %3933 = vmatprep.mubr.bf16.mxu0 0
    %3934 = vmatmul.mubr.bf16.gmra.mxu0 %v3881
    %v3935 = vpop.f32.mrf.mxu0
    %v3936 = vadd.f32 0.0, %v3935
    %v3937 = vpop.f32.mrf.mxu0
    %v3938 = vpop.f32.mrf.mxu0
    %v3939 = vadd.f32 0.0, %v3938
    %v3940 = vpop.f32.mrf.mxu0
    %3941 = vmatprep.mubr.bf16.mxu0 0
    %3942 = vmatmul.mubr.bf16.gmra.mxu0 %v3884
    %v3943 = vpop.f32.mrf.mxu0
    %v3944 = vadd.f32 0.0, %v3943
    %v3945 = vpop.f32.mrf.mxu0
    %v3946 = vpop.f32.mrf.mxu0
    %v3947 = vadd.f32 0.0, %v3946
    %v3948 = vpop.f32.mrf.mxu0
    %3949 = vmatprep.mubr.bf16.mxu0 0
    %3950 = vmatmul.mubr.bf16.gmra.mxu0 %v3887
    %v3951 = vpop.f32.mrf.mxu0
    %v3952 = vadd.f32 0.0, %v3951
    %v3953 = vpop.f32.mrf.mxu0
    %v3954 = vpop.f32.mrf.mxu0
    %v3955 = vadd.f32 0.0, %v3954
    %v3956 = vpop.f32.mrf.mxu0
    %3957 = vmatprep.mubr.bf16.mxu0 0
    %3958 = vmatmul.mubr.bf16.gmra.mxu0 %v3890
    %v3959 = vpop.f32.mrf.mxu0
    %v3960 = vadd.f32 0.0, %v3959
    %v3961 = vpop.f32.mrf.mxu0
    %v3962 = vpop.f32.mrf.mxu0
    %v3963 = vadd.f32 0.0, %v3962
    %v3964 = vpop.f32.mrf.mxu0
    %3965 = vmatprep.mubr.bf16.mxu0 0
    %3966 = vmatmul.mubr.bf16.gmra.mxu0 %v3893
    %v3967 = vpop.f32.mrf.mxu0
    %v3968 = vadd.f32 0.0, %v3967
    %v3969 = vpop.f32.mrf.mxu0
    %v3970 = vpop.f32.mrf.mxu0
    %v3971 = vadd.f32 0.0, %v3970
    %v3972 = vpop.f32.mrf.mxu0
    %3973 = vmatprep.mubr.bf16.mxu0 0
    %3974 = vmatmul.mubr.bf16.gmra.mxu0 %v3896
    %v3975 = vpop.f32.mrf.mxu0
    %v3976 = vadd.f32 0.0, %v3975
    %v3977 = vpop.f32.mrf.mxu0
    %v3978 = vpop.f32.mrf.mxu0
    %v3979 = vadd.f32 0.0, %v3978
    %v3980 = vpop.f32.mrf.mxu0
    %3981 = vmatprep.mubr.bf16.mxu0 0
    %3982 = vmatmul.mubr.bf16.gmra.mxu0 %v3899
    %v3983 = vpop.f32.mrf.mxu0
    %v3984 = vadd.f32 0.0, %v3983
    %v3985 = vpop.f32.mrf.mxu0
    %v3986 = vpop.f32.mrf.mxu0
    %v3987 = vpop.f32.mrf.mxu0
    %3988 = vdwg.mxu0
    %v3989 = vadd.f32 %v3830, %v3936
    %v3990 = vadd.f32 %v3831, %v3939
    %v3991 = vadd.f32 %v3832, %v3944
    %v3992 = vadd.f32 %v3833, %v3947
    %v3993 = vadd.f32 %v3834, %v3952
    %v3994 = vadd.f32 %v3835, %v3955
    %v3995 = vadd.f32 %v3836, %v3960
    %v3996 = vadd.f32 %v3837, %v3963
    %v3997 = vadd.f32 %v3838, %v3968
    %v3998 = vadd.f32 %v3839, %v3971
    %v3999 = vadd.f32 %v3840, %v3976
    %v4000 = vadd.f32 %v3841, %v3979
    %v4001 = vadd.f32 %v3842, %v3984
    %v4002 = vld [vmem:[#allocation3 + $0x9] sm:$0xff]
    %v4003 = vld [vmem:[#allocation3 + $0x11] sm:$0xff]
    %v4004 = vld [vmem:[#allocation3 + $0x19] sm:$0xff]
    %v4005 = vld [vmem:[#allocation3 + $0x21] sm:$0xff]
    %v4006 = vld [vmem:[#allocation3 + $0x29] sm:$0xff]
    %v4007 = vld [vmem:[#allocation3 + $0x31] sm:$0xff]
    %v4008 = vld [vmem:[#allocation3 + $0x39] sm:$0xff]
    %v4009 = vld [vmem:[#allocation3 + $0x41] sm:$0xff]
    %v4010 = vld [vmem:[#allocation3 + $0x49] sm:$0xff]
    %v4011 = vld [vmem:[#allocation3 + $0x51] sm:$0xff]
    %v4012 = vld [vmem:[#allocation3 + $0x59] sm:$0xff]
    %v4013 = vld [vmem:[#allocation3 + $0x61] sm:$0xff]
    %v4014 = vld [vmem:[#allocation3 + $0x69] sm:$0x3]
    %v4015 = vpack.c.bf16 %v4003, %v4002
    %v4016 = vpack.c.bf16 %v4005, %v4004
    %v4017 = vpack.c.bf16 %v4007, %v4006
    %v4018 = vpack.c.bf16 %v4009, %v4008
    %v4019 = vpack.c.bf16 %v4011, %v4010
    %v4020 = vpack.c.bf16 %v4013, %v4012
    %v4021 = vpack.c.bf16 %v4014, %v4014
    %s4022 = scalar_lea.vmem %s5, 96
    %v4023 = vld [vmem:[%s4022] sm:$0xf]
    %v4024 = vld [vmem:[%s4022 + $0x4] sm:$0xf]
    %v4025 = vld [vmem:[%s4022 + $0x8] sm:$0xf]
    %v4026 = vld [vmem:[%s4022 + $0xc] sm:$0xf]
    %v4031 = vunpack.c.l.b16 %v4023
    %v4032 = vunpack.c.l.b16 %v4024
    %v4033 = vunpack.c.l.b16 %v4025
    %v4034 = vunpack.c.l.b16 %v4026
    %v4035 = vpack.c.b16 %v4032, %v4031
    %v4036 = vpack.c.b16 %v4034, %v4033
    %v4040 = vsel %vm3057, %v4015, 0
    %v4043 = vsel %vm3057, %v4016, 0
    %v4046 = vsel %vm3057, %v4017, 0
    %v4049 = vsel %vm3057, %v4018, 0
    %v4052 = vsel %vm3057, %v4019, 0
    %v4055 = vsel %vm3057, %v4020, 0
    %v4058 = vsel %vm3057, %v4021, 0
    %4060 = vmatprep.subr.bf16.mxu0 0
    %4061 = vmatpush1.bf16.msra.mxu0 0
    %4062 = vmatprep.subr.bf16.mxu0 0
    %4063 = vmatpush1.bf16.msra.mxu0 0
    %4064 = vmatprep.subr.bf16.mxu0 0
    %4065 = vmatpush1.bf16.msra.mxu0 0
    %4066 = vmatprep.subr.bf16.mxu0 0
    %4067 = vmatpush1.bf16.msra.mxu0 0
    %4068 = vmatprep.subr.bf16.mxu0 0
    %4069 = vmatpush1.bf16.msra.mxu0 0
    %4070 = vmatprep.subr.bf16.mxu0 0
    %4071 = vmatpush1.bf16.msra.mxu0 0
    %4072 = vmatprep.subr.bf16.mxu0 0
    %4073 = vmatpush1.bf16.msra.mxu0 %v4036
    %4074 = vmatprep.subr.bf16.mxu0 0
    %4075 = vmatpush1.bf16.msra.mxu0 %v4035
    %4076 = vmatprep.subr.bf16.mxu0 0
    %4077 = vmatpush2.bf16.msra.mxu0 0
    %4078 = vmatprep.subr.bf16.mxu0 0
    %4079 = vmatpush2.bf16.msra.mxu0 0
    %4080 = vmatprep.subr.bf16.mxu0 0
    %4081 = vmatpush2.bf16.msra.mxu0 0
    %4082 = vmatprep.subr.bf16.mxu0 0
    %4083 = vmatpush2.bf16.msra.mxu0 0
    %4084 = vmatprep.subr.bf16.mxu0 0
    %4085 = vmatpush2.bf16.msra.mxu0 0
    %4086 = vmatprep.subr.bf16.mxu0 0
    %4087 = vmatpush2.bf16.msra.mxu0 0
    %4088 = vmatprep.subr.bf16.mxu0 0
    %4089 = vmatpush2.bf16.msra.mxu0 0
    %4090 = vmatprep.subr.bf16.mxu0 0
    %4091 = vmatpush2.bf16.msra.mxu0 0
    %4092 = vmatprep.mubr.bf16.mxu0 0
    %4093 = vmatmul.mubr.bf16.gmra.mxu0 %v4040
    %v4094 = vpop.f32.mrf.mxu0
    %v4095 = vadd.f32 0.0, %v4094
    %v4096 = vpop.f32.mrf.mxu0
    %v4097 = vpop.f32.mrf.mxu0
    %v4098 = vadd.f32 0.0, %v4097
    %v4099 = vpop.f32.mrf.mxu0
    %4100 = vmatprep.mubr.bf16.mxu0 0
    %4101 = vmatmul.mubr.bf16.gmra.mxu0 %v4043
    %v4102 = vpop.f32.mrf.mxu0
    %v4103 = vadd.f32 0.0, %v4102
    %v4104 = vpop.f32.mrf.mxu0
    %v4105 = vpop.f32.mrf.mxu0
    %v4106 = vadd.f32 0.0, %v4105
    %v4107 = vpop.f32.mrf.mxu0
    %4108 = vmatprep.mubr.bf16.mxu0 0
    %4109 = vmatmul.mubr.bf16.gmra.mxu0 %v4046
    %v4110 = vpop.f32.mrf.mxu0
    %v4111 = vadd.f32 0.0, %v4110
    %v4112 = vpop.f32.mrf.mxu0
    %v4113 = vpop.f32.mrf.mxu0
    %v4114 = vadd.f32 0.0, %v4113
    %v4115 = vpop.f32.mrf.mxu0
    %4116 = vmatprep.mubr.bf16.mxu0 0
    %4117 = vmatmul.mubr.bf16.gmra.mxu0 %v4049
    %v4118 = vpop.f32.mrf.mxu0
    %v4119 = vadd.f32 0.0, %v4118
    %v4120 = vpop.f32.mrf.mxu0
    %v4121 = vpop.f32.mrf.mxu0
    %v4122 = vadd.f32 0.0, %v4121
    %v4123 = vpop.f32.mrf.mxu0
    %4124 = vmatprep.mubr.bf16.mxu0 0
    %4125 = vmatmul.mubr.bf16.gmra.mxu0 %v4052
    %v4126 = vpop.f32.mrf.mxu0
    %v4127 = vadd.f32 0.0, %v4126
    %v4128 = vpop.f32.mrf.mxu0
    %v4129 = vpop.f32.mrf.mxu0
    %v4130 = vadd.f32 0.0, %v4129
    %v4131 = vpop.f32.mrf.mxu0
    %4132 = vmatprep.mubr.bf16.mxu0 0
    %4133 = vmatmul.mubr.bf16.gmra.mxu0 %v4055
    %v4134 = vpop.f32.mrf.mxu0
    %v4135 = vadd.f32 0.0, %v4134
    %v4136 = vpop.f32.mrf.mxu0
    %v4137 = vpop.f32.mrf.mxu0
    %v4138 = vadd.f32 0.0, %v4137
    %v4139 = vpop.f32.mrf.mxu0
    %4140 = vmatprep.mubr.bf16.mxu0 0
    %4141 = vmatmul.mubr.bf16.gmra.mxu0 %v4058
    %v4142 = vpop.f32.mrf.mxu0
    %v4143 = vadd.f32 0.0, %v4142
    %v4144 = vpop.f32.mrf.mxu0
    %v4145 = vpop.f32.mrf.mxu0
    %v4146 = vpop.f32.mrf.mxu0
    %4147 = vdwg.mxu0
    %v4148 = vadd.f32 %v3989, %v4095
    %v4149 = vadd.f32 %v3990, %v4098
    %v4150 = vadd.f32 %v3991, %v4103
    %v4151 = vadd.f32 %v3992, %v4106
    %v4152 = vadd.f32 %v3993, %v4111
    %v4153 = vadd.f32 %v3994, %v4114
    %v4154 = vadd.f32 %v3995, %v4119
    %v4155 = vadd.f32 %v3996, %v4122
    %v4156 = vadd.f32 %v3997, %v4127
    %v4157 = vadd.f32 %v3998, %v4130
    %v4158 = vadd.f32 %v3999, %v4135
    %v4159 = vadd.f32 %v4000, %v4138
    %v4160 = vadd.f32 %v4001, %v4143
    %v4161 = vld [vmem:[#allocation3 + $0xa] sm:$0xff]
    %v4162 = vld [vmem:[#allocation3 + $0x12] sm:$0xff]
    %v4163 = vld [vmem:[#allocation3 + $0x1a] sm:$0xff]
    %v4164 = vld [vmem:[#allocation3 + $0x22] sm:$0xff]
    %v4165 = vld [vmem:[#allocation3 + $0x2a] sm:$0xff]
    %v4166 = vld [vmem:[#allocation3 + $0x32] sm:$0xff]
    %v4167 = vld [vmem:[#allocation3 + $0x3a] sm:$0xff]
    %v4168 = vld [vmem:[#allocation3 + $0x42] sm:$0xff]
    %v4169 = vld [vmem:[#allocation3 + $0x4a] sm:$0xff]
    %v4170 = vld [vmem:[#allocation3 + $0x52] sm:$0xff]
    %v4171 = vld [vmem:[#allocation3 + $0x5a] sm:$0xff]
    %v4172 = vld [vmem:[#allocation3 + $0x62] sm:$0xff]
    %v4173 = vld [vmem:[#allocation3 + $0x6a] sm:$0x3]
    %v4174 = vpack.c.bf16 %v4162, %v4161
    %v4175 = vpack.c.bf16 %v4164, %v4163
    %v4176 = vpack.c.bf16 %v4166, %v4165
    %v4177 = vpack.c.bf16 %v4168, %v4167
    %v4178 = vpack.c.bf16 %v4170, %v4169
    %v4179 = vpack.c.bf16 %v4172, %v4171
    %v4180 = vpack.c.bf16 %v4173, %v4173
    %s4181 = scalar_lea.vmem %s5, 112
    %v4182 = vld [vmem:[%s4181] sm:$0xf]
    %v4183 = vld [vmem:[%s4181 + $0x4] sm:$0xf]
    %v4184 = vld [vmem:[%s4181 + $0x8] sm:$0xf]
    %v4185 = vld [vmem:[%s4181 + $0xc] sm:$0xf]
    %v4190 = vunpack.c.l.b16 %v4182
    %v4191 = vunpack.c.l.b16 %v4183
    %v4192 = vunpack.c.l.b16 %v4184
    %v4193 = vunpack.c.l.b16 %v4185
    %v4194 = vpack.c.b16 %v4191, %v4190
    %v4195 = vpack.c.b16 %v4193, %v4192
    %v4199 = vsel %vm3057, %v4174, 0
    %v4202 = vsel %vm3057, %v4175, 0
    %v4205 = vsel %vm3057, %v4176, 0
    %v4208 = vsel %vm3057, %v4177, 0
    %v4211 = vsel %vm3057, %v4178, 0
    %v4214 = vsel %vm3057, %v4179, 0
    %v4217 = vsel %vm3057, %v4180, 0
    %4219 = vmatprep.subr.bf16.mxu0 0
    %4220 = vmatpush1.bf16.msra.mxu0 0
    %4221 = vmatprep.subr.bf16.mxu0 0
    %4222 = vmatpush1.bf16.msra.mxu0 0
    %4223 = vmatprep.subr.bf16.mxu0 0
    %4224 = vmatpush1.bf16.msra.mxu0 0
    %4225 = vmatprep.subr.bf16.mxu0 0
    %4226 = vmatpush1.bf16.msra.mxu0 0
    %4227 = vmatprep.subr.bf16.mxu0 0
    %4228 = vmatpush1.bf16.msra.mxu0 0
    %4229 = vmatprep.subr.bf16.mxu0 0
    %4230 = vmatpush1.bf16.msra.mxu0 0
    %4231 = vmatprep.subr.bf16.mxu0 0
    %4232 = vmatpush1.bf16.msra.mxu0 %v4195
    %4233 = vmatprep.subr.bf16.mxu0 0
    %4234 = vmatpush1.bf16.msra.mxu0 %v4194
    %4235 = vmatprep.subr.bf16.mxu0 0
    %4236 = vmatpush2.bf16.msra.mxu0 0
    %4237 = vmatprep.subr.bf16.mxu0 0
    %4238 = vmatpush2.bf16.msra.mxu0 0
    %4239 = vmatprep.subr.bf16.mxu0 0
    %4240 = vmatpush2.bf16.msra.mxu0 0
    %4241 = vmatprep.subr.bf16.mxu0 0
    %4242 = vmatpush2.bf16.msra.mxu0 0
    %4243 = vmatprep.subr.bf16.mxu0 0
    %4244 = vmatpush2.bf16.msra.mxu0 0
    %4245 = vmatprep.subr.bf16.mxu0 0
    %4246 = vmatpush2.bf16.msra.mxu0 0
    %4247 = vmatprep.subr.bf16.mxu0 0
    %4248 = vmatpush2.bf16.msra.mxu0 0
    %4249 = vmatprep.subr.bf16.mxu0 0
    %4250 = vmatpush2.bf16.msra.mxu0 0
    %4251 = vmatprep.mubr.bf16.mxu0 0
    %4252 = vmatmul.mubr.bf16.gmra.mxu0 %v4199
    %v4253 = vpop.f32.mrf.mxu0
    %v4254 = vadd.f32 0.0, %v4253
    %v4255 = vpop.f32.mrf.mxu0
    %v4256 = vpop.f32.mrf.mxu0
    %v4257 = vadd.f32 0.0, %v4256
    %v4258 = vpop.f32.mrf.mxu0
    %4259 = vmatprep.mubr.bf16.mxu0 0
    %4260 = vmatmul.mubr.bf16.gmra.mxu0 %v4202
    %v4261 = vpop.f32.mrf.mxu0
    %v4262 = vadd.f32 0.0, %v4261
    %v4263 = vpop.f32.mrf.mxu0
    %v4264 = vpop.f32.mrf.mxu0
    %v4265 = vadd.f32 0.0, %v4264
    %v4266 = vpop.f32.mrf.mxu0
    %4267 = vmatprep.mubr.bf16.mxu0 0
    %4268 = vmatmul.mubr.bf16.gmra.mxu0 %v4205
    %v4269 = vpop.f32.mrf.mxu0
    %v4270 = vadd.f32 0.0, %v4269
    %v4271 = vpop.f32.mrf.mxu0
    %v4272 = vpop.f32.mrf.mxu0
    %v4273 = vadd.f32 0.0, %v4272
    %v4274 = vpop.f32.mrf.mxu0
    %4275 = vmatprep.mubr.bf16.mxu0 0
    %4276 = vmatmul.mubr.bf16.gmra.mxu0 %v4208
    %v4277 = vpop.f32.mrf.mxu0
    %v4278 = vadd.f32 0.0, %v4277
    %v4279 = vpop.f32.mrf.mxu0
    %v4280 = vpop.f32.mrf.mxu0
    %v4281 = vadd.f32 0.0, %v4280
    %v4282 = vpop.f32.mrf.mxu0
    %4283 = vmatprep.mubr.bf16.mxu0 0
    %4284 = vmatmul.mubr.bf16.gmra.mxu0 %v4211
    %v4285 = vpop.f32.mrf.mxu0
    %v4286 = vadd.f32 0.0, %v4285
    %v4287 = vpop.f32.mrf.mxu0
    %v4288 = vpop.f32.mrf.mxu0
    %v4289 = vadd.f32 0.0, %v4288
    %v4290 = vpop.f32.mrf.mxu0
    %4291 = vmatprep.mubr.bf16.mxu0 0
    %4292 = vmatmul.mubr.bf16.gmra.mxu0 %v4214
    %v4293 = vpop.f32.mrf.mxu0
    %v4294 = vadd.f32 0.0, %v4293
    %v4295 = vpop.f32.mrf.mxu0
    %v4296 = vpop.f32.mrf.mxu0
    %v4297 = vadd.f32 0.0, %v4296
    %v4298 = vpop.f32.mrf.mxu0
    %4299 = vmatprep.mubr.bf16.mxu0 0
    %4300 = vmatmul.mubr.bf16.gmra.mxu0 %v4217
    %v4301 = vpop.f32.mrf.mxu0
    %v4302 = vadd.f32 0.0, %v4301
    %v4303 = vpop.f32.mrf.mxu0
    %v4304 = vpop.f32.mrf.mxu0
    %v4305 = vpop.f32.mrf.mxu0
    %4306 = vdwg.mxu0
    %v4307 = vadd.f32 %v4148, %v4254
    %v4308 = vadd.f32 %v4149, %v4257
    %v4309 = vadd.f32 %v4150, %v4262
    %v4310 = vadd.f32 %v4151, %v4265
    %v4311 = vadd.f32 %v4152, %v4270
    %v4312 = vadd.f32 %v4153, %v4273
    %v4313 = vadd.f32 %v4154, %v4278
    %v4314 = vadd.f32 %v4155, %v4281
    %v4315 = vadd.f32 %v4156, %v4286
    %v4316 = vadd.f32 %v4157, %v4289
    %v4317 = vadd.f32 %v4158, %v4294
    %v4318 = vadd.f32 %v4159, %v4297
    %v4319 = vadd.f32 %v4160, %v4302
    %v4320 = vld [vmem:[#allocation3 + $0xe] sm:$0xff]
    %v4321 = vld [vmem:[#allocation3 + $0x16] sm:$0xff]
    %v4322 = vld [vmem:[#allocation3 + $0x1e] sm:$0xff]
    %v4323 = vld [vmem:[#allocation3 + $0x26] sm:$0xff]
    %v4324 = vld [vmem:[#allocation3 + $0x2e] sm:$0xff]
    %v4325 = vld [vmem:[#allocation3 + $0x36] sm:$0xff]
    %v4326 = vld [vmem:[#allocation3 + $0x3e] sm:$0xff]
    %v4327 = vld [vmem:[#allocation3 + $0x46] sm:$0xff]
    %v4328 = vld [vmem:[#allocation3 + $0x4e] sm:$0xff]
    %v4329 = vld [vmem:[#allocation3 + $0x56] sm:$0xff]
    %v4330 = vld [vmem:[#allocation3 + $0x5e] sm:$0xff]
    %v4331 = vld [vmem:[#allocation3 + $0x66] sm:$0xff]
    %v4332 = vld [vmem:[#allocation3 + $0x6e] sm:$0x3]
    %v4333 = vpack.c.bf16 %v4321, %v4320
    %v4334 = vpack.c.bf16 %v4323, %v4322
    %v4335 = vpack.c.bf16 %v4325, %v4324
    %v4336 = vpack.c.bf16 %v4327, %v4326
    %v4337 = vpack.c.bf16 %v4329, %v4328
    %v4338 = vpack.c.bf16 %v4331, %v4330
    %v4339 = vpack.c.bf16 %v4332, %v4332
    %s4340 = scalar_lea.vmem %s5, 128
    %v4341 = vld [vmem:[%s4340] sm:$0xf]
    %v4342 = vld [vmem:[%s4340 + $0x4] sm:$0xf]
    %v4343 = vld [vmem:[%s4340 + $0x8] sm:$0xf]
    %v4344 = vld [vmem:[%s4340 + $0xc] sm:$0xf]
    %v4349 = vunpack.c.l.b16 %v4341
    %v4350 = vunpack.c.l.b16 %v4342
    %v4351 = vunpack.c.l.b16 %v4343
    %v4352 = vunpack.c.l.b16 %v4344
    %v4353 = vpack.c.b16 %v4350, %v4349
    %v4354 = vpack.c.b16 %v4352, %v4351
    %v4358 = vsel %vm3057, %v4333, 0
    %v4361 = vsel %vm3057, %v4334, 0
    %v4364 = vsel %vm3057, %v4335, 0
    %v4367 = vsel %vm3057, %v4336, 0
    %v4370 = vsel %vm3057, %v4337, 0
    %v4373 = vsel %vm3057, %v4338, 0
    %v4376 = vsel %vm3057, %v4339, 0
    %4378 = vmatprep.subr.bf16.mxu0 0
    %4379 = vmatpush1.bf16.msra.mxu0 0
    %4380 = vmatprep.subr.bf16.mxu0 0
    %4381 = vmatpush1.bf16.msra.mxu0 0
    %4382 = vmatprep.subr.bf16.mxu0 0
    %4383 = vmatpush1.bf16.msra.mxu0 0
    %4384 = vmatprep.subr.bf16.mxu0 0
    %4385 = vmatpush1.bf16.msra.mxu0 0
    %4386 = vmatprep.subr.bf16.mxu0 0
    %4387 = vmatpush1.bf16.msra.mxu0 0
    %4388 = vmatprep.subr.bf16.mxu0 0
    %4389 = vmatpush1.bf16.msra.mxu0 0
    %4390 = vmatprep.subr.bf16.mxu0 0
    %4391 = vmatpush1.bf16.msra.mxu0 %v4354
    %4392 = vmatprep.subr.bf16.mxu0 0
    %4393 = vmatpush1.bf16.msra.mxu0 %v4353
    %4394 = vmatprep.subr.bf16.mxu0 0
    %4395 = vmatpush2.bf16.msra.mxu0 0
    %4396 = vmatprep.subr.bf16.mxu0 0
    %4397 = vmatpush2.bf16.msra.mxu0 0
    %4398 = vmatprep.subr.bf16.mxu0 0
    %4399 = vmatpush2.bf16.msra.mxu0 0
    %4400 = vmatprep.subr.bf16.mxu0 0
    %4401 = vmatpush2.bf16.msra.mxu0 0
    %4402 = vmatprep.subr.bf16.mxu0 0
    %4403 = vmatpush2.bf16.msra.mxu0 0
    %4404 = vmatprep.subr.bf16.mxu0 0
    %4405 = vmatpush2.bf16.msra.mxu0 0
    %4406 = vmatprep.subr.bf16.mxu0 0
    %4407 = vmatpush2.bf16.msra.mxu0 0
    %4408 = vmatprep.subr.bf16.mxu0 0
    %4409 = vmatpush2.bf16.msra.mxu0 0
    %4410 = vmatprep.mubr.bf16.mxu0 0
    %4411 = vmatmul.mubr.bf16.gmra.mxu0 %v4358
    %v4412 = vpop.f32.mrf.mxu0
    %v4413 = vadd.f32 0.0, %v4412
    %v4414 = vpop.f32.mrf.mxu0
    %v4415 = vpop.f32.mrf.mxu0
    %v4416 = vadd.f32 0.0, %v4415
    %v4417 = vpop.f32.mrf.mxu0
    %4418 = vmatprep.mubr.bf16.mxu0 0
    %4419 = vmatmul.mubr.bf16.gmra.mxu0 %v4361
    %v4420 = vpop.f32.mrf.mxu0
    %v4421 = vadd.f32 0.0, %v4420
    %v4422 = vpop.f32.mrf.mxu0
    %v4423 = vpop.f32.mrf.mxu0
    %v4424 = vadd.f32 0.0, %v4423
    %v4425 = vpop.f32.mrf.mxu0
    %4426 = vmatprep.mubr.bf16.mxu0 0
    %4427 = vmatmul.mubr.bf16.gmra.mxu0 %v4364
    %v4428 = vpop.f32.mrf.mxu0
    %v4429 = vadd.f32 0.0, %v4428
    %v4430 = vpop.f32.mrf.mxu0
    %v4431 = vpop.f32.mrf.mxu0
    %v4432 = vadd.f32 0.0, %v4431
    %v4433 = vpop.f32.mrf.mxu0
    %4434 = vmatprep.mubr.bf16.mxu0 0
    %4435 = vmatmul.mubr.bf16.gmra.mxu0 %v4367
    %v4436 = vpop.f32.mrf.mxu0
    %v4437 = vadd.f32 0.0, %v4436
    %v4438 = vpop.f32.mrf.mxu0
    %v4439 = vpop.f32.mrf.mxu0
    %v4440 = vadd.f32 0.0, %v4439
    %v4441 = vpop.f32.mrf.mxu0
    %4442 = vmatprep.mubr.bf16.mxu0 0
    %4443 = vmatmul.mubr.bf16.gmra.mxu0 %v4370
    %v4444 = vpop.f32.mrf.mxu0
    %v4445 = vadd.f32 0.0, %v4444
    %v4446 = vpop.f32.mrf.mxu0
    %v4447 = vpop.f32.mrf.mxu0
    %v4448 = vadd.f32 0.0, %v4447
    %v4449 = vpop.f32.mrf.mxu0
    %4450 = vmatprep.mubr.bf16.mxu0 0
    %4451 = vmatmul.mubr.bf16.gmra.mxu0 %v4373
    %v4452 = vpop.f32.mrf.mxu0
    %v4453 = vadd.f32 0.0, %v4452
    %v4454 = vpop.f32.mrf.mxu0
    %v4455 = vpop.f32.mrf.mxu0
    %v4456 = vadd.f32 0.0, %v4455
    %v4457 = vpop.f32.mrf.mxu0
    %4458 = vmatprep.mubr.bf16.mxu0 0
    %4459 = vmatmul.mubr.bf16.gmra.mxu0 %v4376
    %v4460 = vpop.f32.mrf.mxu0
    %v4461 = vadd.f32 0.0, %v4460
    %v4462 = vpop.f32.mrf.mxu0
    %v4463 = vpop.f32.mrf.mxu0
    %v4464 = vpop.f32.mrf.mxu0
    %4465 = vdwg.mxu0
    %v4466 = vadd.f32 %v4307, %v4413
    %v4467 = vadd.f32 %v4308, %v4416
    %v4468 = vadd.f32 %v4309, %v4421
    %v4469 = vadd.f32 %v4310, %v4424
    %v4470 = vadd.f32 %v4311, %v4429
    %v4471 = vadd.f32 %v4312, %v4432
    %v4472 = vadd.f32 %v4313, %v4437
    %v4473 = vadd.f32 %v4314, %v4440
    %v4474 = vadd.f32 %v4315, %v4445
    %v4475 = vadd.f32 %v4316, %v4448
    %v4476 = vadd.f32 %v4317, %v4453
    %v4477 = vadd.f32 %v4318, %v4456
    %v4478 = vadd.f32 %v4319, %v4461
    %v4479 = vld [vmem:[#allocation3 + $0xf] sm:$0xff]
    %v4480 = vld [vmem:[#allocation3 + $0x17] sm:$0xff]
    %v4481 = vld [vmem:[#allocation3 + $0x1f] sm:$0xff]
    %v4482 = vld [vmem:[#allocation3 + $0x27] sm:$0xff]
    %v4483 = vld [vmem:[#allocation3 + $0x2f] sm:$0xff]
    %v4484 = vld [vmem:[#allocation3 + $0x37] sm:$0xff]
    %v4485 = vld [vmem:[#allocation3 + $0x3f] sm:$0xff]
    %v4486 = vld [vmem:[#allocation3 + $0x47] sm:$0xff]
    %v4487 = vld [vmem:[#allocation3 + $0x4f] sm:$0xff]
    %v4488 = vld [vmem:[#allocation3 + $0x57] sm:$0xff]
    %v4489 = vld [vmem:[#allocation3 + $0x5f] sm:$0xff]
    %v4490 = vld [vmem:[#allocation3 + $0x67] sm:$0xff]
    %v4491 = vld [vmem:[#allocation3 + $0x6f] sm:$0x3]
    %v4492 = vpack.c.bf16 %v4480, %v4479
    %v4493 = vpack.c.bf16 %v4482, %v4481
    %v4494 = vpack.c.bf16 %v4484, %v4483
    %v4495 = vpack.c.bf16 %v4486, %v4485
    %v4496 = vpack.c.bf16 %v4488, %v4487
    %v4497 = vpack.c.bf16 %v4490, %v4489
    %v4498 = vpack.c.bf16 %v4491, %v4491
    %s4499 = scalar_lea.vmem %s5, 144
    %v4500 = vld [vmem:[%s4499] sm:$0xf]
    %v4501 = vld [vmem:[%s4499 + $0x4] sm:$0xf]
    %v4502 = vld [vmem:[%s4499 + $0x8] sm:$0xf]
    %v4503 = vld [vmem:[%s4499 + $0xc] sm:$0xf]
    %v4508 = vunpack.c.l.b16 %v4500
    %v4509 = vunpack.c.l.b16 %v4501
    %v4510 = vunpack.c.l.b16 %v4502
    %v4511 = vunpack.c.l.b16 %v4503
    %v4512 = vpack.c.b16 %v4509, %v4508
    %v4513 = vpack.c.b16 %v4511, %v4510
    %v4517 = vsel %vm3057, %v4492, 0
    %v4520 = vsel %vm3057, %v4493, 0
    %v4523 = vsel %vm3057, %v4494, 0
    %v4526 = vsel %vm3057, %v4495, 0
    %v4529 = vsel %vm3057, %v4496, 0
    %v4532 = vsel %vm3057, %v4497, 0
    %v4535 = vsel %vm3057, %v4498, 0
    %4537 = vmatprep.subr.bf16.mxu0 0
    %4538 = vmatpush1.bf16.msra.mxu0 0
    %4539 = vmatprep.subr.bf16.mxu0 0
    %4540 = vmatpush1.bf16.msra.mxu0 0
    %4541 = vmatprep.subr.bf16.mxu0 0
    %4542 = vmatpush1.bf16.msra.mxu0 0
    %4543 = vmatprep.subr.bf16.mxu0 0
    %4544 = vmatpush1.bf16.msra.mxu0 0
    %4545 = vmatprep.subr.bf16.mxu0 0
    %4546 = vmatpush1.bf16.msra.mxu0 0
    %4547 = vmatprep.subr.bf16.mxu0 0
    %4548 = vmatpush1.bf16.msra.mxu0 0
    %4549 = vmatprep.subr.bf16.mxu0 0
    %4550 = vmatpush1.bf16.msra.mxu0 %v4513
    %4551 = vmatprep.subr.bf16.mxu0 0
    %4552 = vmatpush1.bf16.msra.mxu0 %v4512
    %4553 = vmatprep.subr.bf16.mxu0 0
    %4554 = vmatpush2.bf16.msra.mxu0 0
    %4555 = vmatprep.subr.bf16.mxu0 0
    %4556 = vmatpush2.bf16.msra.mxu0 0
    %4557 = vmatprep.subr.bf16.mxu0 0
    %4558 = vmatpush2.bf16.msra.mxu0 0
    %4559 = vmatprep.subr.bf16.mxu0 0
    %4560 = vmatpush2.bf16.msra.mxu0 0
    %4561 = vmatprep.subr.bf16.mxu0 0
    %4562 = vmatpush2.bf16.msra.mxu0 0
    %4563 = vmatprep.subr.bf16.mxu0 0
    %4564 = vmatpush2.bf16.msra.mxu0 0
    %4565 = vmatprep.subr.bf16.mxu0 0
    %4566 = vmatpush2.bf16.msra.mxu0 0
    %4567 = vmatprep.subr.bf16.mxu0 0
    %4568 = vmatpush2.bf16.msra.mxu0 0
    %4569 = vmatprep.mubr.bf16.mxu0 0
    %4570 = vmatmul.mubr.bf16.gmra.mxu0 %v4517
    %v4571 = vpop.f32.mrf.mxu0
    %v4572 = vadd.f32 0.0, %v4571
    %v4573 = vpop.f32.mrf.mxu0
    %v4574 = vpop.f32.mrf.mxu0
    %v4575 = vadd.f32 0.0, %v4574
    %v4576 = vpop.f32.mrf.mxu0
    %4577 = vmatprep.mubr.bf16.mxu0 0
    %4578 = vmatmul.mubr.bf16.gmra.mxu0 %v4520
    %v4579 = vpop.f32.mrf.mxu0
    %v4580 = vadd.f32 0.0, %v4579
    %v4581 = vpop.f32.mrf.mxu0
    %v4582 = vpop.f32.mrf.mxu0
    %v4583 = vadd.f32 0.0, %v4582
    %v4584 = vpop.f32.mrf.mxu0
    %4585 = vmatprep.mubr.bf16.mxu0 0
    %4586 = vmatmul.mubr.bf16.gmra.mxu0 %v4523
    %v4587 = vpop.f32.mrf.mxu0
    %v4588 = vadd.f32 0.0, %v4587
    %v4589 = vpop.f32.mrf.mxu0
    %v4590 = vpop.f32.mrf.mxu0
    %v4591 = vadd.f32 0.0, %v4590
    %v4592 = vpop.f32.mrf.mxu0
    %4593 = vmatprep.mubr.bf16.mxu0 0
    %4594 = vmatmul.mubr.bf16.gmra.mxu0 %v4526
    %v4595 = vpop.f32.mrf.mxu0
    %v4596 = vadd.f32 0.0, %v4595
    %v4597 = vpop.f32.mrf.mxu0
    %v4598 = vpop.f32.mrf.mxu0
    %v4599 = vadd.f32 0.0, %v4598
    %v4600 = vpop.f32.mrf.mxu0
    %4601 = vmatprep.mubr.bf16.mxu0 0
    %4602 = vmatmul.mubr.bf16.gmra.mxu0 %v4529
    %v4603 = vpop.f32.mrf.mxu0
    %v4604 = vadd.f32 0.0, %v4603
    %v4605 = vpop.f32.mrf.mxu0
    %v4606 = vpop.f32.mrf.mxu0
    %v4607 = vadd.f32 0.0, %v4606
    %v4608 = vpop.f32.mrf.mxu0
    %4609 = vmatprep.mubr.bf16.mxu0 0
    %4610 = vmatmul.mubr.bf16.gmra.mxu0 %v4532
    %v4611 = vpop.f32.mrf.mxu0
    %v4612 = vadd.f32 0.0, %v4611
    %v4613 = vpop.f32.mrf.mxu0
    %v4614 = vpop.f32.mrf.mxu0
    %v4615 = vadd.f32 0.0, %v4614
    %v4616 = vpop.f32.mrf.mxu0
    %4617 = vmatprep.mubr.bf16.mxu0 0
    %4618 = vmatmul.mubr.bf16.gmra.mxu0 %v4535
    %v4619 = vpop.f32.mrf.mxu0
    %v4620 = vadd.f32 0.0, %v4619
    %v4621 = vpop.f32.mrf.mxu0
    %v4622 = vpop.f32.mrf.mxu0
    %v4623 = vpop.f32.mrf.mxu0
    %4624 = vdwg.mxu0
    %v4625 = vadd.f32 %v4466, %v4572
    %v4626 = vadd.f32 %v4467, %v4575
    %v4627 = vadd.f32 %v4468, %v4580
    %v4628 = vadd.f32 %v4469, %v4583
    %v4629 = vadd.f32 %v4470, %v4588
    %v4630 = vadd.f32 %v4471, %v4591
    %v4631 = vadd.f32 %v4472, %v4596
    %v4632 = vadd.f32 %v4473, %v4599
    %v4633 = vadd.f32 %v4474, %v4604
    %v4634 = vadd.f32 %v4475, %v4607
    %v4635 = vadd.f32 %v4476, %v4612
    %v4636 = vadd.f32 %v4477, %v4615
    %v4637 = vadd.f32 %v4478, %v4620
    %v4638 = vld [vmem:[#allocation3 + $0x10] sm:$0xff]
    %v4639 = vld [vmem:[#allocation3 + $0x18] sm:$0xff]
    %v4640 = vld [vmem:[#allocation3 + $0x20] sm:$0xff]
    %v4641 = vld [vmem:[#allocation3 + $0x28] sm:$0xff]
    %v4642 = vld [vmem:[#allocation3 + $0x30] sm:$0xff]
    %v4643 = vld [vmem:[#allocation3 + $0x38] sm:$0xff]
    %v4644 = vld [vmem:[#allocation3 + $0x40] sm:$0xff]
    %v4645 = vld [vmem:[#allocation3 + $0x48] sm:$0xff]
    %v4646 = vld [vmem:[#allocation3 + $0x50] sm:$0xff]
    %v4647 = vld [vmem:[#allocation3 + $0x58] sm:$0xff]
    %v4648 = vld [vmem:[#allocation3 + $0x60] sm:$0xff]
    %v4649 = vld [vmem:[#allocation3 + $0x68] sm:$0xff]
    %v4650 = vld [vmem:[#allocation3 + $0x70] sm:$0x3]
    %v4651 = vpack.c.bf16 %v4639, %v4638
    %v4652 = vpack.c.bf16 %v4641, %v4640
    %v4653 = vpack.c.bf16 %v4643, %v4642
    %v4654 = vpack.c.bf16 %v4645, %v4644
    %v4655 = vpack.c.bf16 %v4647, %v4646
    %v4656 = vpack.c.bf16 %v4649, %v4648
    %v4657 = vpack.c.bf16 %v4650, %v4650
    %s4658 = scalar_lea.vmem %s5, 160
    %v4659 = vld [vmem:[%s4658] sm:$0xf]
    %v4660 = vld [vmem:[%s4658 + $0x4] sm:$0xf]
    %v4661 = vld [vmem:[%s4658 + $0x8] sm:$0xf]
    %v4662 = vld [vmem:[%s4658 + $0xc] sm:$0xf]
    %v4667 = vunpack.c.l.b16 %v4659
    %v4668 = vunpack.c.l.b16 %v4660
    %v4669 = vunpack.c.l.b16 %v4661
    %v4670 = vunpack.c.l.b16 %v4662
    %v4671 = vpack.c.b16 %v4668, %v4667
    %v4672 = vpack.c.b16 %v4670, %v4669
    %v4676 = vsel %vm3057, %v4651, 0
    %v4679 = vsel %vm3057, %v4652, 0
    %v4682 = vsel %vm3057, %v4653, 0
    %v4685 = vsel %vm3057, %v4654, 0
    %v4688 = vsel %vm3057, %v4655, 0
    %v4691 = vsel %vm3057, %v4656, 0
    %v4694 = vsel %vm3057, %v4657, 0
    %4696 = vmatprep.subr.bf16.mxu0 0
    %4697 = vmatpush1.bf16.msra.mxu0 0
    %4698 = vmatprep.subr.bf16.mxu0 0
    %4699 = vmatpush1.bf16.msra.mxu0 0
    %4700 = vmatprep.subr.bf16.mxu0 0
    %4701 = vmatpush1.bf16.msra.mxu0 0
    %4702 = vmatprep.subr.bf16.mxu0 0
    %4703 = vmatpush1.bf16.msra.mxu0 0
    %4704 = vmatprep.subr.bf16.mxu0 0
    %4705 = vmatpush1.bf16.msra.mxu0 0
    %4706 = vmatprep.subr.bf16.mxu0 0
    %4707 = vmatpush1.bf16.msra.mxu0 0
    %4708 = vmatprep.subr.bf16.mxu0 0
    %4709 = vmatpush1.bf16.msra.mxu0 %v4672
    %4710 = vmatprep.subr.bf16.mxu0 0
    %4711 = vmatpush1.bf16.msra.mxu0 %v4671
    %4712 = vmatprep.subr.bf16.mxu0 0
    %4713 = vmatpush2.bf16.msra.mxu0 0
    %4714 = vmatprep.subr.bf16.mxu0 0
    %4715 = vmatpush2.bf16.msra.mxu0 0
    %4716 = vmatprep.subr.bf16.mxu0 0
    %4717 = vmatpush2.bf16.msra.mxu0 0
    %4718 = vmatprep.subr.bf16.mxu0 0
    %4719 = vmatpush2.bf16.msra.mxu0 0
    %4720 = vmatprep.subr.bf16.mxu0 0
    %4721 = vmatpush2.bf16.msra.mxu0 0
    %4722 = vmatprep.subr.bf16.mxu0 0
    %4723 = vmatpush2.bf16.msra.mxu0 0
    %4724 = vmatprep.subr.bf16.mxu0 0
    %4725 = vmatpush2.bf16.msra.mxu0 0
    %4726 = vmatprep.subr.bf16.mxu0 0
    %4727 = vmatpush2.bf16.msra.mxu0 0
    %4728 = vmatprep.mubr.bf16.mxu0 0
    %4729 = vmatmul.mubr.bf16.gmra.mxu0 %v4676
    %v4730 = vpop.f32.mrf.mxu0
    %v4731 = vadd.f32 0.0, %v4730
    %v4732 = vpop.f32.mrf.mxu0
    %v4733 = vpop.f32.mrf.mxu0
    %v4734 = vadd.f32 0.0, %v4733
    %v4735 = vpop.f32.mrf.mxu0
    %4736 = vmatprep.mubr.bf16.mxu0 0
    %4737 = vmatmul.mubr.bf16.gmra.mxu0 %v4679
    %v4738 = vpop.f32.mrf.mxu0
    %v4739 = vadd.f32 0.0, %v4738
    %v4740 = vpop.f32.mrf.mxu0
    %v4741 = vpop.f32.mrf.mxu0
    %v4742 = vadd.f32 0.0, %v4741
    %v4743 = vpop.f32.mrf.mxu0
    %4744 = vmatprep.mubr.bf16.mxu0 0
    %4745 = vmatmul.mubr.bf16.gmra.mxu0 %v4682
    %v4746 = vpop.f32.mrf.mxu0
    %v4747 = vadd.f32 0.0, %v4746
    %v4748 = vpop.f32.mrf.mxu0
    %v4749 = vpop.f32.mrf.mxu0
    %v4750 = vadd.f32 0.0, %v4749
    %v4751 = vpop.f32.mrf.mxu0
    %4752 = vmatprep.mubr.bf16.mxu0 0
    %4753 = vmatmul.mubr.bf16.gmra.mxu0 %v4685
    %v4754 = vpop.f32.mrf.mxu0
    %v4755 = vadd.f32 0.0, %v4754
    %v4756 = vpop.f32.mrf.mxu0
    %v4757 = vpop.f32.mrf.mxu0
    %v4758 = vadd.f32 0.0, %v4757
    %v4759 = vpop.f32.mrf.mxu0
    %4760 = vmatprep.mubr.bf16.mxu0 0
    %4761 = vmatmul.mubr.bf16.gmra.mxu0 %v4688
    %v4762 = vpop.f32.mrf.mxu0
    %v4763 = vadd.f32 0.0, %v4762
    %v4764 = vpop.f32.mrf.mxu0
    %v4765 = vpop.f32.mrf.mxu0
    %v4766 = vadd.f32 0.0, %v4765
    %v4767 = vpop.f32.mrf.mxu0
    %4768 = vmatprep.mubr.bf16.mxu0 0
    %4769 = vmatmul.mubr.bf16.gmra.mxu0 %v4691
    %v4770 = vpop.f32.mrf.mxu0
    %v4771 = vadd.f32 0.0, %v4770
    %v4772 = vpop.f32.mrf.mxu0
    %v4773 = vpop.f32.mrf.mxu0
    %v4774 = vadd.f32 0.0, %v4773
    %v4775 = vpop.f32.mrf.mxu0
    %4776 = vmatprep.mubr.bf16.mxu0 0
    %4777 = vmatmul.mubr.bf16.gmra.mxu0 %v4694
    %v4778 = vpop.f32.mrf.mxu0
    %v4779 = vadd.f32 0.0, %v4778
    %v4780 = vpop.f32.mrf.mxu0
    %v4781 = vpop.f32.mrf.mxu0
    %v4782 = vpop.f32.mrf.mxu0
    %4783 = vdwg.mxu0
    %v4784 = vadd.f32 %v4625, %v4731
    %v4785 = vadd.f32 %v4626, %v4734
    %v4786 = vadd.f32 %v4627, %v4739
    %v4787 = vadd.f32 %v4628, %v4742
    %v4788 = vadd.f32 %v4629, %v4747
    %v4789 = vadd.f32 %v4630, %v4750
    %v4790 = vadd.f32 %v4631, %v4755
    %v4791 = vadd.f32 %v4632, %v4758
    %v4792 = vadd.f32 %v4633, %v4763
    %v4793 = vadd.f32 %v4634, %v4766
    %v4794 = vadd.f32 %v4635, %v4771
    %v4795 = vadd.f32 %v4636, %v4774
    %v4796 = vadd.f32 %v4637, %v4779
    %v4797 = vld [vmem:[#allocation3 + $0x11] sm:$0xff]
    %v4798 = vld [vmem:[#allocation3 + $0x19] sm:$0xff]
    %v4799 = vld [vmem:[#allocation3 + $0x21] sm:$0xff]
    %v4800 = vld [vmem:[#allocation3 + $0x29] sm:$0xff]
    %v4801 = vld [vmem:[#allocation3 + $0x31] sm:$0xff]
    %v4802 = vld [vmem:[#allocation3 + $0x39] sm:$0xff]
    %v4803 = vld [vmem:[#allocation3 + $0x41] sm:$0xff]
    %v4804 = vld [vmem:[#allocation3 + $0x49] sm:$0xff]
    %v4805 = vld [vmem:[#allocation3 + $0x51] sm:$0xff]
    %v4806 = vld [vmem:[#allocation3 + $0x59] sm:$0xff]
    %v4807 = vld [vmem:[#allocation3 + $0x61] sm:$0xff]
    %v4808 = vld [vmem:[#allocation3 + $0x69] sm:$0xff]
    %v4809 = vld [vmem:[#allocation3 + $0x71] sm:$0x3]
    %v4810 = vpack.c.bf16 %v4798, %v4797
    %v4811 = vpack.c.bf16 %v4800, %v4799
    %v4812 = vpack.c.bf16 %v4802, %v4801
    %v4813 = vpack.c.bf16 %v4804, %v4803
    %v4814 = vpack.c.bf16 %v4806, %v4805
    %v4815 = vpack.c.bf16 %v4808, %v4807
    %v4816 = vpack.c.bf16 %v4809, %v4809
    %s4817 = scalar_lea.vmem %s5, 176
    %v4818 = vld [vmem:[%s4817] sm:$0xf]
    %v4819 = vld [vmem:[%s4817 + $0x4] sm:$0xf]
    %v4820 = vld [vmem:[%s4817 + $0x8] sm:$0xf]
    %v4821 = vld [vmem:[%s4817 + $0xc] sm:$0xf]
    %v4826 = vunpack.c.l.b16 %v4818
    %v4827 = vunpack.c.l.b16 %v4819
    %v4828 = vunpack.c.l.b16 %v4820
    %v4829 = vunpack.c.l.b16 %v4821
    %v4830 = vpack.c.b16 %v4827, %v4826
    %v4831 = vpack.c.b16 %v4829, %v4828
    %v4835 = vsel %vm3057, %v4810, 0
    %v4838 = vsel %vm3057, %v4811, 0
    %v4841 = vsel %vm3057, %v4812, 0
    %v4844 = vsel %vm3057, %v4813, 0
    %v4847 = vsel %vm3057, %v4814, 0
    %v4850 = vsel %vm3057, %v4815, 0
    %v4853 = vsel %vm3057, %v4816, 0
    %4855 = vmatprep.subr.bf16.mxu0 0
    %4856 = vmatpush1.bf16.msra.mxu0 0
    %4857 = vmatprep.subr.bf16.mxu0 0
    %4858 = vmatpush1.bf16.msra.mxu0 0
    %4859 = vmatprep.subr.bf16.mxu0 0
    %4860 = vmatpush1.bf16.msra.mxu0 0
    %4861 = vmatprep.subr.bf16.mxu0 0
    %4862 = vmatpush1.bf16.msra.mxu0 0
    %4863 = vmatprep.subr.bf16.mxu0 0
    %4864 = vmatpush1.bf16.msra.mxu0 0
    %4865 = vmatprep.subr.bf16.mxu0 0
    %4866 = vmatpush1.bf16.msra.mxu0 0
    %4867 = vmatprep.subr.bf16.mxu0 0
    %4868 = vmatpush1.bf16.msra.mxu0 %v4831
    %4869 = vmatprep.subr.bf16.mxu0 0
    %4870 = vmatpush1.bf16.msra.mxu0 %v4830
    %4871 = vmatprep.subr.bf16.mxu0 0
    %4872 = vmatpush2.bf16.msra.mxu0 0
    %4873 = vmatprep.subr.bf16.mxu0 0
    %4874 = vmatpush2.bf16.msra.mxu0 0
    %4875 = vmatprep.subr.bf16.mxu0 0
    %4876 = vmatpush2.bf16.msra.mxu0 0
    %4877 = vmatprep.subr.bf16.mxu0 0
    %4878 = vmatpush2.bf16.msra.mxu0 0
    %4879 = vmatprep.subr.bf16.mxu0 0
    %4880 = vmatpush2.bf16.msra.mxu0 0
    %4881 = vmatprep.subr.bf16.mxu0 0
    %4882 = vmatpush2.bf16.msra.mxu0 0
    %4883 = vmatprep.subr.bf16.mxu0 0
    %4884 = vmatpush2.bf16.msra.mxu0 0
    %4885 = vmatprep.subr.bf16.mxu0 0
    %4886 = vmatpush2.bf16.msra.mxu0 0
    %4887 = vmatprep.mubr.bf16.mxu0 0
    %4888 = vmatmul.mubr.bf16.gmra.mxu0 %v4835
    %v4889 = vpop.f32.mrf.mxu0
    %v4890 = vadd.f32 0.0, %v4889
    %v4891 = vpop.f32.mrf.mxu0
    %v4892 = vpop.f32.mrf.mxu0
    %v4893 = vadd.f32 0.0, %v4892
    %v4894 = vpop.f32.mrf.mxu0
    %4895 = vmatprep.mubr.bf16.mxu0 0
    %4896 = vmatmul.mubr.bf16.gmra.mxu0 %v4838
    %v4897 = vpop.f32.mrf.mxu0
    %v4898 = vadd.f32 0.0, %v4897
    %v4899 = vpop.f32.mrf.mxu0
    %v4900 = vpop.f32.mrf.mxu0
    %v4901 = vadd.f32 0.0, %v4900
    %v4902 = vpop.f32.mrf.mxu0
    %4903 = vmatprep.mubr.bf16.mxu0 0
    %4904 = vmatmul.mubr.bf16.gmra.mxu0 %v4841
    %v4905 = vpop.f32.mrf.mxu0
    %v4906 = vadd.f32 0.0, %v4905
    %v4907 = vpop.f32.mrf.mxu0
    %v4908 = vpop.f32.mrf.mxu0
    %v4909 = vadd.f32 0.0, %v4908
    %v4910 = vpop.f32.mrf.mxu0
    %4911 = vmatprep.mubr.bf16.mxu0 0
    %4912 = vmatmul.mubr.bf16.gmra.mxu0 %v4844
    %v4913 = vpop.f32.mrf.mxu0
    %v4914 = vadd.f32 0.0, %v4913
    %v4915 = vpop.f32.mrf.mxu0
    %v4916 = vpop.f32.mrf.mxu0
    %v4917 = vadd.f32 0.0, %v4916
    %v4918 = vpop.f32.mrf.mxu0
    %4919 = vmatprep.mubr.bf16.mxu0 0
    %4920 = vmatmul.mubr.bf16.gmra.mxu0 %v4847
    %v4921 = vpop.f32.mrf.mxu0
    %v4922 = vadd.f32 0.0, %v4921
    %v4923 = vpop.f32.mrf.mxu0
    %v4924 = vpop.f32.mrf.mxu0
    %v4925 = vadd.f32 0.0, %v4924
    %v4926 = vpop.f32.mrf.mxu0
    %4927 = vmatprep.mubr.bf16.mxu0 0
    %4928 = vmatmul.mubr.bf16.gmra.mxu0 %v4850
    %v4929 = vpop.f32.mrf.mxu0
    %v4930 = vadd.f32 0.0, %v4929
    %v4931 = vpop.f32.mrf.mxu0
    %v4932 = vpop.f32.mrf.mxu0
    %v4933 = vadd.f32 0.0, %v4932
    %v4934 = vpop.f32.mrf.mxu0
    %4935 = vmatprep.mubr.bf16.mxu0 0
    %4936 = vmatmul.mubr.bf16.gmra.mxu0 %v4853
    %v4937 = vpop.f32.mrf.mxu0
    %v4938 = vadd.f32 0.0, %v4937
    %v4939 = vpop.f32.mrf.mxu0
    %v4940 = vpop.f32.mrf.mxu0
    %v4941 = vpop.f32.mrf.mxu0
    %4942 = vdwg.mxu0
    %v4943 = vadd.f32 %v4784, %v4890
    %v4944 = vadd.f32 %v4785, %v4893
    %v4945 = vadd.f32 %v4786, %v4898
    %v4946 = vadd.f32 %v4787, %v4901
    %v4947 = vadd.f32 %v4788, %v4906
    %v4948 = vadd.f32 %v4789, %v4909
    %v4949 = vadd.f32 %v4790, %v4914
    %v4950 = vadd.f32 %v4791, %v4917
    %v4951 = vadd.f32 %v4792, %v4922
    %v4952 = vadd.f32 %v4793, %v4925
    %v4953 = vadd.f32 %v4794, %v4930
    %v4954 = vadd.f32 %v4795, %v4933
    %v4955 = vadd.f32 %v4796, %v4938
    %v4956 = vld [vmem:[#allocation3 + $0x15] sm:$0xff]
    %v4957 = vld [vmem:[#allocation3 + $0x1d] sm:$0xff]
    %v4958 = vld [vmem:[#allocation3 + $0x25] sm:$0xff]
    %v4959 = vld [vmem:[#allocation3 + $0x2d] sm:$0xff]
    %v4960 = vld [vmem:[#allocation3 + $0x35] sm:$0xff]
    %v4961 = vld [vmem:[#allocation3 + $0x3d] sm:$0xff]
    %v4962 = vld [vmem:[#allocation3 + $0x45] sm:$0xff]
    %v4963 = vld [vmem:[#allocation3 + $0x4d] sm:$0xff]
    %v4964 = vld [vmem:[#allocation3 + $0x55] sm:$0xff]
    %v4965 = vld [vmem:[#allocation3 + $0x5d] sm:$0xff]
    %v4966 = vld [vmem:[#allocation3 + $0x65] sm:$0xff]
    %v4967 = vld [vmem:[#allocation3 + $0x6d] sm:$0xff]
    %v4968 = vld [vmem:[#allocation3 + $0x75] sm:$0x3]
    %v4969 = vpack.c.bf16 %v4957, %v4956
    %v4970 = vpack.c.bf16 %v4959, %v4958
    %v4971 = vpack.c.bf16 %v4961, %v4960
    %v4972 = vpack.c.bf16 %v4963, %v4962
    %v4973 = vpack.c.bf16 %v4965, %v4964
    %v4974 = vpack.c.bf16 %v4967, %v4966
    %v4975 = vpack.c.bf16 %v4968, %v4968
    %s4976 = scalar_lea.vmem %s5, 192
    %v4977 = vld [vmem:[%s4976] sm:$0xf]
    %v4978 = vld [vmem:[%s4976 + $0x4] sm:$0xf]
    %v4979 = vld [vmem:[%s4976 + $0x8] sm:$0xf]
    %v4980 = vld [vmem:[%s4976 + $0xc] sm:$0xf]
    %v4985 = vunpack.c.l.b16 %v4977
    %v4986 = vunpack.c.l.b16 %v4978
    %v4987 = vunpack.c.l.b16 %v4979
    %v4988 = vunpack.c.l.b16 %v4980
    %v4989 = vpack.c.b16 %v4986, %v4985
    %v4990 = vpack.c.b16 %v4988, %v4987
    %v4994 = vsel %vm3057, %v4969, 0
    %v4997 = vsel %vm3057, %v4970, 0
    %v5000 = vsel %vm3057, %v4971, 0
    %v5003 = vsel %vm3057, %v4972, 0
    %v5006 = vsel %vm3057, %v4973, 0
    %v5009 = vsel %vm3057, %v4974, 0
    %v5012 = vsel %vm3057, %v4975, 0
    %5014 = vmatprep.subr.bf16.mxu0 0
    %5015 = vmatpush1.bf16.msra.mxu0 0
    %5016 = vmatprep.subr.bf16.mxu0 0
    %5017 = vmatpush1.bf16.msra.mxu0 0
    %5018 = vmatprep.subr.bf16.mxu0 0
    %5019 = vmatpush1.bf16.msra.mxu0 0
    %5020 = vmatprep.subr.bf16.mxu0 0
    %5021 = vmatpush1.bf16.msra.mxu0 0
    %5022 = vmatprep.subr.bf16.mxu0 0
    %5023 = vmatpush1.bf16.msra.mxu0 0
    %5024 = vmatprep.subr.bf16.mxu0 0
    %5025 = vmatpush1.bf16.msra.mxu0 0
    %5026 = vmatprep.subr.bf16.mxu0 0
    %5027 = vmatpush1.bf16.msra.mxu0 %v4990
    %5028 = vmatprep.subr.bf16.mxu0 0
    %5029 = vmatpush1.bf16.msra.mxu0 %v4989
    %5030 = vmatprep.subr.bf16.mxu0 0
    %5031 = vmatpush2.bf16.msra.mxu0 0
    %5032 = vmatprep.subr.bf16.mxu0 0
    %5033 = vmatpush2.bf16.msra.mxu0 0
    %5034 = vmatprep.subr.bf16.mxu0 0
    %5035 = vmatpush2.bf16.msra.mxu0 0
    %5036 = vmatprep.subr.bf16.mxu0 0
    %5037 = vmatpush2.bf16.msra.mxu0 0
    %5038 = vmatprep.subr.bf16.mxu0 0
    %5039 = vmatpush2.bf16.msra.mxu0 0
    %5040 = vmatprep.subr.bf16.mxu0 0
    %5041 = vmatpush2.bf16.msra.mxu0 0
    %5042 = vmatprep.subr.bf16.mxu0 0
    %5043 = vmatpush2.bf16.msra.mxu0 0
    %5044 = vmatprep.subr.bf16.mxu0 0
    %5045 = vmatpush2.bf16.msra.mxu0 0
    %5046 = vmatprep.mubr.bf16.mxu0 0
    %5047 = vmatmul.mubr.bf16.gmra.mxu0 %v4994
    %v5048 = vpop.f32.mrf.mxu0
    %v5049 = vadd.f32 0.0, %v5048
    %v5050 = vpop.f32.mrf.mxu0
    %v5051 = vpop.f32.mrf.mxu0
    %v5052 = vadd.f32 0.0, %v5051
    %v5053 = vpop.f32.mrf.mxu0
    %5054 = vmatprep.mubr.bf16.mxu0 0
    %5055 = vmatmul.mubr.bf16.gmra.mxu0 %v4997
    %v5056 = vpop.f32.mrf.mxu0
    %v5057 = vadd.f32 0.0, %v5056
    %v5058 = vpop.f32.mrf.mxu0
    %v5059 = vpop.f32.mrf.mxu0
    %v5060 = vadd.f32 0.0, %v5059
    %v5061 = vpop.f32.mrf.mxu0
    %5062 = vmatprep.mubr.bf16.mxu0 0
    %5063 = vmatmul.mubr.bf16.gmra.mxu0 %v5000
    %v5064 = vpop.f32.mrf.mxu0
    %v5065 = vadd.f32 0.0, %v5064
    %v5066 = vpop.f32.mrf.mxu0
    %v5067 = vpop.f32.mrf.mxu0
    %v5068 = vadd.f32 0.0, %v5067
    %v5069 = vpop.f32.mrf.mxu0
    %5070 = vmatprep.mubr.bf16.mxu0 0
    %5071 = vmatmul.mubr.bf16.gmra.mxu0 %v5003
    %v5072 = vpop.f32.mrf.mxu0
    %v5073 = vadd.f32 0.0, %v5072
    %v5074 = vpop.f32.mrf.mxu0
    %v5075 = vpop.f32.mrf.mxu0
    %v5076 = vadd.f32 0.0, %v5075
    %v5077 = vpop.f32.mrf.mxu0
    %5078 = vmatprep.mubr.bf16.mxu0 0
    %5079 = vmatmul.mubr.bf16.gmra.mxu0 %v5006
    %v5080 = vpop.f32.mrf.mxu0
    %v5081 = vadd.f32 0.0, %v5080
    %v5082 = vpop.f32.mrf.mxu0
    %v5083 = vpop.f32.mrf.mxu0
    %v5084 = vadd.f32 0.0, %v5083
    %v5085 = vpop.f32.mrf.mxu0
    %5086 = vmatprep.mubr.bf16.mxu0 0
    %5087 = vmatmul.mubr.bf16.gmra.mxu0 %v5009
    %v5088 = vpop.f32.mrf.mxu0
    %v5089 = vadd.f32 0.0, %v5088
    %v5090 = vpop.f32.mrf.mxu0
    %v5091 = vpop.f32.mrf.mxu0
    %v5092 = vadd.f32 0.0, %v5091
    %v5093 = vpop.f32.mrf.mxu0
    %5094 = vmatprep.mubr.bf16.mxu0 0
    %5095 = vmatmul.mubr.bf16.gmra.mxu0 %v5012
    %v5096 = vpop.f32.mrf.mxu0
    %v5097 = vadd.f32 0.0, %v5096
    %v5098 = vpop.f32.mrf.mxu0
    %v5099 = vpop.f32.mrf.mxu0
    %v5100 = vpop.f32.mrf.mxu0
    %5101 = vdwg.mxu0
    %v5102 = vadd.f32 %v4943, %v5049
    %v5103 = vadd.f32 %v4944, %v5052
    %v5104 = vadd.f32 %v4945, %v5057
    %v5105 = vadd.f32 %v4946, %v5060
    %v5106 = vadd.f32 %v4947, %v5065
    %v5107 = vadd.f32 %v4948, %v5068
    %v5108 = vadd.f32 %v4949, %v5073
    %v5109 = vadd.f32 %v4950, %v5076
    %v5110 = vadd.f32 %v4951, %v5081
    %v5111 = vadd.f32 %v4952, %v5084
    %v5112 = vadd.f32 %v4953, %v5089
    %v5113 = vadd.f32 %v4954, %v5092
    %v5114 = vadd.f32 %v4955, %v5097
    %v5115 = vld [vmem:[#allocation3 + $0x16] sm:$0xff]
    %v5116 = vld [vmem:[#allocation3 + $0x1e] sm:$0xff]
    %v5117 = vld [vmem:[#allocation3 + $0x26] sm:$0xff]
    %v5118 = vld [vmem:[#allocation3 + $0x2e] sm:$0xff]
    %v5119 = vld [vmem:[#allocation3 + $0x36] sm:$0xff]
    %v5120 = vld [vmem:[#allocation3 + $0x3e] sm:$0xff]
    %v5121 = vld [vmem:[#allocation3 + $0x46] sm:$0xff]
    %v5122 = vld [vmem:[#allocation3 + $0x4e] sm:$0xff]
    %v5123 = vld [vmem:[#allocation3 + $0x56] sm:$0xff]
    %v5124 = vld [vmem:[#allocation3 + $0x5e] sm:$0xff]
    %v5125 = vld [vmem:[#allocation3 + $0x66] sm:$0xff]
    %v5126 = vld [vmem:[#allocation3 + $0x6e] sm:$0xff]
    %v5127 = vld [vmem:[#allocation3 + $0x76] sm:$0x3]
    %v5128 = vpack.c.bf16 %v5116, %v5115
    %v5129 = vpack.c.bf16 %v5118, %v5117
    %v5130 = vpack.c.bf16 %v5120, %v5119
    %v5131 = vpack.c.bf16 %v5122, %v5121
    %v5132 = vpack.c.bf16 %v5124, %v5123
    %v5133 = vpack.c.bf16 %v5126, %v5125
    %v5134 = vpack.c.bf16 %v5127, %v5127
    %s5135 = scalar_lea.vmem %s5, 208
    %v5136 = vld [vmem:[%s5135] sm:$0xf]
    %v5137 = vld [vmem:[%s5135 + $0x4] sm:$0xf]
    %v5138 = vld [vmem:[%s5135 + $0x8] sm:$0xf]
    %v5139 = vld [vmem:[%s5135 + $0xc] sm:$0xf]
    %v5144 = vunpack.c.l.b16 %v5136
    %v5145 = vunpack.c.l.b16 %v5137
    %v5146 = vunpack.c.l.b16 %v5138
    %v5147 = vunpack.c.l.b16 %v5139
    %v5148 = vpack.c.b16 %v5145, %v5144
    %v5149 = vpack.c.b16 %v5147, %v5146
    %v5153 = vsel %vm3057, %v5128, 0
    %v5156 = vsel %vm3057, %v5129, 0
    %v5159 = vsel %vm3057, %v5130, 0
    %v5162 = vsel %vm3057, %v5131, 0
    %v5165 = vsel %vm3057, %v5132, 0
    %v5168 = vsel %vm3057, %v5133, 0
    %v5171 = vsel %vm3057, %v5134, 0
    %5173 = vmatprep.subr.bf16.mxu0 0
    %5174 = vmatpush1.bf16.msra.mxu0 0
    %5175 = vmatprep.subr.bf16.mxu0 0
    %5176 = vmatpush1.bf16.msra.mxu0 0
    %5177 = vmatprep.subr.bf16.mxu0 0
    %5178 = vmatpush1.bf16.msra.mxu0 0
    %5179 = vmatprep.subr.bf16.mxu0 0
    %5180 = vmatpush1.bf16.msra.mxu0 0
    %5181 = vmatprep.subr.bf16.mxu0 0
    %5182 = vmatpush1.bf16.msra.mxu0 0
    %5183 = vmatprep.subr.bf16.mxu0 0
    %5184 = vmatpush1.bf16.msra.mxu0 0
    %5185 = vmatprep.subr.bf16.mxu0 0
    %5186 = vmatpush1.bf16.msra.mxu0 %v5149
    %5187 = vmatprep.subr.bf16.mxu0 0
    %5188 = vmatpush1.bf16.msra.mxu0 %v5148
    %5189 = vmatprep.subr.bf16.mxu0 0
    %5190 = vmatpush2.bf16.msra.mxu0 0
    %5191 = vmatprep.subr.bf16.mxu0 0
    %5192 = vmatpush2.bf16.msra.mxu0 0
    %5193 = vmatprep.subr.bf16.mxu0 0
    %5194 = vmatpush2.bf16.msra.mxu0 0
    %5195 = vmatprep.subr.bf16.mxu0 0
    %5196 = vmatpush2.bf16.msra.mxu0 0
    %5197 = vmatprep.subr.bf16.mxu0 0
    %5198 = vmatpush2.bf16.msra.mxu0 0
    %5199 = vmatprep.subr.bf16.mxu0 0
    %5200 = vmatpush2.bf16.msra.mxu0 0
    %5201 = vmatprep.subr.bf16.mxu0 0
    %5202 = vmatpush2.bf16.msra.mxu0 0
    %5203 = vmatprep.subr.bf16.mxu0 0
    %5204 = vmatpush2.bf16.msra.mxu0 0
    %5205 = vmatprep.mubr.bf16.mxu0 0
    %5206 = vmatmul.mubr.bf16.gmra.mxu0 %v5153
    %v5207 = vpop.f32.mrf.mxu0
    %v5208 = vadd.f32 0.0, %v5207
    %v5209 = vpop.f32.mrf.mxu0
    %v5210 = vpop.f32.mrf.mxu0
    %v5211 = vadd.f32 0.0, %v5210
    %v5212 = vpop.f32.mrf.mxu0
    %5213 = vmatprep.mubr.bf16.mxu0 0
    %5214 = vmatmul.mubr.bf16.gmra.mxu0 %v5156
    %v5215 = vpop.f32.mrf.mxu0
    %v5216 = vadd.f32 0.0, %v5215
    %v5217 = vpop.f32.mrf.mxu0
    %v5218 = vpop.f32.mrf.mxu0
    %v5219 = vadd.f32 0.0, %v5218
    %v5220 = vpop.f32.mrf.mxu0
    %5221 = vmatprep.mubr.bf16.mxu0 0
    %5222 = vmatmul.mubr.bf16.gmra.mxu0 %v5159
    %v5223 = vpop.f32.mrf.mxu0
    %v5224 = vadd.f32 0.0, %v5223
    %v5225 = vpop.f32.mrf.mxu0
    %v5226 = vpop.f32.mrf.mxu0
    %v5227 = vadd.f32 0.0, %v5226
    %v5228 = vpop.f32.mrf.mxu0
    %5229 = vmatprep.mubr.bf16.mxu0 0
    %5230 = vmatmul.mubr.bf16.gmra.mxu0 %v5162
    %v5231 = vpop.f32.mrf.mxu0
    %v5232 = vadd.f32 0.0, %v5231
    %v5233 = vpop.f32.mrf.mxu0
    %v5234 = vpop.f32.mrf.mxu0
    %v5235 = vadd.f32 0.0, %v5234
    %v5236 = vpop.f32.mrf.mxu0
    %5237 = vmatprep.mubr.bf16.mxu0 0
    %5238 = vmatmul.mubr.bf16.gmra.mxu0 %v5165
    %v5239 = vpop.f32.mrf.mxu0
    %v5240 = vadd.f32 0.0, %v5239
    %v5241 = vpop.f32.mrf.mxu0
    %v5242 = vpop.f32.mrf.mxu0
    %v5243 = vadd.f32 0.0, %v5242
    %v5244 = vpop.f32.mrf.mxu0
    %5245 = vmatprep.mubr.bf16.mxu0 0
    %5246 = vmatmul.mubr.bf16.gmra.mxu0 %v5168
    %v5247 = vpop.f32.mrf.mxu0
    %v5248 = vadd.f32 0.0, %v5247
    %v5249 = vpop.f32.mrf.mxu0
    %v5250 = vpop.f32.mrf.mxu0
    %v5251 = vadd.f32 0.0, %v5250
    %v5252 = vpop.f32.mrf.mxu0
    %5253 = vmatprep.mubr.bf16.mxu0 0
    %5254 = vmatmul.mubr.bf16.gmra.mxu0 %v5171
    %v5255 = vpop.f32.mrf.mxu0
    %v5256 = vadd.f32 0.0, %v5255
    %v5257 = vpop.f32.mrf.mxu0
    %v5258 = vpop.f32.mrf.mxu0
    %v5259 = vpop.f32.mrf.mxu0
    %5260 = vdwg.mxu0
    %v5261 = vadd.f32 %v5102, %v5208
    %v5262 = vadd.f32 %v5103, %v5211
    %v5263 = vadd.f32 %v5104, %v5216
    %v5264 = vadd.f32 %v5105, %v5219
    %v5265 = vadd.f32 %v5106, %v5224
    %v5266 = vadd.f32 %v5107, %v5227
    %v5267 = vadd.f32 %v5108, %v5232
    %v5268 = vadd.f32 %v5109, %v5235
    %v5269 = vadd.f32 %v5110, %v5240
    %v5270 = vadd.f32 %v5111, %v5243
    %v5271 = vadd.f32 %v5112, %v5248
    %v5272 = vadd.f32 %v5113, %v5251
    %v5273 = vadd.f32 %v5114, %v5256
    %v5274 = vld [vmem:[#allocation3 + $0x17] sm:$0xff]
    %v5275 = vld [vmem:[#allocation3 + $0x1f] sm:$0xff]
    %v5276 = vld [vmem:[#allocation3 + $0x27] sm:$0xff]
    %v5277 = vld [vmem:[#allocation3 + $0x2f] sm:$0xff]
    %v5278 = vld [vmem:[#allocation3 + $0x37] sm:$0xff]
    %v5279 = vld [vmem:[#allocation3 + $0x3f] sm:$0xff]
    %v5280 = vld [vmem:[#allocation3 + $0x47] sm:$0xff]
    %v5281 = vld [vmem:[#allocation3 + $0x4f] sm:$0xff]
    %v5282 = vld [vmem:[#allocation3 + $0x57] sm:$0xff]
    %v5283 = vld [vmem:[#allocation3 + $0x5f] sm:$0xff]
    %v5284 = vld [vmem:[#allocation3 + $0x67] sm:$0xff]
    %v5285 = vld [vmem:[#allocation3 + $0x6f] sm:$0xff]
    %v5286 = vld [vmem:[#allocation3 + $0x77] sm:$0x3]
    %v5287 = vpack.c.bf16 %v5275, %v5274
    %v5288 = vpack.c.bf16 %v5277, %v5276
    %v5289 = vpack.c.bf16 %v5279, %v5278
    %v5290 = vpack.c.bf16 %v5281, %v5280
    %v5291 = vpack.c.bf16 %v5283, %v5282
    %v5292 = vpack.c.bf16 %v5285, %v5284
    %v5293 = vpack.c.bf16 %v5286, %v5286
    %s5294 = scalar_lea.vmem %s5, 224
    %v5295 = vld [vmem:[%s5294] sm:$0xf]
    %v5296 = vld [vmem:[%s5294 + $0x4] sm:$0xf]
    %v5297 = vld [vmem:[%s5294 + $0x8] sm:$0xf]
    %v5298 = vld [vmem:[%s5294 + $0xc] sm:$0xf]
    %v5303 = vunpack.c.l.b16 %v5295
    %v5304 = vunpack.c.l.b16 %v5296
    %v5305 = vunpack.c.l.b16 %v5297
    %v5306 = vunpack.c.l.b16 %v5298
    %v5307 = vpack.c.b16 %v5304, %v5303
    %v5308 = vpack.c.b16 %v5306, %v5305
    %v5312 = vsel %vm3057, %v5287, 0
    %v5315 = vsel %vm3057, %v5288, 0
    %v5318 = vsel %vm3057, %v5289, 0
    %v5321 = vsel %vm3057, %v5290, 0
    %v5324 = vsel %vm3057, %v5291, 0
    %v5327 = vsel %vm3057, %v5292, 0
    %v5330 = vsel %vm3057, %v5293, 0
    %5332 = vmatprep.subr.bf16.mxu0 0
    %5333 = vmatpush1.bf16.msra.mxu0 0
    %5334 = vmatprep.subr.bf16.mxu0 0
    %5335 = vmatpush1.bf16.msra.mxu0 0
    %5336 = vmatprep.subr.bf16.mxu0 0
    %5337 = vmatpush1.bf16.msra.mxu0 0
    %5338 = vmatprep.subr.bf16.mxu0 0
    %5339 = vmatpush1.bf16.msra.mxu0 0
    %5340 = vmatprep.subr.bf16.mxu0 0
    %5341 = vmatpush1.bf16.msra.mxu0 0
    %5342 = vmatprep.subr.bf16.mxu0 0
    %5343 = vmatpush1.bf16.msra.mxu0 0
    %5344 = vmatprep.subr.bf16.mxu0 0
    %5345 = vmatpush1.bf16.msra.mxu0 %v5308
    %5346 = vmatprep.subr.bf16.mxu0 0
    %5347 = vmatpush1.bf16.msra.mxu0 %v5307
    %5348 = vmatprep.subr.bf16.mxu0 0
    %5349 = vmatpush2.bf16.msra.mxu0 0
    %5350 = vmatprep.subr.bf16.mxu0 0
    %5351 = vmatpush2.bf16.msra.mxu0 0
    %5352 = vmatprep.subr.bf16.mxu0 0
    %5353 = vmatpush2.bf16.msra.mxu0 0
    %5354 = vmatprep.subr.bf16.mxu0 0
    %5355 = vmatpush2.bf16.msra.mxu0 0
    %5356 = vmatprep.subr.bf16.mxu0 0
    %5357 = vmatpush2.bf16.msra.mxu0 0
    %5358 = vmatprep.subr.bf16.mxu0 0
    %5359 = vmatpush2.bf16.msra.mxu0 0
    %5360 = vmatprep.subr.bf16.mxu0 0
    %5361 = vmatpush2.bf16.msra.mxu0 0
    %5362 = vmatprep.subr.bf16.mxu0 0
    %5363 = vmatpush2.bf16.msra.mxu0 0
    %5364 = vmatprep.mubr.bf16.mxu0 0
    %5365 = vmatmul.mubr.bf16.gmra.mxu0 %v5312
    %v5366 = vpop.f32.mrf.mxu0
    %v5367 = vadd.f32 0.0, %v5366
    %v5368 = vpop.f32.mrf.mxu0
    %v5369 = vpop.f32.mrf.mxu0
    %v5370 = vadd.f32 0.0, %v5369
    %v5371 = vpop.f32.mrf.mxu0
    %5372 = vmatprep.mubr.bf16.mxu0 0
    %5373 = vmatmul.mubr.bf16.gmra.mxu0 %v5315
    %v5374 = vpop.f32.mrf.mxu0
    %v5375 = vadd.f32 0.0, %v5374
    %v5376 = vpop.f32.mrf.mxu0
    %v5377 = vpop.f32.mrf.mxu0
    %v5378 = vadd.f32 0.0, %v5377
    %v5379 = vpop.f32.mrf.mxu0
    %5380 = vmatprep.mubr.bf16.mxu0 0
    %5381 = vmatmul.mubr.bf16.gmra.mxu0 %v5318
    %v5382 = vpop.f32.mrf.mxu0
    %v5383 = vadd.f32 0.0, %v5382
    %v5384 = vpop.f32.mrf.mxu0
    %v5385 = vpop.f32.mrf.mxu0
    %v5386 = vadd.f32 0.0, %v5385
    %v5387 = vpop.f32.mrf.mxu0
    %5388 = vmatprep.mubr.bf16.mxu0 0
    %5389 = vmatmul.mubr.bf16.gmra.mxu0 %v5321
    %v5390 = vpop.f32.mrf.mxu0
    %v5391 = vadd.f32 0.0, %v5390
    %v5392 = vpop.f32.mrf.mxu0
    %v5393 = vpop.f32.mrf.mxu0
    %v5394 = vadd.f32 0.0, %v5393
    %v5395 = vpop.f32.mrf.mxu0
    %5396 = vmatprep.mubr.bf16.mxu0 0
    %5397 = vmatmul.mubr.bf16.gmra.mxu0 %v5324
    %v5398 = vpop.f32.mrf.mxu0
    %v5399 = vadd.f32 0.0, %v5398
    %v5400 = vpop.f32.mrf.mxu0
    %v5401 = vpop.f32.mrf.mxu0
    %v5402 = vadd.f32 0.0, %v5401
    %v5403 = vpop.f32.mrf.mxu0
    %5404 = vmatprep.mubr.bf16.mxu0 0
    %5405 = vmatmul.mubr.bf16.gmra.mxu0 %v5327
    %v5406 = vpop.f32.mrf.mxu0
    %v5407 = vadd.f32 0.0, %v5406
    %v5408 = vpop.f32.mrf.mxu0
    %v5409 = vpop.f32.mrf.mxu0
    %v5410 = vadd.f32 0.0, %v5409
    %v5411 = vpop.f32.mrf.mxu0
    %5412 = vmatprep.mubr.bf16.mxu0 0
    %5413 = vmatmul.mubr.bf16.gmra.mxu0 %v5330
    %v5414 = vpop.f32.mrf.mxu0
    %v5415 = vadd.f32 0.0, %v5414
    %v5416 = vpop.f32.mrf.mxu0
    %v5417 = vpop.f32.mrf.mxu0
    %v5418 = vpop.f32.mrf.mxu0
    %5419 = vdwg.mxu0
    %v5420 = vadd.f32 %v5261, %v5367
    %v5421 = vadd.f32 %v5262, %v5370
    %v5422 = vadd.f32 %v5263, %v5375
    %v5423 = vadd.f32 %v5264, %v5378
    %v5424 = vadd.f32 %v5265, %v5383
    %v5425 = vadd.f32 %v5266, %v5386
    %v5426 = vadd.f32 %v5267, %v5391
    %v5427 = vadd.f32 %v5268, %v5394
    %v5428 = vadd.f32 %v5269, %v5399
    %v5429 = vadd.f32 %v5270, %v5402
    %v5430 = vadd.f32 %v5271, %v5407
    %v5431 = vadd.f32 %v5272, %v5410
    %v5432 = vadd.f32 %v5273, %v5415
    %v5433 = vld [vmem:[#allocation3 + $0x18] sm:$0xff]
    %v5434 = vld [vmem:[#allocation3 + $0x20] sm:$0xff]
    %v5435 = vld [vmem:[#allocation3 + $0x28] sm:$0xff]
    %v5436 = vld [vmem:[#allocation3 + $0x30] sm:$0xff]
    %v5437 = vld [vmem:[#allocation3 + $0x38] sm:$0xff]
    %v5438 = vld [vmem:[#allocation3 + $0x40] sm:$0xff]
    %v5439 = vld [vmem:[#allocation3 + $0x48] sm:$0xff]
    %v5440 = vld [vmem:[#allocation3 + $0x50] sm:$0xff]
    %v5441 = vld [vmem:[#allocation3 + $0x58] sm:$0xff]
    %v5442 = vld [vmem:[#allocation3 + $0x60] sm:$0xff]
    %v5443 = vld [vmem:[#allocation3 + $0x68] sm:$0xff]
    %v5444 = vld [vmem:[#allocation3 + $0x70] sm:$0xff]
    %v5445 = vld [vmem:[#allocation3 + $0x78] sm:$0x3]
    %v5446 = vpack.c.bf16 %v5434, %v5433
    %v5447 = vpack.c.bf16 %v5436, %v5435
    %v5448 = vpack.c.bf16 %v5438, %v5437
    %v5449 = vpack.c.bf16 %v5440, %v5439
    %v5450 = vpack.c.bf16 %v5442, %v5441
    %v5451 = vpack.c.bf16 %v5444, %v5443
    %v5452 = vpack.c.bf16 %v5445, %v5445
    %s5453 = scalar_lea.vmem %s5, 240
    %v5454 = vld [vmem:[%s5453] sm:$0xf]
    %v5455 = vld [vmem:[%s5453 + $0x4] sm:$0xf]
    %v5456 = vld [vmem:[%s5453 + $0x8] sm:$0xf]
    %v5457 = vld [vmem:[%s5453 + $0xc] sm:$0xf]
    %v5462 = vunpack.c.l.b16 %v5454
    %v5463 = vunpack.c.l.b16 %v5455
    %v5464 = vunpack.c.l.b16 %v5456
    %v5465 = vunpack.c.l.b16 %v5457
    %v5466 = vpack.c.b16 %v5463, %v5462
    %v5467 = vpack.c.b16 %v5465, %v5464
    %v5471 = vsel %vm3057, %v5446, 0
    %v5474 = vsel %vm3057, %v5447, 0
    %v5477 = vsel %vm3057, %v5448, 0
    %v5480 = vsel %vm3057, %v5449, 0
    %v5483 = vsel %vm3057, %v5450, 0
    %v5486 = vsel %vm3057, %v5451, 0
    %v5489 = vsel %vm3057, %v5452, 0
    %5491 = vmatprep.subr.bf16.mxu0 0
    %5492 = vmatpush1.bf16.msra.mxu0 0
    %5493 = vmatprep.subr.bf16.mxu0 0
    %5494 = vmatpush1.bf16.msra.mxu0 0
    %5495 = vmatprep.subr.bf16.mxu0 0
    %5496 = vmatpush1.bf16.msra.mxu0 0
    %5497 = vmatprep.subr.bf16.mxu0 0
    %5498 = vmatpush1.bf16.msra.mxu0 0
    %5499 = vmatprep.subr.bf16.mxu0 0
    %5500 = vmatpush1.bf16.msra.mxu0 0
    %5501 = vmatprep.subr.bf16.mxu0 0
    %5502 = vmatpush1.bf16.msra.mxu0 0
    %5503 = vmatprep.subr.bf16.mxu0 0
    %5504 = vmatpush1.bf16.msra.mxu0 %v5467
    %5505 = vmatprep.subr.bf16.mxu0 0
    %5506 = vmatpush1.bf16.msra.mxu0 %v5466
    %5507 = vmatprep.subr.bf16.mxu0 0
    %5508 = vmatpush2.bf16.msra.mxu0 0
    %5509 = vmatprep.subr.bf16.mxu0 0
    %5510 = vmatpush2.bf16.msra.mxu0 0
    %5511 = vmatprep.subr.bf16.mxu0 0
    %5512 = vmatpush2.bf16.msra.mxu0 0
    %5513 = vmatprep.subr.bf16.mxu0 0
    %5514 = vmatpush2.bf16.msra.mxu0 0
    %5515 = vmatprep.subr.bf16.mxu0 0
    %5516 = vmatpush2.bf16.msra.mxu0 0
    %5517 = vmatprep.subr.bf16.mxu0 0
    %5518 = vmatpush2.bf16.msra.mxu0 0
    %5519 = vmatprep.subr.bf16.mxu0 0
    %5520 = vmatpush2.bf16.msra.mxu0 0
    %5521 = vmatprep.subr.bf16.mxu0 0
    %5522 = vmatpush2.bf16.msra.mxu0 0
    %5523 = vmatprep.mubr.bf16.mxu0 0
    %5524 = vmatmul.mubr.bf16.gmra.mxu0 %v5471
    %v5525 = vpop.f32.mrf.mxu0
    %v5526 = vadd.f32 0.0, %v5525
    %v5527 = vpop.f32.mrf.mxu0
    %v5528 = vpop.f32.mrf.mxu0
    %v5529 = vadd.f32 0.0, %v5528
    %v5530 = vpop.f32.mrf.mxu0
    %5531 = vmatprep.mubr.bf16.mxu0 0
    %5532 = vmatmul.mubr.bf16.gmra.mxu0 %v5474
    %v5533 = vpop.f32.mrf.mxu0
    %v5534 = vadd.f32 0.0, %v5533
    %v5535 = vpop.f32.mrf.mxu0
    %v5536 = vpop.f32.mrf.mxu0
    %v5537 = vadd.f32 0.0, %v5536
    %v5538 = vpop.f32.mrf.mxu0
    %5539 = vmatprep.mubr.bf16.mxu0 0
    %5540 = vmatmul.mubr.bf16.gmra.mxu0 %v5477
    %v5541 = vpop.f32.mrf.mxu0
    %v5542 = vadd.f32 0.0, %v5541
    %v5543 = vpop.f32.mrf.mxu0
    %v5544 = vpop.f32.mrf.mxu0
    %v5545 = vadd.f32 0.0, %v5544
    %v5546 = vpop.f32.mrf.mxu0
    %5547 = vmatprep.mubr.bf16.mxu0 0
    %5548 = vmatmul.mubr.bf16.gmra.mxu0 %v5480
    %v5549 = vpop.f32.mrf.mxu0
    %v5550 = vadd.f32 0.0, %v5549
    %v5551 = vpop.f32.mrf.mxu0
    %v5552 = vpop.f32.mrf.mxu0
    %v5553 = vadd.f32 0.0, %v5552
    %v5554 = vpop.f32.mrf.mxu0
    %5555 = vmatprep.mubr.bf16.mxu0 0
    %5556 = vmatmul.mubr.bf16.gmra.mxu0 %v5483
    %v5557 = vpop.f32.mrf.mxu0
    %v5558 = vadd.f32 0.0, %v5557
    %v5559 = vpop.f32.mrf.mxu0
    %v5560 = vpop.f32.mrf.mxu0
    %v5561 = vadd.f32 0.0, %v5560
    %v5562 = vpop.f32.mrf.mxu0
    %5563 = vmatprep.mubr.bf16.mxu0 0
    %5564 = vmatmul.mubr.bf16.gmra.mxu0 %v5486
    %v5565 = vpop.f32.mrf.mxu0
    %v5566 = vadd.f32 0.0, %v5565
    %v5567 = vpop.f32.mrf.mxu0
    %v5568 = vpop.f32.mrf.mxu0
    %v5569 = vadd.f32 0.0, %v5568
    %v5570 = vpop.f32.mrf.mxu0
    %5571 = vmatprep.mubr.bf16.mxu0 0
    %5572 = vmatmul.mubr.bf16.gmra.mxu0 %v5489
    %v5573 = vpop.f32.mrf.mxu0
    %v5574 = vadd.f32 0.0, %v5573
    %v5575 = vpop.f32.mrf.mxu0
    %v5576 = vpop.f32.mrf.mxu0
    %v5577 = vpop.f32.mrf.mxu0
    %5578 = vdwg.mxu0
    %v5579 = vadd.f32 %v5420, %v5526
    %v5580 = vadd.f32 %v5421, %v5529
    %v5581 = vadd.f32 %v5422, %v5534
    %v5582 = vadd.f32 %v5423, %v5537
    %v5583 = vadd.f32 %v5424, %v5542
    %v5584 = vadd.f32 %v5425, %v5545
    %v5585 = vadd.f32 %v5426, %v5550
    %v5586 = vadd.f32 %v5427, %v5553
    %v5587 = vadd.f32 %v5428, %v5558
    %v5588 = vadd.f32 %v5429, %v5561
    %v5589 = vadd.f32 %v5430, %v5566
    %v5590 = vadd.f32 %v5431, %v5569
    %v5591 = vadd.f32 %v5432, %v5574
    %v5592 = vlaneseq
    %v5593 = vand.u32 %v5592, 127
    %v5594 = vlaneseq
    %v5595 = vshrl.u32 %v5594, 7
    %v5596 = vmul.u32 %v5595, 49
    %vm5597 = vcmp.eq.s32.totalorder %v5593, %v5596
    %v5598 = vsel %vm5597, 1, 0
    %v5599 = vcvt.s32.f32 %v5598
    %v5600 = vld [vmem:[%s6] sm:$0x1]
    %v5602 = vlaneseq
    %v5603 = vshrl.u32 %v5602, 7
    %v5604 = vsub.s32 0, %v5603
    %v5605 = vrot.slane %v5600, %v5604
    %vm5607 = vcmask 801792
    %v5609 = vsel %vm5607, %v5599, 0
    %vm5611 = vcmask 1041408
    %v5613 = vsel %vm5611, %v5591, 0
    %5615 = vmatprep.subr.mxu0 0.0
    %5616 = vmatpush1.msra.mxu0 0.0
    %5617 = vmatprep.subr.mxu0 0.0
    %5618 = vmatpush1.msra.mxu0 0.0
    %5619 = vmatprep.subr.mxu0 0.0
    %5620 = vmatpush1.msra.mxu0 0.0
    %5621 = vmatprep.subr.mxu0 0.0
    %5622 = vmatpush1.msra.mxu0 %v5613
    %5623 = vmatprep.subr.mxu0 0.0
    %5624 = vmatpush1.msra.mxu0 %v5590
    %5625 = vmatprep.subr.mxu0 0.0
    %5626 = vmatpush1.msra.mxu0 %v5589
    %5627 = vmatprep.subr.mxu0 0.0
    %5628 = vmatpush1.msra.mxu0 %v5588
    %5629 = vmatprep.subr.mxu0 0.0
    %5630 = vmatpush1.msra.mxu0 %v5587
    %5631 = vmatprep.subr.mxu0 0.0
    %5632 = vmatpush1.msra.mxu0 %v5586
    %5633 = vmatprep.subr.mxu0 0.0
    %5634 = vmatpush1.msra.mxu0 %v5585
    %5635 = vmatprep.subr.mxu0 0.0
    %5636 = vmatpush1.msra.mxu0 %v5584
    %5637 = vmatprep.subr.mxu0 0.0
    %5638 = vmatpush1.msra.mxu0 %v5583
    %5639 = vmatprep.subr.mxu0 0.0
    %5640 = vmatpush1.msra.mxu0 %v5582
    %5641 = vmatprep.subr.mxu0 0.0
    %5642 = vmatpush1.msra.mxu0 %v5581
    %5643 = vmatprep.subr.mxu0 0.0
    %5644 = vmatpush1.msra.mxu0 %v5580
    %5645 = vmatprep.subr.mxu0 0.0
    %5646 = vmatpush1.msra.mxu0 %v5579
    %5647 = vmatprep.subr.mxu0 0.0
    %5648 = vmatpush2.msra.mxu0 0.0
    %5649 = vmatprep.subr.mxu0 0.0
    %5650 = vmatpush2.msra.mxu0 0.0
    %5651 = vmatprep.subr.mxu0 0.0
    %5652 = vmatpush2.msra.mxu0 0.0
    %5653 = vmatprep.subr.mxu0 0.0
    %5654 = vmatpush2.msra.mxu0 0.0
    %5655 = vmatprep.subr.mxu0 0.0
    %5656 = vmatpush2.msra.mxu0 0.0
    %5657 = vmatprep.subr.mxu0 0.0
    %5658 = vmatpush2.msra.mxu0 0.0
    %5659 = vmatprep.subr.mxu0 0.0
    %5660 = vmatpush2.msra.mxu0 0.0
    %5661 = vmatprep.subr.mxu0 0.0
    %5662 = vmatpush2.msra.mxu0 0.0
    %5663 = vmatprep.subr.mxu0 0.0
    %5664 = vmatpush2.msra.mxu0 0.0
    %5665 = vmatprep.subr.mxu0 0.0
    %5666 = vmatpush2.msra.mxu0 0.0
    %5667 = vmatprep.subr.mxu0 0.0
    %5668 = vmatpush2.msra.mxu0 0.0
    %5669 = vmatprep.subr.mxu0 0.0
    %5670 = vmatpush2.msra.mxu0 0.0
    %5671 = vmatprep.subr.mxu0 0.0
    %5672 = vmatpush2.msra.mxu0 0.0
    %5673 = vmatprep.subr.mxu0 0.0
    %5674 = vmatpush2.msra.mxu0 0.0
    %5675 = vmatprep.subr.mxu0 0.0
    %5676 = vmatpush2.msra.mxu0 0.0
    %5677 = vmatprep.subr.mxu0 0.0
    %5678 = vmatpush2.msra.mxu0 0.0
    %5679 = vmatprep.mubr.f32.mxu0 0.0
    %5680 = vmatmul.mubr.f32.gmra.mxu0 %v5609
    %v5681 = vpop.f32.mrf.mxu0
    %v5682 = vadd.f32 %v5605, %v5681
    %v5683 = vpop.f32.mrf.mxu0
    %5684 = vdwg.mxu0
    %5685 = vst [vmem:[#allocation4] sm:$0x3] %v5682
    // Predicated region
    $region30: #{_lambda_.1} parent=1 // pred_check
      _
    $region31: #{_lambda_.1} parent=1 // pred_check_branch
      %5687 = sbr.rel (0) target = $region33
    $region32: #{_lambda_.1} parent=1 // pred_region
      %s5689 = ssub.s32 32, 32
      %5690 = vsyncadd [#allocation5], %s5689
      %s5692 = sshll.u32 [#allocation4], 4
      %s5693 = int_to_ptr.vmem [resolvable:$true] %s5692
      %5695 = dma.vmem_to_hbm [thread:$0]  %s5693, 32, %s7, [#allocation5]
    $region33: #{_lambda_.1} parent=1 // pred_fallthru
      _
    // Predicated region
    $region34: #{_lambda_.1} parent=1 // pred_check
      _
    $region35: #{_lambda_.1} parent=1 // pred_check_branch
      %5697 = sbr.rel (0) target = $region37
    $region36: #{_lambda_.1} parent=1 // pred_region
      %5698 = dma.done [#allocation5], 32
    $region37: #{_lambda_.1} parent=1 // pred_fallthru
      _
    %5699 = vsyncpa [#allocation5], 1

</llo_original>
